<compile_context>
chip_gen: v7x
topology: tpu7x:2x2x1
jax: 0.10.0
libtpu: 0.0.40
codegen_flags: <defaults>
</compile_context>

<pallas_src>
import math

import jax
import jax.numpy as jnp
from jax import lax
from jax.experimental import pallas as pl
from jax.experimental.pallas import tpu as pltpu


# ----------------------------------------------------------------------------
# Helpers the original file imports (not provided): deterministic
# re-implementations.  splitWindowList groups windows into chains where each
# window divides the next (so kernel = w[i]/w[i-1] is an integer).
# ----------------------------------------------------------------------------
def splitWindowList(windows):
    chains = []
    for w in sorted(windows):
        for chain in chains:
            if w % chain[-1] == 0:
                chain.append(w)
                break
        else:
            chains.append([w])
    return chains


def countResultWindows(split_windows_lists):
    return sum(len(c) for c in split_windows_lists)


CONV_CHANNELS = 128
_UNROLL_MAX = 32          # python-unroll GRU time loops up to this length


def _full_spec(shape):
    zeros = (0,) * len(shape)
    return pl.BlockSpec(shape, lambda i, _z=zeros: _z)


def _pick_row_block(n_rows):
    """Row-block over the independent batch*channel sequences (grid axis)."""
    if n_rows <= 256 or n_rows % 8 != 0:
        return n_rows
    for nb in (256, 128, 64, 32, 16, 8):
        if n_rows % nb == 0:
            return nb
    return n_rows


# ----------------------------------------------------------------------------
# In-kernel math (operates on values; activations are time-major (L*nb, Co)
# with row index t*nb + n).
# ----------------------------------------------------------------------------
def _gru_last(act2d, L, nb, H, wi_ref, bih_ref, wh_ref, bhh_ref):
    """GRU over L steps, returns last hidden state (nb, H).

    Input projection (all timesteps, fused r|z|n) is hoisted out of the loop;
    the recurrent loop only does one (nb,H)@(H,3H) matmul per step."""
    xp = jnp.dot(act2d.astype(jnp.bfloat16), wi_ref[...],
                 preferred_element_type=jnp.float32) + bih_ref[...]
    xp3 = xp.reshape(L, nb, 3 * H)
    wh = wh_ref[...]          # (H, 3H) bf16, fused gate bank
    bhh = bhh_ref[...]        # (1, 3H) f32

    def step(xt, h):
        hh = jnp.dot(h.astype(jnp.bfloat16), wh,
                     preferred_element_type=jnp.float32) + bhh
        s = xt + hh
        r = jax.nn.sigmoid(s[:, :H])
        z = jax.nn.sigmoid(s[:, H:2 * H])
        n = jnp.tanh(xt[:, 2 * H:] + r * hh[:, 2 * H:])
        return (1.0 - z) * n + z * h

    h = jnp.zeros((nb, H), jnp.float32)
    if L <= _UNROLL_MAX:
        for t in range(L):                       # static unroll
            h = step(xp3[t], h)
    else:
        h = lax.fori_loop(0, L, lambda t, hc: step(xp3[t], hc), h)
    return h


def _build_forward(chains_cfg, chain_Ls, windows_lists, nb):
    """Builds the fused whole-forward kernel.  Flat ref order:
       [patch per chain] + [per chain, per level: conv_w, conv_b, Wi, b_ih,
        Wh, b_hh] + [rate, outW, outb] + [out_ref]."""
    n_chains = len(chains_cfg)
    Co = CONV_CHANNELS

    def kernel(*refs):
        out_ref = refs[-1]
        in_refs = refs[:-1]
        p_refs = in_refs[:n_chains]
        rate_ref, outw_ref, outb_ref = in_refs[-3:]
        lvl_refs = in_refs[n_chains:-3]

        ptr = 0
        hns = []
        for ci in range(n_chains):
            cfg = chains_cfg[ci]
            Ls = chain_Ls[ci]
            wins = windows_lists[ci]
            n_lvl = len(cfg)

            # ---------------- forward conv pyramid ----------------
            acts, lref = [], []
            for li in range(n_lvl):
                w_ref, b_ref, wi_ref, bih_ref, wh_ref, bhh_ref = \
                    lvl_refs[ptr:ptr + 6]
                ptr += 6
                lref.append((wi_ref, bih_ref, wh_ref, bhh_ref))
                k = cfg[li]["kernel"]
                if li == 0:
                    # conv_in == 1: VPU broadcast-FMA taps (keeps MXU free)
                    p = p_refs[ci][...]                    # (L0, nb, k) f32
                    w0 = w_ref[...]                        # (k, Co)     f32
                    a = jnp.zeros((Ls[0], nb, Co), jnp.float32) + b_ref[...]
                    for kk in range(k):
                        a = a + p[:, :, kk:kk + 1] * w0[kk:kk + 1, :]
                    a = a.reshape(Ls[0] * nb, Co)
                else:
                    # conv as sum of k MXU matmuls (K=128, bf16 -> f32 acc)
                    Lp, Lo = Ls[li - 1], Ls[li]
                    a4 = acts[-1].reshape(Lp, nb, Co)[:Lo * k]
                    a4 = a4.reshape(Lo, k, nb, Co)
                    acc = jnp.zeros((Lo * nb, Co), jnp.float32)
                    for kk in range(k):
                        tap = a4[:, kk].reshape(Lo * nb, Co).astype(jnp.bfloat16)
                        acc = acc + jnp.dot(tap, w_ref[kk],
                                            preferred_element_type=jnp.float32)
                    a = acc + b_ref[...]
                acts.append(a)

            # ---------- reverse pass: upsample + add, GRU per level ----------
            up, upL = acts[-1], Ls[-1]
            for j in range(n_lvl - 1, -1, -1):
                if j != n_lvl - 1:
                    factor = wins[j + 1] // wins[j]
                    a4 = up.reshape(upL, 1, nb, Co)
                    a4 = jnp.broadcast_to(a4, (upL, factor, nb, Co))
                    upL = upL * factor
                    up = a4.reshape(upL * nb, Co)
                    if upL != Ls[j]:
                        # F.upsample length fixup: append last timestep once
                        a3 = up.reshape(upL, nb, Co)
                        a3 = jnp.concatenate([a3, a3[-1:]], axis=0)
                        upL = upL + 1
                        up = a3.reshape(upL * nb, Co)
                    rnn_in = up + acts[j]
                else:
                    rnn_in = up
                wi_ref, bih_ref, wh_ref, bhh_ref = lref[j]
                hns.append(_gru_last(rnn_in, Ls[j], nb, cfg[j]["hidR"],
                                     wi_ref, bih_ref, wh_ref, bhh_ref))

        hcat = jnp.concatenate(hns, axis=-1) if len(hns) > 1 else hns[0]
        hcat = hcat * rate_ref[...]                          # rnn-mix weights
        out = jnp.dot(hcat.astype(jnp.bfloat16), outw_ref[...],
                      preferred_element_type=jnp.float32) + outb_ref[...]
        out_ref[...] = out

    return kernel


# ----------------------------------------------------------------------------
# PyramidalRNNEmbedding (JAX/Pallas), deterministic synthetic parameters.
# ----------------------------------------------------------------------------
class PyramidalRNNEmbeddingPallas:
    def __init__(self, windows, d_model, rnnMixTemperature, key, dropout=0.1):
        self.split_windows_lists = splitWindowList(windows)
        window_count = countResultWindows(self.split_windows_lists)
        self.rateParameter = jnp.ones((window_count, 1), jnp.float32) / window_count
        self.temperature = float(rnnMixTemperature)
        self.d_model = d_model

        hidRDict = {w: 0 for w in windows}
        for sub in self.split_windows_lists:
            for w in sub:
                hidRDict[w] += 1
        for w in windows:
            tmpHidR = d_model // len(windows)
            hidRDict[w] = int(tmpHidR / hidRDict[w])
        self.hidRDict = hidRDict

        Co = CONV_CHANNELS
        self.chains = []
        for window_list in self.split_windows_lists:
            in_window = 1
            chain = []
            for w in window_list:
                kernel = int(w / in_window)
                hidR = hidRDict[w]
                conv_in = 1 if in_window == 1 else Co
                key, k1, k2, k3, k4, k5, k6 = jax.random.split(key, 7)
                sc_c = 1.0 / math.sqrt(conv_in * kernel)
                sc_g = 1.0 / math.sqrt(hidR)
                conv_w = jax.random.normal(k1, (Co, conv_in, kernel), jnp.float32) * sc_c
                conv_b = jax.random.normal(k2, (Co,), jnp.float32) * sc_c
                W_ih = jax.random.normal(k3, (3 * hidR, Co), jnp.float32) * sc_g
                W_hh = jax.random.normal(k4, (3 * hidR, hidR), jnp.float32) * sc_g
                b_ih = jax.random.normal(k5, (3 * hidR,), jnp.float32) * sc_g
                b_hh = jax.random.normal(k6, (3 * hidR,), jnp.float32) * sc_g
                if conv_in == 1:
                    w_proc = conv_w[:, 0, :].T                     # (k, Co)  f32
                else:                                              # (k, Ci, Co) bf16
                    w_proc = jnp.transpose(conv_w, (2, 1, 0)).astype(jnp.bfloat16)
                chain.append(dict(
                    kernel=kernel, hidR=hidR,
                    conv_w=w_proc,
                    conv_b=conv_b.reshape(1, Co),
                    Wi=W_ih.T.astype(jnp.bfloat16),                # (Co, 3H) r|z|n
                    b_ih=b_ih.reshape(1, 3 * hidR),
                    Wh=W_hh.T.astype(jnp.bfloat16),                # (H, 3H)
                    b_hh=b_hh.reshape(1, 3 * hidR),
                ))
                in_window = w
            self.chains.append(chain)

        key, k1, k2 = jax.random.split(key, 3)
        sc = 1.0 / math.sqrt(d_model)
        self.out_wT = (jax.random.normal(k1, (d_model, d_model), jnp.float32) * sc
                       ).T.astype(jnp.bfloat16)
        self.out_b = jax.random.normal(k2, (1, d_model), jnp.float32) * sc
        # TODO(synk): nn.Dropout / self.relu are declared in the PyTorch __init__
        # but never used in forward(), so they are intentionally omitted here.

        self._forward = jax.jit(self._forward_impl)

    # -------------------------------------------------------------------- #
    def _forward_impl(self, x, x_mark):
        B, T, C = x.shape
        if x_mark is None:
            channel = C
            xc = jnp.transpose(x, (0, 2, 1)).reshape(B * C, T)
        else:
            channel = C + x_mark.shape[2]
            xc = jnp.concatenate([jnp.transpose(x, (0, 2, 1)),
                                  jnp.transpose(x_mark, (0, 2, 1))], axis=1)
            xc = xc.reshape(B * channel, T)
        N = B * channel
        d_model = self.d_model

        nb = _pick_row_block(N)
        grid = (N // nb,)

        # static conv-output lengths + level-0 patch tensors (time-major)
        patches, chain_Ls, chains_cfg = [], [], []
        for chain in self.chains:
            k0 = chain[0]["kernel"]
            L0 = (T - k0) // k0 + 1
            p = xc[:, :L0 * k0].reshape(N, L0, k0)
            patches.append(jnp.transpose(p, (1, 0, 2)))       # (L0, N, k0)
            Ls = [L0]
            for blk in chain[1:]:
                Ls.append((Ls[-1] - blk["kernel"]) // blk["kernel"] + 1)
            chain_Ls.append(tuple(Ls))
            chains_cfg.append(tuple(dict(kernel=b["kernel"], hidR=b["hidR"])
                                    for b in chain))

        # rate = softmax over last axis of the (window_count, 1) parameter
        # (matches the PyTorch module; all-ones, kept for fidelity)
        rate = jax.nn.softmax(self.rateParameter / self.temperature, axis=-1)
        rate_cols, wi = [], 0
        for chain in self.chains:
            for j in range(len(chain) - 1, -1, -1):
                rate_cols.append(jnp.full((1, chain[j]["hidR"]), 1.0,
                                          jnp.float32) * rate[wi, 0])
                wi += 1
        rate_vec = jnp.concatenate(rate_cols, axis=1)          # (1, d_model)
        assert rate_vec.shape[1] == d_model, "sum of hidR's must equal d_model"

        inputs, in_specs = [], []
        for p in patches:
            L0, _, k0 = p.shape
            inputs.append(p)
            in_specs.append(pl.BlockSpec((L0, nb, k0), lambda i: (0, i, 0)))
        for chain in self.chains:
            for blk in chain:
                for name in ("conv_w", "conv_b", "Wi", "b_ih", "Wh", "b_hh"):
                    arr = blk[name]
                    inputs.append(arr)
                    in_specs.append(_full_spec(arr.shape))
        for arr in (rate_vec, self.out_wT, self.out_b):
            inputs.append(arr)
            in_specs.append(_full_spec(arr.shape))

        kernel = _build_forward(tuple(chains_cfg), tuple(chain_Ls),
                                tuple(tuple(wl) for wl in self.split_windows_lists),
                                nb)

        out = pl.pallas_call(
            kernel,
            out_shape=jax.ShapeDtypeStruct((N, d_model), jnp.float32),
            grid=grid,
            in_specs=in_specs,
            out_specs=pl.BlockSpec((nb, d_model), lambda i: (i, 0)),
            compiler_params=pltpu.CompilerParams(
                dimension_semantics=("parallel",)),
        )(*inputs)
        return out.reshape(B, channel, d_model)

    def __call__(self, x, x_mark):
        return self._forward(x, x_mark)


# ----------------------------------------------------------------------------
# Straightforward jnp reference (PyTorch layouts) used as a numerical
# cross-check of the fused kernel's time-major reformulation.
# ----------------------------------------------------------------------------
def reference_forward(model, x, x_mark):
    B, T, C = x.shape
    if x_mark is None:
        channel = C
        xc = jnp.transpose(x, (0, 2, 1)).reshape(B * C, 1, T)
    else:
        channel = C + x_mark.shape[2]
        xc = jnp.concatenate([jnp.transpose(x, (0, 2, 1)),
                              jnp.transpose(x_mark, (0, 2, 1))], axis=1)
        xc = xc.reshape(B * channel, 1, T)
    N = B * channel
    Co = CONV_CHANNELS

    def conv0(xin, blk):
        k = blk["kernel"]
        Lo = (xin.shape[-1] - k) // k + 1
        x3 = xin[:, 0, :Lo * k].reshape(N, Lo, k)
        y = jnp.einsum('nlk,kd->ndl', x3, blk["conv_w"],
                       preferred_element_type=jnp.float32)
        return y + blk["conv_b"].reshape(1, Co, 1)

    def convl(xin, blk):
        k = blk["kernel"]
        Lo = (xin.shape[-1] - k) // k + 1
        x4 = xin[:, :, :Lo * k].reshape(N, Co, Lo, k).astype(jnp.bfloat16)
        y = jnp.einsum('nclk,kcd->ndl', x4, blk["conv_w"],
                       preferred_element_type=jnp.float32)
        return y + blk["conv_b"].reshape(1, Co, 1)

    def gru(xin_ncl, blk):
        H = blk["hidR"]
        xin = jnp.transpose(xin_ncl, (0, 2, 1))          # (N, L, Co)
        h = jnp.zeros((N, H), jnp.float32)
        for t in range(xin.shape[1]):
            gx = jnp.dot(xin[:, t, :].astype(jnp.bfloat16), blk["Wi"],
                         preferred_element_type=jnp.float32) + blk["b_ih"]
            gh = jnp.dot(h.astype(jnp.bfloat16), blk["Wh"],
                         preferred_element_type=jnp.float32) + blk["b_hh"]
            r = jax.nn.sigmoid(gx[:, :H] + gh[:, :H])
            z = jax.nn.sigmoid(gx[:, H:2 * H] + gh[:, H:2 * H])
            n = jnp.tanh(gx[:, 2 * H:] + r * gh[:, 2 * H:])
            h = (1.0 - z) * n + z * h
        return h

    hns = []
    for ci, chain in enumerate(model.chains):
        wins = model.split_windows_lists[ci]
        conv_map = {}
        t = xc
        for j, blk in enumerate(chain):
            t = conv0(t, blk) if j == 0 else convl(t, blk)
            conv_map[wins[j]] = t
        last_w, up = None, t
        for j in range(len(wins) - 1, -1, -1):
            blk, w = chain[j], wins[j]
            if last_w is not None:
                up = jnp.repeat(up, last_w // w, axis=-1)
                if up.shape[-1] != conv_map[w].shape[-1]:
                    up = jnp.concatenate([up, up[:, :, -1:]], axis=-1)
                rnn_in = up + conv_map[w]
            else:
                rnn_in = up
            hns.append(gru(rnn_in, blk).reshape(B, channel, blk["hidR"]))
            last_w = w

    rate = jax.nn.softmax(model.rateParameter / model.temperature, axis=-1)
    hns = [h * rate[i] for i, h in enumerate(hns)]
    hcat = jnp.concatenate(hns, axis=-1)
    out = jnp.einsum('bcd,de->bce', hcat.astype(jnp.bfloat16), model.out_wT,
                     preferred_element_type=jnp.float32)
    return out + model.out_b.reshape(1, 1, -1)


# ----------------------------------------------------------------------------
if __name__ == "__main__":
    key = jax.random.PRNGKey(0)
    k_x, k_m, k_p = jax.random.split(key, 3)

    B, T = 2, 16
    C_x, C_mark = 3, 1                 # total channel = 4 -> N = B*channel = 8
    windows = [2, 4, 8]
    d_model = 48                       # 3 windows * hidR(16) = 48
    temperature = 1.0

    x = jax.random.normal(k_x, (B, T, C_x), dtype=jnp.float32)
    x_mark = jax.random.normal(k_m, (B, T, C_mark), dtype=jnp.float32)

    model = PyramidalRNNEmbeddingPallas(windows, d_model, temperature, key=k_p)
    out = model(x, x_mark)
    out = jax.block_until_ready(out)

    assert out.shape == (B, C_x + C_mark, d_model), out.shape
    assert bool(jnp.all(jnp.isfinite(out)))

    ref = jax.block_until_ready(reference_forward(model, x, x_mark))
    max_err = float(jnp.max(jnp.abs(out - ref)))
    assert max_err < 5e-2, f"kernel vs reference mismatch: max|diff|={max_err}"

    print("KERNEL_OK")
</pallas_src>

<mosaic_0001>
module attributes {stable_mosaic.version = 11 : i64} {
  func.func @kernel(%arg0: i32, %arg1: memref<8x8x2xf32, #tpu.memory_space<vmem>>, %arg2: memref<2x128xf32, #tpu.memory_space<vmem>>, %arg3: memref<1x128xf32, #tpu.memory_space<vmem>>, %arg4: memref<128x48xbf16, #tpu.memory_space<vmem>>, %arg5: memref<1x48xf32, #tpu.memory_space<vmem>>, %arg6: memref<16x48xbf16, #tpu.memory_space<vmem>>, %arg7: memref<1x48xf32, #tpu.memory_space<vmem>>, %arg8: memref<2x128x128xbf16, #tpu.memory_space<vmem>>, %arg9: memref<1x128xf32, #tpu.memory_space<vmem>>, %arg10: memref<128x48xbf16, #tpu.memory_space<vmem>>, %arg11: memref<1x48xf32, #tpu.memory_space<vmem>>, %arg12: memref<16x48xbf16, #tpu.memory_space<vmem>>, %arg13: memref<1x48xf32, #tpu.memory_space<vmem>>, %arg14: memref<2x128x128xbf16, #tpu.memory_space<vmem>>, %arg15: memref<1x128xf32, #tpu.memory_space<vmem>>, %arg16: memref<128x48xbf16, #tpu.memory_space<vmem>>, %arg17: memref<1x48xf32, #tpu.memory_space<vmem>>, %arg18: memref<16x48xbf16, #tpu.memory_space<vmem>>, %arg19: memref<1x48xf32, #tpu.memory_space<vmem>>, %arg20: memref<1x48xf32, #tpu.memory_space<vmem>>, %arg21: memref<48x48xbf16, #tpu.memory_space<vmem>>, %arg22: memref<1x48xf32, #tpu.memory_space<vmem>>, %arg23: memref<8x48xf32, #tpu.memory_space<vmem>>) attributes {dimension_semantics = [#tpu.dimension_semantics<parallel>], iteration_bounds = array<i64: 1>, scalar_prefetch = 0 : i64, scratch_operands = 0 : i64, tpu.core_type = #tpu.core_type<tc>, window_params = [{transform_indices = @transform_0, window_bounds = array<i64: 8, 8, 2>}, {pipeline_mode = #tpu.pipeline_mode<synchronous>, transform_indices = @transform_1, window_bounds = array<i64: 2, 128>}, {pipeline_mode = #tpu.pipeline_mode<synchronous>, transform_indices = @transform_2, window_bounds = array<i64: 1, 128>}, {pipeline_mode = #tpu.pipeline_mode<synchronous>, transform_indices = @transform_3, window_bounds = array<i64: 128, 48>}, {pipeline_mode = #tpu.pipeline_mode<synchronous>, transform_indices = @transform_4, window_bounds = array<i64: 1, 48>}, {pipeline_mode = #tpu.pipeline_mode<synchronous>, transform_indices = @transform_5, window_bounds = array<i64: 16, 48>}, {pipeline_mode = #tpu.pipeline_mode<synchronous>, transform_indices = @transform_6, window_bounds = array<i64: 1, 48>}, {pipeline_mode = #tpu.pipeline_mode<synchronous>, transform_indices = @transform_7, window_bounds = array<i64: 2, 128, 128>}, {pipeline_mode = #tpu.pipeline_mode<synchronous>, transform_indices = @transform_8, window_bounds = array<i64: 1, 128>}, {pipeline_mode = #tpu.pipeline_mode<synchronous>, transform_indices = @transform_9, window_bounds = array<i64: 128, 48>}, {pipeline_mode = #tpu.pipeline_mode<synchronous>, transform_indices = @transform_10, window_bounds = array<i64: 1, 48>}, {pipeline_mode = #tpu.pipeline_mode<synchronous>, transform_indices = @transform_11, window_bounds = array<i64: 16, 48>}, {pipeline_mode = #tpu.pipeline_mode<synchronous>, transform_indices = @transform_12, window_bounds = array<i64: 1, 48>}, {pipeline_mode = #tpu.pipeline_mode<synchronous>, transform_indices = @transform_13, window_bounds = array<i64: 2, 128, 128>}, {pipeline_mode = #tpu.pipeline_mode<synchronous>, transform_indices = @transform_14, window_bounds = array<i64: 1, 128>}, {pipeline_mode = #tpu.pipeline_mode<synchronous>, transform_indices = @transform_15, window_bounds = array<i64: 128, 48>}, {pipeline_mode = #tpu.pipeline_mode<synchronous>, transform_indices = @transform_16, window_bounds = array<i64: 1, 48>}, {pipeline_mode = #tpu.pipeline_mode<synchronous>, transform_indices = @transform_17, window_bounds = array<i64: 16, 48>}, {pipeline_mode = #tpu.pipeline_mode<synchronous>, transform_indices = @transform_18, window_bounds = array<i64: 1, 48>}, {pipeline_mode = #tpu.pipeline_mode<synchronous>, transform_indices = @transform_19, window_bounds = array<i64: 1, 48>}, {pipeline_mode = #tpu.pipeline_mode<synchronous>, transform_indices = @transform_20, window_bounds = array<i64: 48, 48>}, {pipeline_mode = #tpu.pipeline_mode<synchronous>, transform_indices = @transform_21, window_bounds = array<i64: 1, 48>}, {transform_indices = @transform_22, window_bounds = array<i64: 8, 48>}]} {
    %c0 = arith.constant 0 : index
    %c0_0 = arith.constant 0 : index
    %c0_1 = arith.constant 0 : index
    %0 = vector.load %arg1[%c0, %c0_0, %c0_1] : memref<8x8x2xf32, #tpu.memory_space<vmem>>, vector<8x8x2xf32>
    %c0_2 = arith.constant 0 : index
    %c0_3 = arith.constant 0 : index
    %1 = vector.load %arg2[%c0_2, %c0_3] : memref<2x128xf32, #tpu.memory_space<vmem>>, vector<2x128xf32>
    %cst = arith.constant 0.000000e+00 : f32
    %2 = vector.broadcast %cst : f32 to vector<8x8x128xf32>
    %c0_4 = arith.constant 0 : index
    %c0_5 = arith.constant 0 : index
    %3 = vector.load %arg3[%c0_4, %c0_5] : memref<1x128xf32, #tpu.memory_space<vmem>>, vector<1x128xf32>
    %4 = vector.shape_cast %3 : vector<1x128xf32> to vector<1x1x128xf32>
    %5 = vector.broadcast %4 : vector<1x1x128xf32> to vector<8x8x128xf32>
    %6 = arith.addf %2, %5 : vector<8x8x128xf32>
    %7 = vector.extract_strided_slice %0 {offsets = [0, 0, 0], sizes = [8, 8, 1], strides = [1, 1, 1]} : vector<8x8x2xf32> to vector<8x8x1xf32>
    %8 = vector.extract_strided_slice %1 {offsets = [0, 0], sizes = [1, 128], strides = [1, 1]} : vector<2x128xf32> to vector<1x128xf32>
    %9 = vector.shape_cast %8 : vector<1x128xf32> to vector<1x1x128xf32>
    %10 = vector.broadcast %7 : vector<8x8x1xf32> to vector<8x8x128xf32>
    %11 = vector.broadcast %9 : vector<1x1x128xf32> to vector<8x8x128xf32>
    %12 = arith.mulf %10, %11 : vector<8x8x128xf32>
    %13 = arith.addf %6, %12 : vector<8x8x128xf32>
    %14 = vector.extract_strided_slice %0 {offsets = [0, 0, 1], sizes = [8, 8, 1], strides = [1, 1, 1]} : vector<8x8x2xf32> to vector<8x8x1xf32>
    %15 = vector.extract_strided_slice %1 {offsets = [1, 0], sizes = [1, 128], strides = [1, 1]} : vector<2x128xf32> to vector<1x128xf32>
    %16 = vector.shape_cast %15 : vector<1x128xf32> to vector<1x1x128xf32>
    %17 = vector.broadcast %14 : vector<8x8x1xf32> to vector<8x8x128xf32>
    %18 = vector.broadcast %16 : vector<1x1x128xf32> to vector<8x8x128xf32>
    %19 = arith.mulf %17, %18 : vector<8x8x128xf32>
    %20 = arith.addf %13, %19 : vector<8x8x128xf32>
    %21 = vector.shape_cast %20 : vector<8x8x128xf32> to vector<64x128xf32>
    %22 = vector.shape_cast %21 : vector<64x128xf32> to vector<8x8x128xf32>
    %23 = vector.shape_cast %22 : vector<8x8x128xf32> to vector<4x2x8x128xf32>
    %cst_6 = arith.constant 0.000000e+00 : f32
    %24 = vector.broadcast %cst_6 : f32 to vector<32x128xf32>
    %25 = vector.extract_strided_slice %23 {offsets = [0, 0, 0, 0], sizes = [4, 1, 8, 128], strides = [1, 1, 1, 1]} : vector<4x2x8x128xf32> to vector<4x1x8x128xf32>
    %26 = vector.shape_cast %25 : vector<4x1x8x128xf32> to vector<4x8x128xf32>
    %27 = vector.shape_cast %26 : vector<4x8x128xf32> to vector<32x128xf32>
    %28 = arith.truncf %27 : vector<32x128xf32> to vector<32x128xbf16>
    %c0_7 = arith.constant 0 : index
    %c0_8 = arith.constant 0 : index
    %c0_9 = arith.constant 0 : index
    %29 = vector.load %arg8[%c0_7, %c0_8, %c0_9] : memref<2x128x128xbf16, #tpu.memory_space<vmem>>, vector<1x128x128xbf16>
    %30 = vector.shape_cast %29 : vector<1x128x128xbf16> to vector<128x128xbf16>
    %cst_10 = arith.constant dense<0.000000e+00> : vector<32x128xf32>
    %31 = tpu.matmul %28, %30, %cst_10 {dimension_numbers = #tpu.dot_dimension_numbers<[1], [0], [0], [1], [0, 0, 1, 1], [], []>} : vector<32x128xbf16>, vector<128x128xbf16>, vector<32x128xf32> -> vector<32x128xf32>
    %32 = arith.addf %24, %31 : vector<32x128xf32>
    %33 = vector.extract_strided_slice %23 {offsets = [0, 1, 0, 0], sizes = [4, 1, 8, 128], strides = [1, 1, 1, 1]} : vector<4x2x8x128xf32> to vector<4x1x8x128xf32>
    %34 = vector.shape_cast %33 : vector<4x1x8x128xf32> to vector<4x8x128xf32>
    %35 = vector.shape_cast %34 : vector<4x8x128xf32> to vector<32x128xf32>
    %36 = arith.truncf %35 : vector<32x128xf32> to vector<32x128xbf16>
    %c1 = arith.constant 1 : index
    %c0_11 = arith.constant 0 : index
    %c0_12 = arith.constant 0 : index
    %37 = vector.load %arg8[%c1, %c0_11, %c0_12] : memref<2x128x128xbf16, #tpu.memory_space<vmem>>, vector<1x128x128xbf16>
    %38 = vector.shape_cast %37 : vector<1x128x128xbf16> to vector<128x128xbf16>
    %cst_13 = arith.constant dense<0.000000e+00> : vector<32x128xf32>
    %39 = tpu.matmul %36, %38, %cst_13 {dimension_numbers = #tpu.dot_dimension_numbers<[1], [0], [0], [1], [0, 0, 1, 1], [], []>} : vector<32x128xbf16>, vector<128x128xbf16>, vector<32x128xf32> -> vector<32x128xf32>
    %40 = arith.addf %32, %39 : vector<32x128xf32>
    %c0_14 = arith.constant 0 : index
    %c0_15 = arith.constant 0 : index
    %41 = vector.load %arg9[%c0_14, %c0_15] : memref<1x128xf32, #tpu.memory_space<vmem>>, vector<1x128xf32>
    %42 = vector.broadcast %41 : vector<1x128xf32> to vector<32x128xf32>
    %43 = arith.addf %40, %42 : vector<32x128xf32>
    %44 = vector.shape_cast %43 : vector<32x128xf32> to vector<4x8x128xf32>
    %45 = vector.shape_cast %44 : vector<4x8x128xf32> to vector<2x2x8x128xf32>
    %cst_16 = arith.constant 0.000000e+00 : f32
    %46 = vector.broadcast %cst_16 : f32 to vector<16x128xf32>
    %47 = vector.extract_strided_slice %45 {offsets = [0, 0, 0, 0], sizes = [2, 1, 8, 128], strides = [1, 1, 1, 1]} : vector<2x2x8x128xf32> to vector<2x1x8x128xf32>
    %48 = vector.shape_cast %47 : vector<2x1x8x128xf32> to vector<2x8x128xf32>
    %49 = vector.shape_cast %48 : vector<2x8x128xf32> to vector<16x128xf32>
    %50 = arith.truncf %49 : vector<16x128xf32> to vector<16x128xbf16>
    %c0_17 = arith.constant 0 : index
    %c0_18 = arith.constant 0 : index
    %c0_19 = arith.constant 0 : index
    %51 = vector.load %arg14[%c0_17, %c0_18, %c0_19] : memref<2x128x128xbf16, #tpu.memory_space<vmem>>, vector<1x128x128xbf16>
    %52 = vector.shape_cast %51 : vector<1x128x128xbf16> to vector<128x128xbf16>
    %cst_20 = arith.constant dense<0.000000e+00> : vector<16x128xf32>
    %53 = tpu.matmul %50, %52, %cst_20 {dimension_numbers = #tpu.dot_dimension_numbers<[1], [0], [0], [1], [0, 0, 1, 1], [], []>} : vector<16x128xbf16>, vector<128x128xbf16>, vector<16x128xf32> -> vector<16x128xf32>
    %54 = arith.addf %46, %53 : vector<16x128xf32>
    %55 = vector.extract_strided_slice %45 {offsets = [0, 1, 0, 0], sizes = [2, 1, 8, 128], strides = [1, 1, 1, 1]} : vector<2x2x8x128xf32> to vector<2x1x8x128xf32>
    %56 = vector.shape_cast %55 : vector<2x1x8x128xf32> to vector<2x8x128xf32>
    %57 = vector.shape_cast %56 : vector<2x8x128xf32> to vector<16x128xf32>
    %58 = arith.truncf %57 : vector<16x128xf32> to vector<16x128xbf16>
    %c1_21 = arith.constant 1 : index
    %c0_22 = arith.constant 0 : index
    %c0_23 = arith.constant 0 : index
    %59 = vector.load %arg14[%c1_21, %c0_22, %c0_23] : memref<2x128x128xbf16, #tpu.memory_space<vmem>>, vector<1x128x128xbf16>
    %60 = vector.shape_cast %59 : vector<1x128x128xbf16> to vector<128x128xbf16>
    %cst_24 = arith.constant dense<0.000000e+00> : vector<16x128xf32>
    %61 = tpu.matmul %58, %60, %cst_24 {dimension_numbers = #tpu.dot_dimension_numbers<[1], [0], [0], [1], [0, 0, 1, 1], [], []>} : vector<16x128xbf16>, vector<128x128xbf16>, vector<16x128xf32> -> vector<16x128xf32>
    %62 = arith.addf %54, %61 : vector<16x128xf32>
    %c0_25 = arith.constant 0 : index
    %c0_26 = arith.constant 0 : index
    %63 = vector.load %arg15[%c0_25, %c0_26] : memref<1x128xf32, #tpu.memory_space<vmem>>, vector<1x128xf32>
    %64 = vector.broadcast %63 : vector<1x128xf32> to vector<16x128xf32>
    %65 = arith.addf %62, %64 : vector<16x128xf32>
    %66 = arith.truncf %65 : vector<16x128xf32> to vector<16x128xbf16>
    %c0_27 = arith.constant 0 : index
    %c0_28 = arith.constant 0 : index
    %67 = vector.load %arg16[%c0_27, %c0_28] : memref<128x48xbf16, #tpu.memory_space<vmem>>, vector<128x48xbf16>
    %cst_29 = arith.constant dense<0.000000e+00> : vector<16x48xf32>
    %68 = tpu.matmul %66, %67, %cst_29 {dimension_numbers = #tpu.dot_dimension_numbers<[1], [0], [0], [1], [0, 0, 1, 1], [], []>} : vector<16x128xbf16>, vector<128x48xbf16>, vector<16x48xf32> -> vector<16x48xf32>
    %c0_30 = arith.constant 0 : index
    %c0_31 = arith.constant 0 : index
    %69 = vector.load %arg17[%c0_30, %c0_31] : memref<1x48xf32, #tpu.memory_space<vmem>>, vector<1x48xf32>
    %70 = vector.broadcast %69 : vector<1x48xf32> to vector<16x48xf32>
    %71 = arith.addf %68, %70 : vector<16x48xf32>
    %72 = vector.shape_cast %71 : vector<16x48xf32> to vector<2x8x48xf32>
    %c0_32 = arith.constant 0 : index
    %c0_33 = arith.constant 0 : index
    %73 = vector.load %arg18[%c0_32, %c0_33] : memref<16x48xbf16, #tpu.memory_space<vmem>>, vector<16x48xbf16>
    %c0_34 = arith.constant 0 : index
    %c0_35 = arith.constant 0 : index
    %74 = vector.load %arg19[%c0_34, %c0_35] : memref<1x48xf32, #tpu.memory_space<vmem>>, vector<1x48xf32>
    %cst_36 = arith.constant 0.000000e+00 : f32
    %75 = vector.broadcast %cst_36 : f32 to vector<8x16xf32>
    %76 = vector.extract_strided_slice %72 {offsets = [0, 0, 0], sizes = [1, 8, 48], strides = [1, 1, 1]} : vector<2x8x48xf32> to vector<1x8x48xf32>
    %77 = vector.shape_cast %76 : vector<1x8x48xf32> to vector<8x48xf32>
    %78 = arith.truncf %75 : vector<8x16xf32> to vector<8x16xbf16>
    %cst_37 = arith.constant dense<0.000000e+00> : vector<8x48xf32>
    %79 = tpu.matmul %78, %73, %cst_37 {dimension_numbers = #tpu.dot_dimension_numbers<[1], [0], [0], [1], [0, 0, 1, 1], [], []>} : vector<8x16xbf16>, vector<16x48xbf16>, vector<8x48xf32> -> vector<8x48xf32>
    %80 = vector.broadcast %74 : vector<1x48xf32> to vector<8x48xf32>
    %81 = arith.addf %79, %80 : vector<8x48xf32>
    %82 = arith.addf %77, %81 : vector<8x48xf32>
    %83 = vector.extract_strided_slice %82 {offsets = [0, 0], sizes = [8, 16], strides = [1, 1]} : vector<8x48xf32> to vector<8x16xf32>
    %84 = arith.negf %83 : vector<8x16xf32>
    %85 = math.exp %84 : vector<8x16xf32>
    %cst_38 = arith.constant 1.000000e+00 : f32
    %86 = vector.broadcast %cst_38 : f32 to vector<8x16xf32>
    %87 = arith.addf %86, %85 : vector<8x16xf32>
    %88 = arith.divf %86, %87 : vector<8x16xf32>
    %89 = vector.extract_strided_slice %82 {offsets = [0, 16], sizes = [8, 16], strides = [1, 1]} : vector<8x48xf32> to vector<8x16xf32>
    %90 = arith.negf %89 : vector<8x16xf32>
    %91 = math.exp %90 : vector<8x16xf32>
    %cst_39 = arith.constant 1.000000e+00 : f32
    %92 = vector.broadcast %cst_39 : f32 to vector<8x16xf32>
    %93 = arith.addf %92, %91 : vector<8x16xf32>
    %94 = arith.divf %92, %93 : vector<8x16xf32>
    %95 = vector.extract_strided_slice %77 {offsets = [0, 32], sizes = [8, 16], strides = [1, 1]} : vector<8x48xf32> to vector<8x16xf32>
    %96 = vector.extract_strided_slice %81 {offsets = [0, 32], sizes = [8, 16], strides = [1, 1]} : vector<8x48xf32> to vector<8x16xf32>
    %97 = arith.mulf %88, %96 : vector<8x16xf32>
    %98 = arith.addf %95, %97 : vector<8x16xf32>
    %99 = math.tanh %98 : vector<8x16xf32>
    %cst_40 = arith.constant 1.000000e+00 : f32
    %100 = vector.broadcast %cst_40 : f32 to vector<8x16xf32>
    %101 = arith.subf %100, %94 : vector<8x16xf32>
    %102 = arith.mulf %101, %99 : vector<8x16xf32>
    %103 = arith.mulf %94, %75 : vector<8x16xf32>
    %104 = arith.addf %102, %103 : vector<8x16xf32>
    %105 = vector.extract_strided_slice %72 {offsets = [1, 0, 0], sizes = [1, 8, 48], strides = [1, 1, 1]} : vector<2x8x48xf32> to vector<1x8x48xf32>
    %106 = vector.shape_cast %105 : vector<1x8x48xf32> to vector<8x48xf32>
    %107 = arith.truncf %104 : vector<8x16xf32> to vector<8x16xbf16>
    %cst_41 = arith.constant dense<0.000000e+00> : vector<8x48xf32>
    %108 = tpu.matmul %107, %73, %cst_41 {dimension_numbers = #tpu.dot_dimension_numbers<[1], [0], [0], [1], [0, 0, 1, 1], [], []>} : vector<8x16xbf16>, vector<16x48xbf16>, vector<8x48xf32> -> vector<8x48xf32>
    %109 = vector.broadcast %74 : vector<1x48xf32> to vector<8x48xf32>
    %110 = arith.addf %108, %109 : vector<8x48xf32>
    %111 = arith.addf %106, %110 : vector<8x48xf32>
    %112 = vector.extract_strided_slice %111 {offsets = [0, 0], sizes = [8, 16], strides = [1, 1]} : vector<8x48xf32> to vector<8x16xf32>
    %113 = arith.negf %112 : vector<8x16xf32>
    %114 = math.exp %113 : vector<8x16xf32>
    %cst_42 = arith.constant 1.000000e+00 : f32
    %115 = vector.broadcast %cst_42 : f32 to vector<8x16xf32>
    %116 = arith.addf %115, %114 : vector<8x16xf32>
    %117 = arith.divf %115, %116 : vector<8x16xf32>
    %118 = vector.extract_strided_slice %111 {offsets = [0, 16], sizes = [8, 16], strides = [1, 1]} : vector<8x48xf32> to vector<8x16xf32>
    %119 = arith.negf %118 : vector<8x16xf32>
    %120 = math.exp %119 : vector<8x16xf32>
    %cst_43 = arith.constant 1.000000e+00 : f32
    %121 = vector.broadcast %cst_43 : f32 to vector<8x16xf32>
    %122 = arith.addf %121, %120 : vector<8x16xf32>
    %123 = arith.divf %121, %122 : vector<8x16xf32>
    %124 = vector.extract_strided_slice %106 {offsets = [0, 32], sizes = [8, 16], strides = [1, 1]} : vector<8x48xf32> to vector<8x16xf32>
    %125 = vector.extract_strided_slice %110 {offsets = [0, 32], sizes = [8, 16], strides = [1, 1]} : vector<8x48xf32> to vector<8x16xf32>
    %126 = arith.mulf %117, %125 : vector<8x16xf32>
    %127 = arith.addf %124, %126 : vector<8x16xf32>
    %128 = math.tanh %127 : vector<8x16xf32>
    %cst_44 = arith.constant 1.000000e+00 : f32
    %129 = vector.broadcast %cst_44 : f32 to vector<8x16xf32>
    %130 = arith.subf %129, %123 : vector<8x16xf32>
    %131 = arith.mulf %130, %128 : vector<8x16xf32>
    %132 = arith.mulf %123, %104 : vector<8x16xf32>
    %133 = arith.addf %131, %132 : vector<8x16xf32>
    %134 = vector.shape_cast %65 : vector<16x128xf32> to vector<2x1x8x128xf32>
    %135 = vector.shape_cast %134 : vector<2x1x8x128xf32> to vector<2x1x8x128xf32>
    %136 = vector.broadcast %135 : vector<2x1x8x128xf32> to vector<2x2x8x128xf32>
    %137 = vector.shape_cast %136 : vector<2x2x8x128xf32> to vector<32x128xf32>
    %138 = arith.addf %137, %43 : vector<32x128xf32>
    %139 = arith.truncf %138 : vector<32x128xf32> to vector<32x128xbf16>
    %c0_45 = arith.constant 0 : index
    %c0_46 = arith.constant 0 : index
    %140 = vector.load %arg10[%c0_45, %c0_46] : memref<128x48xbf16, #tpu.memory_space<vmem>>, vector<128x48xbf16>
    %cst_47 = arith.constant dense<0.000000e+00> : vector<32x48xf32>
    %141 = tpu.matmul %139, %140, %cst_47 {dimension_numbers = #tpu.dot_dimension_numbers<[1], [0], [0], [1], [0, 0, 1, 1], [], []>} : vector<32x128xbf16>, vector<128x48xbf16>, vector<32x48xf32> -> vector<32x48xf32>
    %c0_48 = arith.constant 0 : index
    %c0_49 = arith.constant 0 : index
    %142 = vector.load %arg11[%c0_48, %c0_49] : memref<1x48xf32, #tpu.memory_space<vmem>>, vector<1x48xf32>
    %143 = vector.broadcast %142 : vector<1x48xf32> to vector<32x48xf32>
    %144 = arith.addf %141, %143 : vector<32x48xf32>
    %145 = vector.shape_cast %144 : vector<32x48xf32> to vector<4x8x48xf32>
    %c0_50 = arith.constant 0 : index
    %c0_51 = arith.constant 0 : index
    %146 = vector.load %arg12[%c0_50, %c0_51] : memref<16x48xbf16, #tpu.memory_space<vmem>>, vector<16x48xbf16>
    %c0_52 = arith.constant 0 : index
    %c0_53 = arith.constant 0 : index
    %147 = vector.load %arg13[%c0_52, %c0_53] : memref<1x48xf32, #tpu.memory_space<vmem>>, vector<1x48xf32>
    %cst_54 = arith.constant 0.000000e+00 : f32
    %148 = vector.broadcast %cst_54 : f32 to vector<8x16xf32>
    %149 = vector.extract_strided_slice %145 {offsets = [0, 0, 0], sizes = [1, 8, 48], strides = [1, 1, 1]} : vector<4x8x48xf32> to vector<1x8x48xf32>
    %150 = vector.shape_cast %149 : vector<1x8x48xf32> to vector<8x48xf32>
    %151 = arith.truncf %148 : vector<8x16xf32> to vector<8x16xbf16>
    %cst_55 = arith.constant dense<0.000000e+00> : vector<8x48xf32>
    %152 = tpu.matmul %151, %146, %cst_55 {dimension_numbers = #tpu.dot_dimension_numbers<[1], [0], [0], [1], [0, 0, 1, 1], [], []>} : vector<8x16xbf16>, vector<16x48xbf16>, vector<8x48xf32> -> vector<8x48xf32>
    %153 = vector.broadcast %147 : vector<1x48xf32> to vector<8x48xf32>
    %154 = arith.addf %152, %153 : vector<8x48xf32>
    %155 = arith.addf %150, %154 : vector<8x48xf32>
    %156 = vector.extract_strided_slice %155 {offsets = [0, 0], sizes = [8, 16], strides = [1, 1]} : vector<8x48xf32> to vector<8x16xf32>
    %157 = arith.negf %156 : vector<8x16xf32>
    %158 = math.exp %157 : vector<8x16xf32>
    %cst_56 = arith.constant 1.000000e+00 : f32
    %159 = vector.broadcast %cst_56 : f32 to vector<8x16xf32>
    %160 = arith.addf %159, %158 : vector<8x16xf32>
    %161 = arith.divf %159, %160 : vector<8x16xf32>
    %162 = vector.extract_strided_slice %155 {offsets = [0, 16], sizes = [8, 16], strides = [1, 1]} : vector<8x48xf32> to vector<8x16xf32>
    %163 = arith.negf %162 : vector<8x16xf32>
    %164 = math.exp %163 : vector<8x16xf32>
    %cst_57 = arith.constant 1.000000e+00 : f32
    %165 = vector.broadcast %cst_57 : f32 to vector<8x16xf32>
    %166 = arith.addf %165, %164 : vector<8x16xf32>
    %167 = arith.divf %165, %166 : vector<8x16xf32>
    %168 = vector.extract_strided_slice %150 {offsets = [0, 32], sizes = [8, 16], strides = [1, 1]} : vector<8x48xf32> to vector<8x16xf32>
    %169 = vector.extract_strided_slice %154 {offsets = [0, 32], sizes = [8, 16], strides = [1, 1]} : vector<8x48xf32> to vector<8x16xf32>
    %170 = arith.mulf %161, %169 : vector<8x16xf32>
    %171 = arith.addf %168, %170 : vector<8x16xf32>
    %172 = math.tanh %171 : vector<8x16xf32>
    %cst_58 = arith.constant 1.000000e+00 : f32
    %173 = vector.broadcast %cst_58 : f32 to vector<8x16xf32>
    %174 = arith.subf %173, %167 : vector<8x16xf32>
    %175 = arith.mulf %174, %172 : vector<8x16xf32>
    %176 = arith.mulf %167, %148 : vector<8x16xf32>
    %177 = arith.addf %175, %176 : vector<8x16xf32>
    %178 = vector.extract_strided_slice %145 {offsets = [1, 0, 0], sizes = [1, 8, 48], strides = [1, 1, 1]} : vector<4x8x48xf32> to vector<1x8x48xf32>
    %179 = vector.shape_cast %178 : vector<1x8x48xf32> to vector<8x48xf32>
    %180 = arith.truncf %177 : vector<8x16xf32> to vector<8x16xbf16>
    %cst_59 = arith.constant dense<0.000000e+00> : vector<8x48xf32>
    %181 = tpu.matmul %180, %146, %cst_59 {dimension_numbers = #tpu.dot_dimension_numbers<[1], [0], [0], [1], [0, 0, 1, 1], [], []>} : vector<8x16xbf16>, vector<16x48xbf16>, vector<8x48xf32> -> vector<8x48xf32>
    %182 = vector.broadcast %147 : vector<1x48xf32> to vector<8x48xf32>
    %183 = arith.addf %181, %182 : vector<8x48xf32>
    %184 = arith.addf %179, %183 : vector<8x48xf32>
    %185 = vector.extract_strided_slice %184 {offsets = [0, 0], sizes = [8, 16], strides = [1, 1]} : vector<8x48xf32> to vector<8x16xf32>
    %186 = arith.negf %185 : vector<8x16xf32>
    %187 = math.exp %186 : vector<8x16xf32>
    %cst_60 = arith.constant 1.000000e+00 : f32
    %188 = vector.broadcast %cst_60 : f32 to vector<8x16xf32>
    %189 = arith.addf %188, %187 : vector<8x16xf32>
    %190 = arith.divf %188, %189 : vector<8x16xf32>
    %191 = vector.extract_strided_slice %184 {offsets = [0, 16], sizes = [8, 16], strides = [1, 1]} : vector<8x48xf32> to vector<8x16xf32>
    %192 = arith.negf %191 : vector<8x16xf32>
    %193 = math.exp %192 : vector<8x16xf32>
    %cst_61 = arith.constant 1.000000e+00 : f32
    %194 = vector.broadcast %cst_61 : f32 to vector<8x16xf32>
    %195 = arith.addf %194, %193 : vector<8x16xf32>
    %196 = arith.divf %194, %195 : vector<8x16xf32>
    %197 = vector.extract_strided_slice %179 {offsets = [0, 32], sizes = [8, 16], strides = [1, 1]} : vector<8x48xf32> to vector<8x16xf32>
    %198 = vector.extract_strided_slice %183 {offsets = [0, 32], sizes = [8, 16], strides = [1, 1]} : vector<8x48xf32> to vector<8x16xf32>
    %199 = arith.mulf %190, %198 : vector<8x16xf32>
    %200 = arith.addf %197, %199 : vector<8x16xf32>
    %201 = math.tanh %200 : vector<8x16xf32>
    %cst_62 = arith.constant 1.000000e+00 : f32
    %202 = vector.broadcast %cst_62 : f32 to vector<8x16xf32>
    %203 = arith.subf %202, %196 : vector<8x16xf32>
    %204 = arith.mulf %203, %201 : vector<8x16xf32>
    %205 = arith.mulf %196, %177 : vector<8x16xf32>
    %206 = arith.addf %204, %205 : vector<8x16xf32>
    %207 = vector.extract_strided_slice %145 {offsets = [2, 0, 0], sizes = [1, 8, 48], strides = [1, 1, 1]} : vector<4x8x48xf32> to vector<1x8x48xf32>
    %208 = vector.shape_cast %207 : vector<1x8x48xf32> to vector<8x48xf32>
    %209 = arith.truncf %206 : vector<8x16xf32> to vector<8x16xbf16>
    %cst_63 = arith.constant dense<0.000000e+00> : vector<8x48xf32>
    %210 = tpu.matmul %209, %146, %cst_63 {dimension_numbers = #tpu.dot_dimension_numbers<[1], [0], [0], [1], [0, 0, 1, 1], [], []>} : vector<8x16xbf16>, vector<16x48xbf16>, vector<8x48xf32> -> vector<8x48xf32>
    %211 = vector.broadcast %147 : vector<1x48xf32> to vector<8x48xf32>
    %212 = arith.addf %210, %211 : vector<8x48xf32>
    %213 = arith.addf %208, %212 : vector<8x48xf32>
    %214 = vector.extract_strided_slice %213 {offsets = [0, 0], sizes = [8, 16], strides = [1, 1]} : vector<8x48xf32> to vector<8x16xf32>
    %215 = arith.negf %214 : vector<8x16xf32>
    %216 = math.exp %215 : vector<8x16xf32>
    %cst_64 = arith.constant 1.000000e+00 : f32
    %217 = vector.broadcast %cst_64 : f32 to vector<8x16xf32>
    %218 = arith.addf %217, %216 : vector<8x16xf32>
    %219 = arith.divf %217, %218 : vector<8x16xf32>
    %220 = vector.extract_strided_slice %213 {offsets = [0, 16], sizes = [8, 16], strides = [1, 1]} : vector<8x48xf32> to vector<8x16xf32>
    %221 = arith.negf %220 : vector<8x16xf32>
    %222 = math.exp %221 : vector<8x16xf32>
    %cst_65 = arith.constant 1.000000e+00 : f32
    %223 = vector.broadcast %cst_65 : f32 to vector<8x16xf32>
    %224 = arith.addf %223, %222 : vector<8x16xf32>
    %225 = arith.divf %223, %224 : vector<8x16xf32>
    %226 = vector.extract_strided_slice %208 {offsets = [0, 32], sizes = [8, 16], strides = [1, 1]} : vector<8x48xf32> to vector<8x16xf32>
    %227 = vector.extract_strided_slice %212 {offsets = [0, 32], sizes = [8, 16], strides = [1, 1]} : vector<8x48xf32> to vector<8x16xf32>
    %228 = arith.mulf %219, %227 : vector<8x16xf32>
    %229 = arith.addf %226, %228 : vector<8x16xf32>
    %230 = math.tanh %229 : vector<8x16xf32>
    %cst_66 = arith.constant 1.000000e+00 : f32
    %231 = vector.broadcast %cst_66 : f32 to vector<8x16xf32>
    %232 = arith.subf %231, %225 : vector<8x16xf32>
    %233 = arith.mulf %232, %230 : vector<8x16xf32>
    %234 = arith.mulf %225, %206 : vector<8x16xf32>
    %235 = arith.addf %233, %234 : vector<8x16xf32>
    %236 = vector.extract_strided_slice %145 {offsets = [3, 0, 0], sizes = [1, 8, 48], strides = [1, 1, 1]} : vector<4x8x48xf32> to vector<1x8x48xf32>
    %237 = vector.shape_cast %236 : vector<1x8x48xf32> to vector<8x48xf32>
    %238 = arith.truncf %235 : vector<8x16xf32> to vector<8x16xbf16>
    %cst_67 = arith.constant dense<0.000000e+00> : vector<8x48xf32>
    %239 = tpu.matmul %238, %146, %cst_67 {dimension_numbers = #tpu.dot_dimension_numbers<[1], [0], [0], [1], [0, 0, 1, 1], [], []>} : vector<8x16xbf16>, vector<16x48xbf16>, vector<8x48xf32> -> vector<8x48xf32>
    %240 = vector.broadcast %147 : vector<1x48xf32> to vector<8x48xf32>
    %241 = arith.addf %239, %240 : vector<8x48xf32>
    %242 = arith.addf %237, %241 : vector<8x48xf32>
    %243 = vector.extract_strided_slice %242 {offsets = [0, 0], sizes = [8, 16], strides = [1, 1]} : vector<8x48xf32> to vector<8x16xf32>
    %244 = arith.negf %243 : vector<8x16xf32>
    %245 = math.exp %244 : vector<8x16xf32>
    %cst_68 = arith.constant 1.000000e+00 : f32
    %246 = vector.broadcast %cst_68 : f32 to vector<8x16xf32>
    %247 = arith.addf %246, %245 : vector<8x16xf32>
    %248 = arith.divf %246, %247 : vector<8x16xf32>
    %249 = vector.extract_strided_slice %242 {offsets = [0, 16], sizes = [8, 16], strides = [1, 1]} : vector<8x48xf32> to vector<8x16xf32>
    %250 = arith.negf %249 : vector<8x16xf32>
    %251 = math.exp %250 : vector<8x16xf32>
    %cst_69 = arith.constant 1.000000e+00 : f32
    %252 = vector.broadcast %cst_69 : f32 to vector<8x16xf32>
    %253 = arith.addf %252, %251 : vector<8x16xf32>
    %254 = arith.divf %252, %253 : vector<8x16xf32>
    %255 = vector.extract_strided_slice %237 {offsets = [0, 32], sizes = [8, 16], strides = [1, 1]} : vector<8x48xf32> to vector<8x16xf32>
    %256 = vector.extract_strided_slice %241 {offsets = [0, 32], sizes = [8, 16], strides = [1, 1]} : vector<8x48xf32> to vector<8x16xf32>
    %257 = arith.mulf %248, %256 : vector<8x16xf32>
    %258 = arith.addf %255, %257 : vector<8x16xf32>
    %259 = math.tanh %258 : vector<8x16xf32>
    %cst_70 = arith.constant 1.000000e+00 : f32
    %260 = vector.broadcast %cst_70 : f32 to vector<8x16xf32>
    %261 = arith.subf %260, %254 : vector<8x16xf32>
    %262 = arith.mulf %261, %259 : vector<8x16xf32>
    %263 = arith.mulf %254, %235 : vector<8x16xf32>
    %264 = arith.addf %262, %263 : vector<8x16xf32>
    %265 = vector.shape_cast %137 : vector<32x128xf32> to vector<4x1x8x128xf32>
    %266 = vector.shape_cast %265 : vector<4x1x8x128xf32> to vector<4x1x8x128xf32>
    %267 = vector.broadcast %266 : vector<4x1x8x128xf32> to vector<4x2x8x128xf32>
    %268 = vector.shape_cast %267 : vector<4x2x8x128xf32> to vector<64x128xf32>
    %269 = arith.addf %268, %21 : vector<64x128xf32>
    %270 = arith.truncf %269 : vector<64x128xf32> to vector<64x128xbf16>
    %c0_71 = arith.constant 0 : index
    %c0_72 = arith.constant 0 : index
    %271 = vector.load %arg4[%c0_71, %c0_72] : memref<128x48xbf16, #tpu.memory_space<vmem>>, vector<128x48xbf16>
    %cst_73 = arith.constant dense<0.000000e+00> : vector<64x48xf32>
    %272 = tpu.matmul %270, %271, %cst_73 {dimension_numbers = #tpu.dot_dimension_numbers<[1], [0], [0], [1], [0, 0, 1, 1], [], []>} : vector<64x128xbf16>, vector<128x48xbf16>, vector<64x48xf32> -> vector<64x48xf32>
    %c0_74 = arith.constant 0 : index
    %c0_75 = arith.constant 0 : index
    %273 = vector.load %arg5[%c0_74, %c0_75] : memref<1x48xf32, #tpu.memory_space<vmem>>, vector<1x48xf32>
    %274 = vector.broadcast %273 : vector<1x48xf32> to vector<64x48xf32>
    %275 = arith.addf %272, %274 : vector<64x48xf32>
    %276 = vector.shape_cast %275 : vector<64x48xf32> to vector<8x8x48xf32>
    %c0_76 = arith.constant 0 : index
    %c0_77 = arith.constant 0 : index
    %277 = vector.load %arg6[%c0_76, %c0_77] : memref<16x48xbf16, #tpu.memory_space<vmem>>, vector<16x48xbf16>
    %c0_78 = arith.constant 0 : index
    %c0_79 = arith.constant 0 : index
    %278 = vector.load %arg7[%c0_78, %c0_79] : memref<1x48xf32, #tpu.memory_space<vmem>>, vector<1x48xf32>
    %cst_80 = arith.constant 0.000000e+00 : f32
    %279 = vector.broadcast %cst_80 : f32 to vector<8x16xf32>
    %280 = vector.extract_strided_slice %276 {offsets = [0, 0, 0], sizes = [1, 8, 48], strides = [1, 1, 1]} : vector<8x8x48xf32> to vector<1x8x48xf32>
    %281 = vector.shape_cast %280 : vector<1x8x48xf32> to vector<8x48xf32>
    %282 = arith.truncf %279 : vector<8x16xf32> to vector<8x16xbf16>
    %cst_81 = arith.constant dense<0.000000e+00> : vector<8x48xf32>
    %283 = tpu.matmul %282, %277, %cst_81 {dimension_numbers = #tpu.dot_dimension_numbers<[1], [0], [0], [1], [0, 0, 1, 1], [], []>} : vector<8x16xbf16>, vector<16x48xbf16>, vector<8x48xf32> -> vector<8x48xf32>
    %284 = vector.broadcast %278 : vector<1x48xf32> to vector<8x48xf32>
    %285 = arith.addf %283, %284 : vector<8x48xf32>
    %286 = arith.addf %281, %285 : vector<8x48xf32>
    %287 = vector.extract_strided_slice %286 {offsets = [0, 0], sizes = [8, 16], strides = [1, 1]} : vector<8x48xf32> to vector<8x16xf32>
    %288 = arith.negf %287 : vector<8x16xf32>
    %289 = math.exp %288 : vector<8x16xf32>
    %cst_82 = arith.constant 1.000000e+00 : f32
    %290 = vector.broadcast %cst_82 : f32 to vector<8x16xf32>
    %291 = arith.addf %290, %289 : vector<8x16xf32>
    %292 = arith.divf %290, %291 : vector<8x16xf32>
    %293 = vector.extract_strided_slice %286 {offsets = [0, 16], sizes = [8, 16], strides = [1, 1]} : vector<8x48xf32> to vector<8x16xf32>
    %294 = arith.negf %293 : vector<8x16xf32>
    %295 = math.exp %294 : vector<8x16xf32>
    %cst_83 = arith.constant 1.000000e+00 : f32
    %296 = vector.broadcast %cst_83 : f32 to vector<8x16xf32>
    %297 = arith.addf %296, %295 : vector<8x16xf32>
    %298 = arith.divf %296, %297 : vector<8x16xf32>
    %299 = vector.extract_strided_slice %281 {offsets = [0, 32], sizes = [8, 16], strides = [1, 1]} : vector<8x48xf32> to vector<8x16xf32>
    %300 = vector.extract_strided_slice %285 {offsets = [0, 32], sizes = [8, 16], strides = [1, 1]} : vector<8x48xf32> to vector<8x16xf32>
    %301 = arith.mulf %292, %300 : vector<8x16xf32>
    %302 = arith.addf %299, %301 : vector<8x16xf32>
    %303 = math.tanh %302 : vector<8x16xf32>
    %cst_84 = arith.constant 1.000000e+00 : f32
    %304 = vector.broadcast %cst_84 : f32 to vector<8x16xf32>
    %305 = arith.subf %304, %298 : vector<8x16xf32>
    %306 = arith.mulf %305, %303 : vector<8x16xf32>
    %307 = arith.mulf %298, %279 : vector<8x16xf32>
    %308 = arith.addf %306, %307 : vector<8x16xf32>
    %309 = vector.extract_strided_slice %276 {offsets = [1, 0, 0], sizes = [1, 8, 48], strides = [1, 1, 1]} : vector<8x8x48xf32> to vector<1x8x48xf32>
    %310 = vector.shape_cast %309 : vector<1x8x48xf32> to vector<8x48xf32>
    %311 = arith.truncf %308 : vector<8x16xf32> to vector<8x16xbf16>
    %cst_85 = arith.constant dense<0.000000e+00> : vector<8x48xf32>
    %312 = tpu.matmul %311, %277, %cst_85 {dimension_numbers = #tpu.dot_dimension_numbers<[1], [0], [0], [1], [0, 0, 1, 1], [], []>} : vector<8x16xbf16>, vector<16x48xbf16>, vector<8x48xf32> -> vector<8x48xf32>
    %313 = vector.broadcast %278 : vector<1x48xf32> to vector<8x48xf32>
    %314 = arith.addf %312, %313 : vector<8x48xf32>
    %315 = arith.addf %310, %314 : vector<8x48xf32>
    %316 = vector.extract_strided_slice %315 {offsets = [0, 0], sizes = [8, 16], strides = [1, 1]} : vector<8x48xf32> to vector<8x16xf32>
    %317 = arith.negf %316 : vector<8x16xf32>
    %318 = math.exp %317 : vector<8x16xf32>
    %cst_86 = arith.constant 1.000000e+00 : f32
    %319 = vector.broadcast %cst_86 : f32 to vector<8x16xf32>
    %320 = arith.addf %319, %318 : vector<8x16xf32>
    %321 = arith.divf %319, %320 : vector<8x16xf32>
    %322 = vector.extract_strided_slice %315 {offsets = [0, 16], sizes = [8, 16], strides = [1, 1]} : vector<8x48xf32> to vector<8x16xf32>
    %323 = arith.negf %322 : vector<8x16xf32>
    %324 = math.exp %323 : vector<8x16xf32>
    %cst_87 = arith.constant 1.000000e+00 : f32
    %325 = vector.broadcast %cst_87 : f32 to vector<8x16xf32>
    %326 = arith.addf %325, %324 : vector<8x16xf32>
    %327 = arith.divf %325, %326 : vector<8x16xf32>
    %328 = vector.extract_strided_slice %310 {offsets = [0, 32], sizes = [8, 16], strides = [1, 1]} : vector<8x48xf32> to vector<8x16xf32>
    %329 = vector.extract_strided_slice %314 {offsets = [0, 32], sizes = [8, 16], strides = [1, 1]} : vector<8x48xf32> to vector<8x16xf32>
    %330 = arith.mulf %321, %329 : vector<8x16xf32>
    %331 = arith.addf %328, %330 : vector<8x16xf32>
    %332 = math.tanh %331 : vector<8x16xf32>
    %cst_88 = arith.constant 1.000000e+00 : f32
    %333 = vector.broadcast %cst_88 : f32 to vector<8x16xf32>
    %334 = arith.subf %333, %327 : vector<8x16xf32>
    %335 = arith.mulf %334, %332 : vector<8x16xf32>
    %336 = arith.mulf %327, %308 : vector<8x16xf32>
    %337 = arith.addf %335, %336 : vector<8x16xf32>
    %338 = vector.extract_strided_slice %276 {offsets = [2, 0, 0], sizes = [1, 8, 48], strides = [1, 1, 1]} : vector<8x8x48xf32> to vector<1x8x48xf32>
    %339 = vector.shape_cast %338 : vector<1x8x48xf32> to vector<8x48xf32>
    %340 = arith.truncf %337 : vector<8x16xf32> to vector<8x16xbf16>
    %cst_89 = arith.constant dense<0.000000e+00> : vector<8x48xf32>
    %341 = tpu.matmul %340, %277, %cst_89 {dimension_numbers = #tpu.dot_dimension_numbers<[1], [0], [0], [1], [0, 0, 1, 1], [], []>} : vector<8x16xbf16>, vector<16x48xbf16>, vector<8x48xf32> -> vector<8x48xf32>
    %342 = vector.broadcast %278 : vector<1x48xf32> to vector<8x48xf32>
    %343 = arith.addf %341, %342 : vector<8x48xf32>
    %344 = arith.addf %339, %343 : vector<8x48xf32>
    %345 = vector.extract_strided_slice %344 {offsets = [0, 0], sizes = [8, 16], strides = [1, 1]} : vector<8x48xf32> to vector<8x16xf32>
    %346 = arith.negf %345 : vector<8x16xf32>
    %347 = math.exp %346 : vector<8x16xf32>
    %cst_90 = arith.constant 1.000000e+00 : f32
    %348 = vector.broadcast %cst_90 : f32 to vector<8x16xf32>
    %349 = arith.addf %348, %347 : vector<8x16xf32>
    %350 = arith.divf %348, %349 : vector<8x16xf32>
    %351 = vector.extract_strided_slice %344 {offsets = [0, 16], sizes = [8, 16], strides = [1, 1]} : vector<8x48xf32> to vector<8x16xf32>
    %352 = arith.negf %351 : vector<8x16xf32>
    %353 = math.exp %352 : vector<8x16xf32>
    %cst_91 = arith.constant 1.000000e+00 : f32
    %354 = vector.broadcast %cst_91 : f32 to vector<8x16xf32>
    %355 = arith.addf %354, %353 : vector<8x16xf32>
    %356 = arith.divf %354, %355 : vector<8x16xf32>
    %357 = vector.extract_strided_slice %339 {offsets = [0, 32], sizes = [8, 16], strides = [1, 1]} : vector<8x48xf32> to vector<8x16xf32>
    %358 = vector.extract_strided_slice %343 {offsets = [0, 32], sizes = [8, 16], strides = [1, 1]} : vector<8x48xf32> to vector<8x16xf32>
    %359 = arith.mulf %350, %358 : vector<8x16xf32>
    %360 = arith.addf %357, %359 : vector<8x16xf32>
    %361 = math.tanh %360 : vector<8x16xf32>
    %cst_92 = arith.constant 1.000000e+00 : f32
    %362 = vector.broadcast %cst_92 : f32 to vector<8x16xf32>
    %363 = arith.subf %362, %356 : vector<8x16xf32>
    %364 = arith.mulf %363, %361 : vector<8x16xf32>
    %365 = arith.mulf %356, %337 : vector<8x16xf32>
    %366 = arith.addf %364, %365 : vector<8x16xf32>
    %367 = vector.extract_strided_slice %276 {offsets = [3, 0, 0], sizes = [1, 8, 48], strides = [1, 1, 1]} : vector<8x8x48xf32> to vector<1x8x48xf32>
    %368 = vector.shape_cast %367 : vector<1x8x48xf32> to vector<8x48xf32>
    %369 = arith.truncf %366 : vector<8x16xf32> to vector<8x16xbf16>
    %cst_93 = arith.constant dense<0.000000e+00> : vector<8x48xf32>
    %370 = tpu.matmul %369, %277, %cst_93 {dimension_numbers = #tpu.dot_dimension_numbers<[1], [0], [0], [1], [0, 0, 1, 1], [], []>} : vector<8x16xbf16>, vector<16x48xbf16>, vector<8x48xf32> -> vector<8x48xf32>
    %371 = vector.broadcast %278 : vector<1x48xf32> to vector<8x48xf32>
    %372 = arith.addf %370, %371 : vector<8x48xf32>
    %373 = arith.addf %368, %372 : vector<8x48xf32>
    %374 = vector.extract_strided_slice %373 {offsets = [0, 0], sizes = [8, 16], strides = [1, 1]} : vector<8x48xf32> to vector<8x16xf32>
    %375 = arith.negf %374 : vector<8x16xf32>
    %376 = math.exp %375 : vector<8x16xf32>
    %cst_94 = arith.constant 1.000000e+00 : f32
    %377 = vector.broadcast %cst_94 : f32 to vector<8x16xf32>
    %378 = arith.addf %377, %376 : vector<8x16xf32>
    %379 = arith.divf %377, %378 : vector<8x16xf32>
    %380 = vector.extract_strided_slice %373 {offsets = [0, 16], sizes = [8, 16], strides = [1, 1]} : vector<8x48xf32> to vector<8x16xf32>
    %381 = arith.negf %380 : vector<8x16xf32>
    %382 = math.exp %381 : vector<8x16xf32>
    %cst_95 = arith.constant 1.000000e+00 : f32
    %383 = vector.broadcast %cst_95 : f32 to vector<8x16xf32>
    %384 = arith.addf %383, %382 : vector<8x16xf32>
    %385 = arith.divf %383, %384 : vector<8x16xf32>
    %386 = vector.extract_strided_slice %368 {offsets = [0, 32], sizes = [8, 16], strides = [1, 1]} : vector<8x48xf32> to vector<8x16xf32>
    %387 = vector.extract_strided_slice %372 {offsets = [0, 32], sizes = [8, 16], strides = [1, 1]} : vector<8x48xf32> to vector<8x16xf32>
    %388 = arith.mulf %379, %387 : vector<8x16xf32>
    %389 = arith.addf %386, %388 : vector<8x16xf32>
    %390 = math.tanh %389 : vector<8x16xf32>
    %cst_96 = arith.constant 1.000000e+00 : f32
    %391 = vector.broadcast %cst_96 : f32 to vector<8x16xf32>
    %392 = arith.subf %391, %385 : vector<8x16xf32>
    %393 = arith.mulf %392, %390 : vector<8x16xf32>
    %394 = arith.mulf %385, %366 : vector<8x16xf32>
    %395 = arith.addf %393, %394 : vector<8x16xf32>
    %396 = vector.extract_strided_slice %276 {offsets = [4, 0, 0], sizes = [1, 8, 48], strides = [1, 1, 1]} : vector<8x8x48xf32> to vector<1x8x48xf32>
    %397 = vector.shape_cast %396 : vector<1x8x48xf32> to vector<8x48xf32>
    %398 = arith.truncf %395 : vector<8x16xf32> to vector<8x16xbf16>
    %cst_97 = arith.constant dense<0.000000e+00> : vector<8x48xf32>
    %399 = tpu.matmul %398, %277, %cst_97 {dimension_numbers = #tpu.dot_dimension_numbers<[1], [0], [0], [1], [0, 0, 1, 1], [], []>} : vector<8x16xbf16>, vector<16x48xbf16>, vector<8x48xf32> -> vector<8x48xf32>
    %400 = vector.broadcast %278 : vector<1x48xf32> to vector<8x48xf32>
    %401 = arith.addf %399, %400 : vector<8x48xf32>
    %402 = arith.addf %397, %401 : vector<8x48xf32>
    %403 = vector.extract_strided_slice %402 {offsets = [0, 0], sizes = [8, 16], strides = [1, 1]} : vector<8x48xf32> to vector<8x16xf32>
    %404 = arith.negf %403 : vector<8x16xf32>
    %405 = math.exp %404 : vector<8x16xf32>
    %cst_98 = arith.constant 1.000000e+00 : f32
    %406 = vector.broadcast %cst_98 : f32 to vector<8x16xf32>
    %407 = arith.addf %406, %405 : vector<8x16xf32>
    %408 = arith.divf %406, %407 : vector<8x16xf32>
    %409 = vector.extract_strided_slice %402 {offsets = [0, 16], sizes = [8, 16], strides = [1, 1]} : vector<8x48xf32> to vector<8x16xf32>
    %410 = arith.negf %409 : vector<8x16xf32>
    %411 = math.exp %410 : vector<8x16xf32>
    %cst_99 = arith.constant 1.000000e+00 : f32
    %412 = vector.broadcast %cst_99 : f32 to vector<8x16xf32>
    %413 = arith.addf %412, %411 : vector<8x16xf32>
    %414 = arith.divf %412, %413 : vector<8x16xf32>
    %415 = vector.extract_strided_slice %397 {offsets = [0, 32], sizes = [8, 16], strides = [1, 1]} : vector<8x48xf32> to vector<8x16xf32>
    %416 = vector.extract_strided_slice %401 {offsets = [0, 32], sizes = [8, 16], strides = [1, 1]} : vector<8x48xf32> to vector<8x16xf32>
    %417 = arith.mulf %408, %416 : vector<8x16xf32>
    %418 = arith.addf %415, %417 : vector<8x16xf32>
    %419 = math.tanh %418 : vector<8x16xf32>
    %cst_100 = arith.constant 1.000000e+00 : f32
    %420 = vector.broadcast %cst_100 : f32 to vector<8x16xf32>
    %421 = arith.subf %420, %414 : vector<8x16xf32>
    %422 = arith.mulf %421, %419 : vector<8x16xf32>
    %423 = arith.mulf %414, %395 : vector<8x16xf32>
    %424 = arith.addf %422, %423 : vector<8x16xf32>
    %425 = vector.extract_strided_slice %276 {offsets = [5, 0, 0], sizes = [1, 8, 48], strides = [1, 1, 1]} : vector<8x8x48xf32> to vector<1x8x48xf32>
    %426 = vector.shape_cast %425 : vector<1x8x48xf32> to vector<8x48xf32>
    %427 = arith.truncf %424 : vector<8x16xf32> to vector<8x16xbf16>
    %cst_101 = arith.constant dense<0.000000e+00> : vector<8x48xf32>
    %428 = tpu.matmul %427, %277, %cst_101 {dimension_numbers = #tpu.dot_dimension_numbers<[1], [0], [0], [1], [0, 0, 1, 1], [], []>} : vector<8x16xbf16>, vector<16x48xbf16>, vector<8x48xf32> -> vector<8x48xf32>
    %429 = vector.broadcast %278 : vector<1x48xf32> to vector<8x48xf32>
    %430 = arith.addf %428, %429 : vector<8x48xf32>
    %431 = arith.addf %426, %430 : vector<8x48xf32>
    %432 = vector.extract_strided_slice %431 {offsets = [0, 0], sizes = [8, 16], strides = [1, 1]} : vector<8x48xf32> to vector<8x16xf32>
    %433 = arith.negf %432 : vector<8x16xf32>
    %434 = math.exp %433 : vector<8x16xf32>
    %cst_102 = arith.constant 1.000000e+00 : f32
    %435 = vector.broadcast %cst_102 : f32 to vector<8x16xf32>
    %436 = arith.addf %435, %434 : vector<8x16xf32>
    %437 = arith.divf %435, %436 : vector<8x16xf32>
    %438 = vector.extract_strided_slice %431 {offsets = [0, 16], sizes = [8, 16], strides = [1, 1]} : vector<8x48xf32> to vector<8x16xf32>
    %439 = arith.negf %438 : vector<8x16xf32>
    %440 = math.exp %439 : vector<8x16xf32>
    %cst_103 = arith.constant 1.000000e+00 : f32
    %441 = vector.broadcast %cst_103 : f32 to vector<8x16xf32>
    %442 = arith.addf %441, %440 : vector<8x16xf32>
    %443 = arith.divf %441, %442 : vector<8x16xf32>
    %444 = vector.extract_strided_slice %426 {offsets = [0, 32], sizes = [8, 16], strides = [1, 1]} : vector<8x48xf32> to vector<8x16xf32>
    %445 = vector.extract_strided_slice %430 {offsets = [0, 32], sizes = [8, 16], strides = [1, 1]} : vector<8x48xf32> to vector<8x16xf32>
    %446 = arith.mulf %437, %445 : vector<8x16xf32>
    %447 = arith.addf %444, %446 : vector<8x16xf32>
    %448 = math.tanh %447 : vector<8x16xf32>
    %cst_104 = arith.constant 1.000000e+00 : f32
    %449 = vector.broadcast %cst_104 : f32 to vector<8x16xf32>
    %450 = arith.subf %449, %443 : vector<8x16xf32>
    %451 = arith.mulf %450, %448 : vector<8x16xf32>
    %452 = arith.mulf %443, %424 : vector<8x16xf32>
    %453 = arith.addf %451, %452 : vector<8x16xf32>
    %454 = vector.extract_strided_slice %276 {offsets = [6, 0, 0], sizes = [1, 8, 48], strides = [1, 1, 1]} : vector<8x8x48xf32> to vector<1x8x48xf32>
    %455 = vector.shape_cast %454 : vector<1x8x48xf32> to vector<8x48xf32>
    %456 = arith.truncf %453 : vector<8x16xf32> to vector<8x16xbf16>
    %cst_105 = arith.constant dense<0.000000e+00> : vector<8x48xf32>
    %457 = tpu.matmul %456, %277, %cst_105 {dimension_numbers = #tpu.dot_dimension_numbers<[1], [0], [0], [1], [0, 0, 1, 1], [], []>} : vector<8x16xbf16>, vector<16x48xbf16>, vector<8x48xf32> -> vector<8x48xf32>
    %458 = vector.broadcast %278 : vector<1x48xf32> to vector<8x48xf32>
    %459 = arith.addf %457, %458 : vector<8x48xf32>
    %460 = arith.addf %455, %459 : vector<8x48xf32>
    %461 = vector.extract_strided_slice %460 {offsets = [0, 0], sizes = [8, 16], strides = [1, 1]} : vector<8x48xf32> to vector<8x16xf32>
    %462 = arith.negf %461 : vector<8x16xf32>
    %463 = math.exp %462 : vector<8x16xf32>
    %cst_106 = arith.constant 1.000000e+00 : f32
    %464 = vector.broadcast %cst_106 : f32 to vector<8x16xf32>
    %465 = arith.addf %464, %463 : vector<8x16xf32>
    %466 = arith.divf %464, %465 : vector<8x16xf32>
    %467 = vector.extract_strided_slice %460 {offsets = [0, 16], sizes = [8, 16], strides = [1, 1]} : vector<8x48xf32> to vector<8x16xf32>
    %468 = arith.negf %467 : vector<8x16xf32>
    %469 = math.exp %468 : vector<8x16xf32>
    %cst_107 = arith.constant 1.000000e+00 : f32
    %470 = vector.broadcast %cst_107 : f32 to vector<8x16xf32>
    %471 = arith.addf %470, %469 : vector<8x16xf32>
    %472 = arith.divf %470, %471 : vector<8x16xf32>
    %473 = vector.extract_strided_slice %455 {offsets = [0, 32], sizes = [8, 16], strides = [1, 1]} : vector<8x48xf32> to vector<8x16xf32>
    %474 = vector.extract_strided_slice %459 {offsets = [0, 32], sizes = [8, 16], strides = [1, 1]} : vector<8x48xf32> to vector<8x16xf32>
    %475 = arith.mulf %466, %474 : vector<8x16xf32>
    %476 = arith.addf %473, %475 : vector<8x16xf32>
    %477 = math.tanh %476 : vector<8x16xf32>
    %cst_108 = arith.constant 1.000000e+00 : f32
    %478 = vector.broadcast %cst_108 : f32 to vector<8x16xf32>
    %479 = arith.subf %478, %472 : vector<8x16xf32>
    %480 = arith.mulf %479, %477 : vector<8x16xf32>
    %481 = arith.mulf %472, %453 : vector<8x16xf32>
    %482 = arith.addf %480, %481 : vector<8x16xf32>
    %483 = vector.extract_strided_slice %276 {offsets = [7, 0, 0], sizes = [1, 8, 48], strides = [1, 1, 1]} : vector<8x8x48xf32> to vector<1x8x48xf32>
    %484 = vector.shape_cast %483 : vector<1x8x48xf32> to vector<8x48xf32>
    %485 = arith.truncf %482 : vector<8x16xf32> to vector<8x16xbf16>
    %cst_109 = arith.constant dense<0.000000e+00> : vector<8x48xf32>
    %486 = tpu.matmul %485, %277, %cst_109 {dimension_numbers = #tpu.dot_dimension_numbers<[1], [0], [0], [1], [0, 0, 1, 1], [], []>} : vector<8x16xbf16>, vector<16x48xbf16>, vector<8x48xf32> -> vector<8x48xf32>
    %487 = vector.broadcast %278 : vector<1x48xf32> to vector<8x48xf32>
    %488 = arith.addf %486, %487 : vector<8x48xf32>
    %489 = arith.addf %484, %488 : vector<8x48xf32>
    %490 = vector.extract_strided_slice %489 {offsets = [0, 0], sizes = [8, 16], strides = [1, 1]} : vector<8x48xf32> to vector<8x16xf32>
    %491 = arith.negf %490 : vector<8x16xf32>
    %492 = math.exp %491 : vector<8x16xf32>
    %cst_110 = arith.constant 1.000000e+00 : f32
    %493 = vector.broadcast %cst_110 : f32 to vector<8x16xf32>
    %494 = arith.addf %493, %492 : vector<8x16xf32>
    %495 = arith.divf %493, %494 : vector<8x16xf32>
    %496 = vector.extract_strided_slice %489 {offsets = [0, 16], sizes = [8, 16], strides = [1, 1]} : vector<8x48xf32> to vector<8x16xf32>
    %497 = arith.negf %496 : vector<8x16xf32>
    %498 = math.exp %497 : vector<8x16xf32>
    %cst_111 = arith.constant 1.000000e+00 : f32
    %499 = vector.broadcast %cst_111 : f32 to vector<8x16xf32>
    %500 = arith.addf %499, %498 : vector<8x16xf32>
    %501 = arith.divf %499, %500 : vector<8x16xf32>
    %502 = vector.extract_strided_slice %484 {offsets = [0, 32], sizes = [8, 16], strides = [1, 1]} : vector<8x48xf32> to vector<8x16xf32>
    %503 = vector.extract_strided_slice %488 {offsets = [0, 32], sizes = [8, 16], strides = [1, 1]} : vector<8x48xf32> to vector<8x16xf32>
    %504 = arith.mulf %495, %503 : vector<8x16xf32>
    %505 = arith.addf %502, %504 : vector<8x16xf32>
    %506 = math.tanh %505 : vector<8x16xf32>
    %cst_112 = arith.constant 1.000000e+00 : f32
    %507 = vector.broadcast %cst_112 : f32 to vector<8x16xf32>
    %508 = arith.subf %507, %501 : vector<8x16xf32>
    %509 = arith.mulf %508, %506 : vector<8x16xf32>
    %510 = arith.mulf %501, %482 : vector<8x16xf32>
    %511 = arith.addf %509, %510 : vector<8x16xf32>
    %512 = tpu.concatenate %133, %264, %511 in 1 : vector<8x16xf32>, vector<8x16xf32>, vector<8x16xf32> -> vector<8x48xf32>
    %c0_113 = arith.constant 0 : index
    %c0_114 = arith.constant 0 : index
    %513 = vector.load %arg20[%c0_113, %c0_114] : memref<1x48xf32, #tpu.memory_space<vmem>>, vector<1x48xf32>
    %514 = vector.broadcast %513 : vector<1x48xf32> to vector<8x48xf32>
    %515 = arith.mulf %512, %514 : vector<8x48xf32>
    %516 = arith.truncf %515 : vector<8x48xf32> to vector<8x48xbf16>
    %c0_115 = arith.constant 0 : index
    %c0_116 = arith.constant 0 : index
    %517 = vector.load %arg21[%c0_115, %c0_116] : memref<48x48xbf16, #tpu.memory_space<vmem>>, vector<48x48xbf16>
    %cst_117 = arith.constant dense<0.000000e+00> : vector<8x48xf32>
    %518 = tpu.matmul %516, %517, %cst_117 {dimension_numbers = #tpu.dot_dimension_numbers<[1], [0], [0], [1], [0, 0, 1, 1], [], []>} : vector<8x48xbf16>, vector<48x48xbf16>, vector<8x48xf32> -> vector<8x48xf32>
    %c0_118 = arith.constant 0 : index
    %c0_119 = arith.constant 0 : index
    %519 = vector.load %arg22[%c0_118, %c0_119] : memref<1x48xf32, #tpu.memory_space<vmem>>, vector<1x48xf32>
    %520 = vector.broadcast %519 : vector<1x48xf32> to vector<8x48xf32>
    %521 = arith.addf %518, %520 : vector<8x48xf32>
    %c0_120 = arith.constant 0 : index
    %c0_121 = arith.constant 0 : index
    %522 = vector.load %arg23[%c0_120, %c0_121] : memref<8x48xf32, #tpu.memory_space<vmem>>, vector<8x48xf32>
    tpu.vector_store %arg23[%c0_120, %c0_121], %521 {strides = array<i32>} : memref<8x48xf32, #tpu.memory_space<vmem>>, vector<8x48xf32>,
    return
  }
  func.func @transform_0(%arg0: i32) -> (i32, i32, i32) {
    %c0_i32 = arith.constant 0 : i32
    %c0_i32_0 = arith.constant 0 : i32
    %c0_i32_1 = arith.constant 0 : i32
    return %c0_i32, %arg0, %c0_i32_0 : i32, i32, i32
  }
  func.func @transform_1(%arg0: i32) -> (i32, i32) {
    %c0_i32 = arith.constant 0 : i32
    %c0_i32_0 = arith.constant 0 : i32
    %c0_i32_1 = arith.constant 0 : i32
    return %c0_i32, %c0_i32_0 : i32, i32
  }
  func.func @transform_2(%arg0: i32) -> (i32, i32) {
    %c0_i32 = arith.constant 0 : i32
    %c0_i32_0 = arith.constant 0 : i32
    %c0_i32_1 = arith.constant 0 : i32
    return %c0_i32, %c0_i32_0 : i32, i32
  }
  func.func @transform_3(%arg0: i32) -> (i32, i32) {
    %c0_i32 = arith.constant 0 : i32
    %c0_i32_0 = arith.constant 0 : i32
    %c0_i32_1 = arith.constant 0 : i32
    return %c0_i32, %c0_i32_0 : i32, i32
  }
  func.func @transform_4(%arg0: i32) -> (i32, i32) {
    %c0_i32 = arith.constant 0 : i32
    %c0_i32_0 = arith.constant 0 : i32
    %c0_i32_1 = arith.constant 0 : i32
    return %c0_i32, %c0_i32_0 : i32, i32
  }
  func.func @transform_5(%arg0: i32) -> (i32, i32) {
    %c0_i32 = arith.constant 0 : i32
    %c0_i32_0 = arith.constant 0 : i32
    %c0_i32_1 = arith.constant 0 : i32
    return %c0_i32, %c0_i32_0 : i32, i32
  }
  func.func @transform_6(%arg0: i32) -> (i32, i32) {
    %c0_i32 = arith.constant 0 : i32
    %c0_i32_0 = arith.constant 0 : i32
    %c0_i32_1 = arith.constant 0 : i32
    return %c0_i32, %c0_i32_0 : i32, i32
  }
  func.func @transform_7(%arg0: i32) -> (i32, i32, i32) {
    %c0_i32 = arith.constant 0 : i32
    %c0_i32_0 = arith.constant 0 : i32
    %c0_i32_1 = arith.constant 0 : i32
    %c0_i32_2 = arith.constant 0 : i32
    return %c0_i32, %c0_i32_0, %c0_i32_1 : i32, i32, i32
  }
  func.func @transform_8(%arg0: i32) -> (i32, i32) {
    %c0_i32 = arith.constant 0 : i32
    %c0_i32_0 = arith.constant 0 : i32
    %c0_i32_1 = arith.constant 0 : i32
    return %c0_i32, %c0_i32_0 : i32, i32
  }
  func.func @transform_9(%arg0: i32) -> (i32, i32) {
    %c0_i32 = arith.constant 0 : i32
    %c0_i32_0 = arith.constant 0 : i32
    %c0_i32_1 = arith.constant 0 : i32
    return %c0_i32, %c0_i32_0 : i32, i32
  }
  func.func @transform_10(%arg0: i32) -> (i32, i32) {
    %c0_i32 = arith.constant 0 : i32
    %c0_i32_0 = arith.constant 0 : i32
    %c0_i32_1 = arith.constant 0 : i32
    return %c0_i32, %c0_i32_0 : i32, i32
  }
  func.func @transform_11(%arg0: i32) -> (i32, i32) {
    %c0_i32 = arith.constant 0 : i32
    %c0_i32_0 = arith.constant 0 : i32
    %c0_i32_1 = arith.constant 0 : i32
    return %c0_i32, %c0_i32_0 : i32, i32
  }
  func.func @transform_12(%arg0: i32) -> (i32, i32) {
    %c0_i32 = arith.constant 0 : i32
    %c0_i32_0 = arith.constant 0 : i32
    %c0_i32_1 = arith.constant 0 : i32
    return %c0_i32, %c0_i32_0 : i32, i32
  }
  func.func @transform_13(%arg0: i32) -> (i32, i32, i32) {
    %c0_i32 = arith.constant 0 : i32
    %c0_i32_0 = arith.constant 0 : i32
    %c0_i32_1 = arith.constant 0 : i32
    %c0_i32_2 = arith.constant 0 : i32
    return %c0_i32, %c0_i32_0, %c0_i32_1 : i32, i32, i32
  }
  func.func @transform_14(%arg0: i32) -> (i32, i32) {
    %c0_i32 = arith.constant 0 : i32
    %c0_i32_0 = arith.constant 0 : i32
    %c0_i32_1 = arith.constant 0 : i32
    return %c0_i32, %c0_i32_0 : i32, i32
  }
  func.func @transform_15(%arg0: i32) -> (i32, i32) {
    %c0_i32 = arith.constant 0 : i32
    %c0_i32_0 = arith.constant 0 : i32
    %c0_i32_1 = arith.constant 0 : i32
    return %c0_i32, %c0_i32_0 : i32, i32
  }
  func.func @transform_16(%arg0: i32) -> (i32, i32) {
    %c0_i32 = arith.constant 0 : i32
    %c0_i32_0 = arith.constant 0 : i32
    %c0_i32_1 = arith.constant 0 : i32
    return %c0_i32, %c0_i32_0 : i32, i32
  }
  func.func @transform_17(%arg0: i32) -> (i32, i32) {
    %c0_i32 = arith.constant 0 : i32
    %c0_i32_0 = arith.constant 0 : i32
    %c0_i32_1 = arith.constant 0 : i32
    return %c0_i32, %c0_i32_0 : i32, i32
  }
  func.func @transform_18(%arg0: i32) -> (i32, i32) {
    %c0_i32 = arith.constant 0 : i32
    %c0_i32_0 = arith.constant 0 : i32
    %c0_i32_1 = arith.constant 0 : i32
    return %c0_i32, %c0_i32_0 : i32, i32
  }
  func.func @transform_19(%arg0: i32) -> (i32, i32) {
    %c0_i32 = arith.constant 0 : i32
    %c0_i32_0 = arith.constant 0 : i32
    %c0_i32_1 = arith.constant 0 : i32
    return %c0_i32, %c0_i32_0 : i32, i32
  }
  func.func @transform_20(%arg0: i32) -> (i32, i32) {
    %c0_i32 = arith.constant 0 : i32
    %c0_i32_0 = arith.constant 0 : i32
    %c0_i32_1 = arith.constant 0 : i32
    return %c0_i32, %c0_i32_0 : i32, i32
  }
  func.func @transform_21(%arg0: i32) -> (i32, i32) {
    %c0_i32 = arith.constant 0 : i32
    %c0_i32_0 = arith.constant 0 : i32
    %c0_i32_1 = arith.constant 0 : i32
    return %c0_i32, %c0_i32_0 : i32, i32
  }
  func.func @transform_22(%arg0: i32) -> (i32, i32) {
    %c0_i32 = arith.constant 0 : i32
    %c0_i32_0 = arith.constant 0 : i32
    return %arg0, %c0_i32 : i32, i32
  }
}

</mosaic_0001>

<llo_original>
// kernel: mul.3
$region0: #{mul.3}
  #allocation0 [shape = 's32[1]{0}', space=sflag, size = 0x4, scoped, tag = 'scoped memory for mul.3']
  %s0 = inlined_call_operand.<no memory space> [shape: f32[], index: 0, kind: input, shape index: {}]
  %s1 = inlined_call_operand.vmem [shape: f32[1,16], index: 1, kind: output, shape index: {}]
  %v2 = vstv %s0
  %3 = vst [vmem:[%s1] sm:$0x1] %v2

// kernel: _forward_impl.1
$region0: #{_forward_impl.1}
  #allocation0 [shape = 'u32[]', space=smem, size = 0x4, offset = 0x4, fixed_abs, tag = 'smem constant byte address 0x4 - core index']
  #allocation1 [shape = 'u32[144,128]{1,0:T(1,128)}', space=vmem, size = 0x12000, scoped, tag = 'internal scratch']
  %s0 = inlined_call_operand.vmem [shape: f32[8,8,2], index: 0, kind: input, shape index: {}]
  %s1 = inlined_call_operand.hbm [shape: f32[2,128], index: 1, kind: input, shape index: {}]
  %s2 = inlined_call_operand.vmem [shape: f32[1,128], index: 2, kind: input, shape index: {}]
  %s3 = inlined_call_operand.hbm [shape: bf16[128,48], index: 3, kind: input, shape index: {}]
  %s4 = inlined_call_operand.hbm [shape: f32[1,48], index: 4, kind: input, shape index: {}]
  %s5 = inlined_call_operand.hbm [shape: bf16[16,48], index: 5, kind: input, shape index: {}]
  %s6 = inlined_call_operand.hbm [shape: f32[1,48], index: 6, kind: input, shape index: {}]
  %s7 = inlined_call_operand.vmem [shape: bf16[2,128,128], index: 7, kind: input, shape index: {}]
  %s8 = inlined_call_operand.hbm [shape: f32[1,128], index: 8, kind: input, shape index: {}]
  %s9 = inlined_call_operand.hbm [shape: bf16[128,48], index: 9, kind: input, shape index: {}]
  %s10 = inlined_call_operand.hbm [shape: f32[1,48], index: 10, kind: input, shape index: {}]
  %s11 = inlined_call_operand.vmem [shape: bf16[16,48], index: 11, kind: input, shape index: {}]
  %s12 = inlined_call_operand.hbm [shape: f32[1,48], index: 12, kind: input, shape index: {}]
  %s13 = inlined_call_operand.vmem [shape: bf16[2,128,128], index: 13, kind: input, shape index: {}]
  %s14 = inlined_call_operand.hbm [shape: f32[1,128], index: 14, kind: input, shape index: {}]
  %s15 = inlined_call_operand.hbm [shape: bf16[128,48], index: 15, kind: input, shape index: {}]
  %s16 = inlined_call_operand.hbm [shape: f32[1,48], index: 16, kind: input, shape index: {}]
  %s17 = inlined_call_operand.vmem [shape: bf16[16,48], index: 17, kind: input, shape index: {}]
  %s18 = inlined_call_operand.hbm [shape: f32[1,48], index: 18, kind: input, shape index: {}]
  %s19 = inlined_call_operand.vmem [shape: f32[1,48], index: 19, kind: input, shape index: {}]
  %s20 = inlined_call_operand.vmem [shape: bf16[48,48], index: 20, kind: input, shape index: {}]
  %s21 = inlined_call_operand.hbm [shape: f32[1,48], index: 21, kind: input, shape index: {}]
  %s22 = inlined_call_operand.hbm [shape: f32[8,48], index: 22, kind: output, shape index: {}]
  %s23 = sld [smem:[#allocation0]]
  $region154: #{_forward_impl.1} parent=0
    _
  %s25 = ssub.s32 1, %s23
  %s26 = scalar_select 0, %s25, %s23
  $region1: #{_forward_impl.1} parent=0
    #allocation2 [shape = 'u8[1024]{0}', space=vmem, size = 0x400, scoped, tag = 'input window, operand 1, single buffered']
    #allocation3 [shape = 's32[1]{0}', space=sflag, size = 0x4, scoped, tag = 'scoped memory for _forward_impl.1']
    #allocation4 [shape = 's32[1]{0}', space=sflag, size = 0x4, scoped, tag = 'scoped memory for _forward_impl.1']
    #allocation5 [shape = 'u8[32768]{0}', space=vmem, size = 0x8000, scoped, tag = 'input window, operand 3, single buffered']
    #allocation6 [shape = 's32[1]{0}', space=sflag, size = 0x4, scoped, tag = 'scoped memory for _forward_impl.1']
    #allocation7 [shape = 'u8[512]{0}', space=vmem, size = 0x400, scoped, tag = 'input window, operand 4, single buffered']
    #allocation8 [shape = 'u8[4096]{0}', space=vmem, size = 0x1000, scoped, tag = 'input window, operand 5, single buffered']
    #allocation9 [shape = 's32[1]{0}', space=sflag, size = 0x4, scoped, tag = 'scoped memory for _forward_impl.1']
    #allocation10 [shape = 'u8[512]{0}', space=vmem, size = 0x400, scoped, tag = 'input window, operand 6, single buffered']
    #allocation11 [shape = 'u8[512]{0}', space=vmem, size = 0x400, scoped, tag = 'input window, operand 8, single buffered']
    #allocation12 [shape = 's32[1]{0}', space=sflag, size = 0x4, scoped, tag = 'scoped memory for _forward_impl.1']
    #allocation13 [shape = 'u8[32768]{0}', space=vmem, size = 0x8000, scoped, tag = 'input window, operand 9, single buffered']
    #allocation14 [shape = 'u8[512]{0}', space=vmem, size = 0x400, scoped, tag = 'input window, operand 10, single buffered']
    #allocation15 [shape = 's32[1]{0}', space=sflag, size = 0x4, scoped, tag = 'scoped memory for _forward_impl.1']
    #allocation16 [shape = 'u8[512]{0}', space=vmem, size = 0x400, scoped, tag = 'input window, operand 12, single buffered']
    #allocation17 [shape = 'u8[512]{0}', space=vmem, size = 0x400, scoped, tag = 'input window, operand 14, single buffered']
    #allocation18 [shape = 's32[1]{0}', space=sflag, size = 0x4, scoped, tag = 'scoped memory for _forward_impl.1']
    #allocation19 [shape = 'u8[32768]{0}', space=vmem, size = 0x8000, scoped, tag = 'input window, operand 15, single buffered']
    #allocation20 [shape = 'u8[512]{0}', space=vmem, size = 0x400, scoped, tag = 'input window, operand 16, single buffered']
    #allocation21 [shape = 's32[1]{0}', space=sflag, size = 0x4, scoped, tag = 'scoped memory for _forward_impl.1']
    #allocation22 [shape = 'u8[512]{0}', space=vmem, size = 0x400, scoped, tag = 'input window, operand 18, single buffered']
    #allocation23 [shape = 'u8[512]{0}', space=vmem, size = 0x400, scoped, tag = 'input window, operand 21, single buffered']
    #allocation24 [shape = 's32[1]{0}', space=sflag, size = 0x4, scoped, tag = 'scoped memory for _forward_impl.1']
    #allocation25 [shape = 'u8[4096]{0}', space=vmem, size = 0x1000, scoped, tag = 'output window, operand 0, single buffered']
    %27 = vsyncpa [#allocation3], 0
    %28 = vsyncpa [#allocation6], 0
    %29 = vsyncpa [#allocation9], 0
    %30 = vsyncpa [#allocation12], 0
    %31 = vsyncpa [#allocation15], 0
    %32 = vsyncpa [#allocation18], 0
    %33 = vsyncpa [#allocation21], 0
    %34 = vsyncpa [#allocation24], 0
    %35 = vsyncpa [#allocation4], 0
    // Predicated region
    $region2: #{_forward_impl.1} parent=1 // pred_check
      _
    $region3: #{_forward_impl.1} parent=1 // pred_check_branch
      %37 = sbr.rel (0) target = $region5
    $region4: #{_forward_impl.1} parent=1 // pred_region
      _
    $region5: #{_forward_impl.1} parent=1 // pred_fallthru
      _
    // Predicated region
    $region6: #{_forward_impl.1} parent=1 // pred_check
      _
    $region7: #{_forward_impl.1} parent=1 // pred_check_branch
      %39 = sbr.rel (0) target = $region9
    $region8: #{_forward_impl.1} parent=1 // pred_region
      %s41 = ssub.s32 32, 32
      %42 = vsyncadd [#allocation3], %s41
      %s44 = sshll.u32 [#allocation2], 4
      %s45 = int_to_ptr.vmem [resolvable:$true] %s44
      %47 = dma.hbm_to_vmem [thread:$0]  %s1, 32, %s45, [#allocation3]
    $region9: #{_forward_impl.1} parent=1 // pred_fallthru
      _
    // Predicated region
    $region10: #{_forward_impl.1} parent=1 // pred_check
      _
    $region11: #{_forward_impl.1} parent=1 // pred_check_branch
      %49 = sbr.rel (0) target = $region13
    $region12: #{_forward_impl.1} parent=1 // pred_region
      _
    $region13: #{_forward_impl.1} parent=1 // pred_fallthru
      _
    // Predicated region
    $region14: #{_forward_impl.1} parent=1 // pred_check
      _
    $region15: #{_forward_impl.1} parent=1 // pred_check_branch
      %51 = sbr.rel (0) target = $region17
    $region16: #{_forward_impl.1} parent=1 // pred_region
      %s53 = ssub.s32 1024, 1024
      %54 = vsyncadd [#allocation6], %s53
      %s55 = sshll.u32 [#allocation5], 4
      %s56 = int_to_ptr.vmem [resolvable:$true] %s55
      %61 = dma.hbm_to_vmem [thread:$0]  %s3, 1024, %s56, [#allocation6], 64, 64, 4
    $region17: #{_forward_impl.1} parent=1 // pred_fallthru
      _
    // Predicated region
    $region18: #{_forward_impl.1} parent=1 // pred_check
      _
    $region19: #{_forward_impl.1} parent=1 // pred_check_branch
      %63 = sbr.rel (0) target = $region21
    $region20: #{_forward_impl.1} parent=1 // pred_region
      %s65 = ssub.s32 16, 16
      %66 = vsyncadd [#allocation6], %s65
      %s68 = sshll.u32 [#allocation7], 4
      %s69 = int_to_ptr.vmem [resolvable:$true] %s68
      %71 = dma.hbm_to_vmem [thread:$0]  %s4, 16, %s69, [#allocation6]
    $region21: #{_forward_impl.1} parent=1 // pred_fallthru
      _
    // Predicated region
    $region22: #{_forward_impl.1} parent=1 // pred_check
      _
    $region23: #{_forward_impl.1} parent=1 // pred_check_branch
      %73 = sbr.rel (0) target = $region25
    $region24: #{_forward_impl.1} parent=1 // pred_region
      %s75 = ssub.s32 128, 128
      %76 = vsyncadd [#allocation9], %s75
      %s77 = sshll.u32 [#allocation8], 4
      %s78 = int_to_ptr.vmem [resolvable:$true] %s77
      %83 = dma.hbm_to_vmem [thread:$0]  %s5, 128, %s78, [#allocation9], 64, 64, 4
    $region25: #{_forward_impl.1} parent=1 // pred_fallthru
      _
    // Predicated region
    $region26: #{_forward_impl.1} parent=1 // pred_check
      _
    $region27: #{_forward_impl.1} parent=1 // pred_check_branch
      %85 = sbr.rel (0) target = $region29
    $region28: #{_forward_impl.1} parent=1 // pred_region
      %s87 = ssub.s32 16, 16
      %88 = vsyncadd [#allocation9], %s87
      %s90 = sshll.u32 [#allocation10], 4
      %s91 = int_to_ptr.vmem [resolvable:$true] %s90
      %93 = dma.hbm_to_vmem [thread:$0]  %s6, 16, %s91, [#allocation9]
    $region29: #{_forward_impl.1} parent=1 // pred_fallthru
      _
    // Predicated region
    $region30: #{_forward_impl.1} parent=1 // pred_check
      _
    $region31: #{_forward_impl.1} parent=1 // pred_check_branch
      %95 = sbr.rel (0) target = $region33
    $region32: #{_forward_impl.1} parent=1 // pred_region
      _
    $region33: #{_forward_impl.1} parent=1 // pred_fallthru
      _
    // Predicated region
    $region34: #{_forward_impl.1} parent=1 // pred_check
      _
    $region35: #{_forward_impl.1} parent=1 // pred_check_branch
      %97 = sbr.rel (0) target = $region37
    $region36: #{_forward_impl.1} parent=1 // pred_region
      %s99 = ssub.s32 16, 16
      %100 = vsyncadd [#allocation12], %s99
      %s102 = sshll.u32 [#allocation11], 4
      %s103 = int_to_ptr.vmem [resolvable:$true] %s102
      %105 = dma.hbm_to_vmem [thread:$0]  %s8, 16, %s103, [#allocation12]
    $region37: #{_forward_impl.1} parent=1 // pred_fallthru
      _
    // Predicated region
    $region38: #{_forward_impl.1} parent=1 // pred_check
      _
    $region39: #{_forward_impl.1} parent=1 // pred_check_branch
      %107 = sbr.rel (0) target = $region41
    $region40: #{_forward_impl.1} parent=1 // pred_region
      %s109 = ssub.s32 1024, 1024
      %110 = vsyncadd [#allocation12], %s109
      %s111 = sshll.u32 [#allocation13], 4
      %s112 = int_to_ptr.vmem [resolvable:$true] %s111
      %117 = dma.hbm_to_vmem [thread:$0]  %s9, 1024, %s112, [#allocation12], 64, 64, 4
    $region41: #{_forward_impl.1} parent=1 // pred_fallthru
      _
    // Predicated region
    $region42: #{_forward_impl.1} parent=1 // pred_check
      _
    $region43: #{_forward_impl.1} parent=1 // pred_check_branch
      %119 = sbr.rel (0) target = $region45
    $region44: #{_forward_impl.1} parent=1 // pred_region
      %s121 = ssub.s32 16, 16
      %122 = vsyncadd [#allocation15], %s121
      %s124 = sshll.u32 [#allocation14], 4
      %s125 = int_to_ptr.vmem [resolvable:$true] %s124
      %127 = dma.hbm_to_vmem [thread:$0]  %s10, 16, %s125, [#allocation15]
    $region45: #{_forward_impl.1} parent=1 // pred_fallthru
      _
    // Predicated region
    $region46: #{_forward_impl.1} parent=1 // pred_check
      _
    $region47: #{_forward_impl.1} parent=1 // pred_check_branch
      %129 = sbr.rel (0) target = $region49
    $region48: #{_forward_impl.1} parent=1 // pred_region
      _
    $region49: #{_forward_impl.1} parent=1 // pred_fallthru
      _
    // Predicated region
    $region50: #{_forward_impl.1} parent=1 // pred_check
      _
    $region51: #{_forward_impl.1} parent=1 // pred_check_branch
      %131 = sbr.rel (0) target = $region53
    $region52: #{_forward_impl.1} parent=1 // pred_region
      %s133 = ssub.s32 16, 16
      %134 = vsyncadd [#allocation15], %s133
      %s136 = sshll.u32 [#allocation16], 4
      %s137 = int_to_ptr.vmem [resolvable:$true] %s136
      %139 = dma.hbm_to_vmem [thread:$0]  %s12, 16, %s137, [#allocation15]
    $region53: #{_forward_impl.1} parent=1 // pred_fallthru
      _
    // Predicated region
    $region54: #{_forward_impl.1} parent=1 // pred_check
      _
    $region55: #{_forward_impl.1} parent=1 // pred_check_branch
      %141 = sbr.rel (0) target = $region57
    $region56: #{_forward_impl.1} parent=1 // pred_region
      _
    $region57: #{_forward_impl.1} parent=1 // pred_fallthru
      _
    // Predicated region
    $region58: #{_forward_impl.1} parent=1 // pred_check
      _
    $region59: #{_forward_impl.1} parent=1 // pred_check_branch
      %143 = sbr.rel (0) target = $region61
    $region60: #{_forward_impl.1} parent=1 // pred_region
      %s145 = ssub.s32 16, 16
      %146 = vsyncadd [#allocation18], %s145
      %s148 = sshll.u32 [#allocation17], 4
      %s149 = int_to_ptr.vmem [resolvable:$true] %s148
      %151 = dma.hbm_to_vmem [thread:$0]  %s14, 16, %s149, [#allocation18]
    $region61: #{_forward_impl.1} parent=1 // pred_fallthru
      _
    // Predicated region
    $region62: #{_forward_impl.1} parent=1 // pred_check
      _
    $region63: #{_forward_impl.1} parent=1 // pred_check_branch
      %153 = sbr.rel (0) target = $region65
    $region64: #{_forward_impl.1} parent=1 // pred_region
      %s155 = ssub.s32 1024, 1024
      %156 = vsyncadd [#allocation18], %s155
      %s157 = sshll.u32 [#allocation19], 4
      %s158 = int_to_ptr.vmem [resolvable:$true] %s157
      %163 = dma.hbm_to_vmem [thread:$0]  %s15, 1024, %s158, [#allocation18], 64, 64, 4
    $region65: #{_forward_impl.1} parent=1 // pred_fallthru
      _
    // Predicated region
    $region66: #{_forward_impl.1} parent=1 // pred_check
      _
    $region67: #{_forward_impl.1} parent=1 // pred_check_branch
      %165 = sbr.rel (0) target = $region69
    $region68: #{_forward_impl.1} parent=1 // pred_region
      %s167 = ssub.s32 16, 16
      %168 = vsyncadd [#allocation21], %s167
      %s170 = sshll.u32 [#allocation20], 4
      %s171 = int_to_ptr.vmem [resolvable:$true] %s170
      %173 = dma.hbm_to_vmem [thread:$0]  %s16, 16, %s171, [#allocation21]
    $region69: #{_forward_impl.1} parent=1 // pred_fallthru
      _
    // Predicated region
    $region70: #{_forward_impl.1} parent=1 // pred_check
      _
    $region71: #{_forward_impl.1} parent=1 // pred_check_branch
      %175 = sbr.rel (0) target = $region73
    $region72: #{_forward_impl.1} parent=1 // pred_region
      _
    $region73: #{_forward_impl.1} parent=1 // pred_fallthru
      _
    // Predicated region
    $region74: #{_forward_impl.1} parent=1 // pred_check
      _
    $region75: #{_forward_impl.1} parent=1 // pred_check_branch
      %177 = sbr.rel (0) target = $region77
    $region76: #{_forward_impl.1} parent=1 // pred_region
      %s179 = ssub.s32 16, 16
      %180 = vsyncadd [#allocation21], %s179
      %s182 = sshll.u32 [#allocation22], 4
      %s183 = int_to_ptr.vmem [resolvable:$true] %s182
      %185 = dma.hbm_to_vmem [thread:$0]  %s18, 16, %s183, [#allocation21]
    $region77: #{_forward_impl.1} parent=1 // pred_fallthru
      _
    // Predicated region
    $region78: #{_forward_impl.1} parent=1 // pred_check
      _
    $region79: #{_forward_impl.1} parent=1 // pred_check_branch
      %187 = sbr.rel (0) target = $region81
    $region80: #{_forward_impl.1} parent=1 // pred_region
      _
    $region81: #{_forward_impl.1} parent=1 // pred_fallthru
      _
    // Predicated region
    $region82: #{_forward_impl.1} parent=1 // pred_check
      _
    $region83: #{_forward_impl.1} parent=1 // pred_check_branch
      %189 = sbr.rel (0) target = $region85
    $region84: #{_forward_impl.1} parent=1 // pred_region
      _
    $region85: #{_forward_impl.1} parent=1 // pred_fallthru
      _
    // Predicated region
    $region86: #{_forward_impl.1} parent=1 // pred_check
      _
    $region87: #{_forward_impl.1} parent=1 // pred_check_branch
      %191 = sbr.rel (0) target = $region89
    $region88: #{_forward_impl.1} parent=1 // pred_region
      %s193 = ssub.s32 16, 16
      %194 = vsyncadd [#allocation24], %s193
      %s196 = sshll.u32 [#allocation23], 4
      %s197 = int_to_ptr.vmem [resolvable:$true] %s196
      %199 = dma.hbm_to_vmem [thread:$0]  %s21, 16, %s197, [#allocation24]
    $region89: #{_forward_impl.1} parent=1 // pred_fallthru
      _
    // Predicated region
    $region90: #{_forward_impl.1} parent=1 // pred_check
      _
    $region91: #{_forward_impl.1} parent=1 // pred_check_branch
      %201 = sbr.rel (0) target = $region93
    $region92: #{_forward_impl.1} parent=1 // pred_region
      %202 = dma.done [#allocation3], 32
    $region93: #{_forward_impl.1} parent=1 // pred_fallthru
      _
    // Predicated region
    $region94: #{_forward_impl.1} parent=1 // pred_check
      _
    $region95: #{_forward_impl.1} parent=1 // pred_check_branch
      %204 = sbr.rel (0) target = $region97
    $region96: #{_forward_impl.1} parent=1 // pred_region
      %205 = dma.done [#allocation6], 1024
    $region97: #{_forward_impl.1} parent=1 // pred_fallthru
      _
    // Predicated region
    $region98: #{_forward_impl.1} parent=1 // pred_check
      _
    $region99: #{_forward_impl.1} parent=1 // pred_check_branch
      %207 = sbr.rel (0) target = $region101
    $region100: #{_forward_impl.1} parent=1 // pred_region
      %208 = dma.done [#allocation6], 16
    $region101: #{_forward_impl.1} parent=1 // pred_fallthru
      _
    // Predicated region
    $region102: #{_forward_impl.1} parent=1 // pred_check
      _
    $region103: #{_forward_impl.1} parent=1 // pred_check_branch
      %210 = sbr.rel (0) target = $region105
    $region104: #{_forward_impl.1} parent=1 // pred_region
      %211 = dma.done [#allocation9], 128
    $region105: #{_forward_impl.1} parent=1 // pred_fallthru
      _
    // Predicated region
    $region106: #{_forward_impl.1} parent=1 // pred_check
      _
    $region107: #{_forward_impl.1} parent=1 // pred_check_branch
      %213 = sbr.rel (0) target = $region109
    $region108: #{_forward_impl.1} parent=1 // pred_region
      %214 = dma.done [#allocation9], 16
    $region109: #{_forward_impl.1} parent=1 // pred_fallthru
      _
    // Predicated region
    $region110: #{_forward_impl.1} parent=1 // pred_check
      _
    $region111: #{_forward_impl.1} parent=1 // pred_check_branch
      %216 = sbr.rel (0) target = $region113
    $region112: #{_forward_impl.1} parent=1 // pred_region
      %217 = dma.done [#allocation12], 16
    $region113: #{_forward_impl.1} parent=1 // pred_fallthru
      _
    // Predicated region
    $region114: #{_forward_impl.1} parent=1 // pred_check
      _
    $region115: #{_forward_impl.1} parent=1 // pred_check_branch
      %219 = sbr.rel (0) target = $region117
    $region116: #{_forward_impl.1} parent=1 // pred_region
      %220 = dma.done [#allocation12], 1024
    $region117: #{_forward_impl.1} parent=1 // pred_fallthru
      _
    // Predicated region
    $region118: #{_forward_impl.1} parent=1 // pred_check
      _
    $region119: #{_forward_impl.1} parent=1 // pred_check_branch
      %222 = sbr.rel (0) target = $region121
    $region120: #{_forward_impl.1} parent=1 // pred_region
      %223 = dma.done [#allocation15], 16
    $region121: #{_forward_impl.1} parent=1 // pred_fallthru
      _
    // Predicated region
    $region122: #{_forward_impl.1} parent=1 // pred_check
      _
    $region123: #{_forward_impl.1} parent=1 // pred_check_branch
      %225 = sbr.rel (0) target = $region125
    $region124: #{_forward_impl.1} parent=1 // pred_region
      %226 = dma.done [#allocation15], 16
    $region125: #{_forward_impl.1} parent=1 // pred_fallthru
      _
    // Predicated region
    $region126: #{_forward_impl.1} parent=1 // pred_check
      _
    $region127: #{_forward_impl.1} parent=1 // pred_check_branch
      %228 = sbr.rel (0) target = $region129
    $region128: #{_forward_impl.1} parent=1 // pred_region
      %229 = dma.done [#allocation18], 16
    $region129: #{_forward_impl.1} parent=1 // pred_fallthru
      _
    // Predicated region
    $region130: #{_forward_impl.1} parent=1 // pred_check
      _
    $region131: #{_forward_impl.1} parent=1 // pred_check_branch
      %231 = sbr.rel (0) target = $region133
    $region132: #{_forward_impl.1} parent=1 // pred_region
      %232 = dma.done [#allocation18], 1024
    $region133: #{_forward_impl.1} parent=1 // pred_fallthru
      _
    // Predicated region
    $region134: #{_forward_impl.1} parent=1 // pred_check
      _
    $region135: #{_forward_impl.1} parent=1 // pred_check_branch
      %234 = sbr.rel (0) target = $region137
    $region136: #{_forward_impl.1} parent=1 // pred_region
      %235 = dma.done [#allocation21], 16
    $region137: #{_forward_impl.1} parent=1 // pred_fallthru
      _
    // Predicated region
    $region138: #{_forward_impl.1} parent=1 // pred_check
      _
    $region139: #{_forward_impl.1} parent=1 // pred_check_branch
      %237 = sbr.rel (0) target = $region141
    $region140: #{_forward_impl.1} parent=1 // pred_region
      %238 = dma.done [#allocation21], 16
    $region141: #{_forward_impl.1} parent=1 // pred_fallthru
      _
    // Predicated region
    $region142: #{_forward_impl.1} parent=1 // pred_check
      _
    $region143: #{_forward_impl.1} parent=1 // pred_check_branch
      %240 = sbr.rel (0) target = $region145
    $region144: #{_forward_impl.1} parent=1 // pred_region
      %241 = dma.done [#allocation24], 16
    $region145: #{_forward_impl.1} parent=1 // pred_fallthru
      _
    %v243 = vld [vmem:[%s0] sm:$0xff]
    %v244 = vld [vmem:[%s0 + $0x8] sm:$0xff]
    %v245 = vld [vmem:[%s0 + $0x10] sm:$0xff]
    %v246 = vld [vmem:[%s0 + $0x18] sm:$0xff]
    %v247 = vld [vmem:[%s0 + $0x20] sm:$0xff]
    %v248 = vld [vmem:[%s0 + $0x28] sm:$0xff]
    %v249 = vld [vmem:[%s0 + $0x30] sm:$0xff]
    %v250 = vld [vmem:[%s0 + $0x38] sm:$0xff]
    %v251 = vld [vmem:[#allocation2] sm:$0x3]
    %v252 = vld [vmem:[%s2] sm:$0x1]
    %v254 = vlaneseq
    %v255 = vshrl.u32 %v254, 7
    %v256 = vsub.s32 0, %v255
    %v257 = vrot.slane %v252, %v256
    %v259 = vadd.f32 %v257, 0.0
    %261 = vset.pattern.permute.xlu0 0
    %262 = vperm.xlu0 %261, %v243
    %v263 = vpop.permute.xlu0 %262
    %266 = vset.pattern.permute.xlu0 0
    %267 = vperm.xlu0 %266, %v244
    %v268 = vpop.permute.xlu0 %267
    %271 = vset.pattern.permute.xlu0 0
    %272 = vperm.xlu0 %271, %v245
    %v273 = vpop.permute.xlu0 %272
    %276 = vset.pattern.permute.xlu0 0
    %277 = vperm.xlu0 %276, %v246
    %v278 = vpop.permute.xlu0 %277
    %281 = vset.pattern.permute.xlu0 0
    %282 = vperm.xlu0 %281, %v247
    %v283 = vpop.permute.xlu0 %282
    %286 = vset.pattern.permute.xlu0 0
    %287 = vperm.xlu0 %286, %v248
    %v288 = vpop.permute.xlu0 %287
    %291 = vset.pattern.permute.xlu0 0
    %292 = vperm.xlu0 %291, %v249
    %v293 = vpop.permute.xlu0 %292
    %296 = vset.pattern.permute.xlu0 0
    %297 = vperm.xlu0 %296, %v250
    %v298 = vpop.permute.xlu0 %297
    %v300 = vlaneseq
    %v301 = vshrl.u32 %v300, 7
    %v302 = vsub.s32 0, %v301
    %v303 = vrot.slane %v251, %v302
    %v304 = vmul.f32 %v263, %v303
    %v305 = vmul.f32 %v268, %v303
    %v306 = vmul.f32 %v273, %v303
    %v307 = vmul.f32 %v278, %v303
    %v308 = vmul.f32 %v283, %v303
    %v309 = vmul.f32 %v288, %v303
    %v310 = vmul.f32 %v293, %v303
    %v311 = vmul.f32 %v298, %v303
    %v312 = vadd.f32 %v259, %v304
    %v313 = vadd.f32 %v259, %v305
    %v314 = vadd.f32 %v259, %v306
    %v315 = vadd.f32 %v259, %v307
    %v316 = vadd.f32 %v259, %v308
    %v317 = vadd.f32 %v259, %v309
    %v318 = vadd.f32 %v259, %v310
    %v319 = vadd.f32 %v259, %v311
    %320 = vset.pattern.permute.xlu0 1
    %321 = vperm.xlu0 %320, %v243
    %v322 = vpop.permute.xlu0 %321
    %324 = vset.pattern.permute.xlu0 1
    %325 = vperm.xlu0 %324, %v244
    %v326 = vpop.permute.xlu0 %325
    %328 = vset.pattern.permute.xlu0 1
    %329 = vperm.xlu0 %328, %v245
    %v330 = vpop.permute.xlu0 %329
    %332 = vset.pattern.permute.xlu0 1
    %333 = vperm.xlu0 %332, %v246
    %v334 = vpop.permute.xlu0 %333
    %336 = vset.pattern.permute.xlu0 1
    %337 = vperm.xlu0 %336, %v247
    %v338 = vpop.permute.xlu0 %337
    %340 = vset.pattern.permute.xlu0 1
    %341 = vperm.xlu0 %340, %v248
    %v342 = vpop.permute.xlu0 %341
    %344 = vset.pattern.permute.xlu0 1
    %345 = vperm.xlu0 %344, %v249
    %v346 = vpop.permute.xlu0 %345
    %348 = vset.pattern.permute.xlu0 1
    %349 = vperm.xlu0 %348, %v250
    %v350 = vpop.permute.xlu0 %349
    %v352 = vlaneseq
    %v353 = vshrl.u32 %v352, 7
    %v354 = vsub.s32 1, %v353
    %v355 = vrot.slane %v251, %v354
    %v356 = vmul.f32 %v322, %v355
    %v357 = vmul.f32 %v326, %v355
    %v358 = vmul.f32 %v330, %v355
    %v359 = vmul.f32 %v334, %v355
    %v360 = vmul.f32 %v338, %v355
    %v361 = vmul.f32 %v342, %v355
    %v362 = vmul.f32 %v346, %v355
    %v363 = vmul.f32 %v350, %v355
    %v364 = vadd.f32 %v312, %v356
    %v365 = vadd.f32 %v313, %v357
    %v366 = vadd.f32 %v314, %v358
    %v367 = vadd.f32 %v315, %v359
    %v368 = vadd.f32 %v316, %v360
    %v369 = vadd.f32 %v317, %v361
    %v370 = vadd.f32 %v318, %v362
    %v371 = vadd.f32 %v319, %v363
    %v372 = vpack.c.bf16 %v366, %v364
    %v373 = vpack.c.bf16 %v370, %v368
    %v374 = vld [vmem:[%s7] sm:$0xf]
    %v375 = vld [vmem:[%s7 + $0x4] sm:$0xf]
    %v376 = vld [vmem:[%s7 + $0x8] sm:$0xf]
    %v377 = vld [vmem:[%s7 + $0xc] sm:$0xf]
    %v378 = vld [vmem:[%s7 + $0x10] sm:$0xf]
    %v379 = vld [vmem:[%s7 + $0x14] sm:$0xf]
    %v380 = vld [vmem:[%s7 + $0x18] sm:$0xf]
    %v381 = vld [vmem:[%s7 + $0x1c] sm:$0xf]
    %v382 = vld [vmem:[%s7 + $0x20] sm:$0xf]
    %v383 = vld [vmem:[%s7 + $0x24] sm:$0xf]
    %v384 = vld [vmem:[%s7 + $0x28] sm:$0xf]
    %v385 = vld [vmem:[%s7 + $0x2c] sm:$0xf]
    %v386 = vld [vmem:[%s7 + $0x30] sm:$0xf]
    %v387 = vld [vmem:[%s7 + $0x34] sm:$0xf]
    %v388 = vld [vmem:[%s7 + $0x38] sm:$0xf]
    %v389 = vld [vmem:[%s7 + $0x3c] sm:$0xf]
    %v390 = vpack.c.bf16 %v367, %v365
    %v391 = vpack.c.bf16 %v371, %v369
    %s392 = scalar_lea.vmem %s7, 64
    %v393 = vld [vmem:[%s392] sm:$0xf]
    %v394 = vld [vmem:[%s392 + $0x4] sm:$0xf]
    %v395 = vld [vmem:[%s392 + $0x8] sm:$0xf]
    %v396 = vld [vmem:[%s392 + $0xc] sm:$0xf]
    %v397 = vld [vmem:[%s392 + $0x10] sm:$0xf]
    %v398 = vld [vmem:[%s392 + $0x14] sm:$0xf]
    %v399 = vld [vmem:[%s392 + $0x18] sm:$0xf]
    %v400 = vld [vmem:[%s392 + $0x1c] sm:$0xf]
    %v401 = vld [vmem:[%s392 + $0x20] sm:$0xf]
    %v402 = vld [vmem:[%s392 + $0x24] sm:$0xf]
    %v403 = vld [vmem:[%s392 + $0x28] sm:$0xf]
    %v404 = vld [vmem:[%s392 + $0x2c] sm:$0xf]
    %v405 = vld [vmem:[%s392 + $0x30] sm:$0xf]
    %v406 = vld [vmem:[%s392 + $0x34] sm:$0xf]
    %v407 = vld [vmem:[%s392 + $0x38] sm:$0xf]
    %v408 = vld [vmem:[%s392 + $0x3c] sm:$0xf]
    %v425 = vunpack.c.l.b16 %v393
    %v426 = vunpack.c.l.b16 %v394
    %v427 = vunpack.c.l.b16 %v395
    %v428 = vunpack.c.l.b16 %v396
    %v429 = vunpack.c.l.b16 %v397
    %v430 = vunpack.c.l.b16 %v398
    %v431 = vunpack.c.l.b16 %v399
    %v432 = vunpack.c.l.b16 %v400
    %v433 = vunpack.c.l.b16 %v401
    %v434 = vunpack.c.l.b16 %v402
    %v435 = vunpack.c.l.b16 %v403
    %v436 = vunpack.c.l.b16 %v404
    %v437 = vunpack.c.l.b16 %v405
    %v438 = vunpack.c.l.b16 %v406
    %v439 = vunpack.c.l.b16 %v407
    %v440 = vunpack.c.l.b16 %v408
    %v441 = vpack.c.b16 %v426, %v425
    %v442 = vpack.c.b16 %v428, %v427
    %v443 = vpack.c.b16 %v430, %v429
    %v444 = vpack.c.b16 %v432, %v431
    %v445 = vpack.c.b16 %v434, %v433
    %v446 = vpack.c.b16 %v436, %v435
    %v447 = vpack.c.b16 %v438, %v437
    %v448 = vpack.c.b16 %v440, %v439
    %457 = vmatprep.subr.bf16.mxu0 0
    %458 = vmatpush1.bf16.msra.mxu0 %v441
    %459 = vmatprep.subr.bf16.mxu0 0
    %460 = vmatpush1.bf16.msra.mxu0 %v442
    %461 = vmatprep.subr.bf16.mxu0 0
    %462 = vmatpush1.bf16.msra.mxu0 %v443
    %463 = vmatprep.subr.bf16.mxu0 0
    %464 = vmatpush1.bf16.msra.mxu0 %v444
    %465 = vmatprep.subr.bf16.mxu0 0
    %466 = vmatpush1.bf16.msra.mxu0 %v445
    %467 = vmatprep.subr.bf16.mxu0 0
    %468 = vmatpush1.bf16.msra.mxu0 %v446
    %469 = vmatprep.subr.bf16.mxu0 0
    %470 = vmatpush1.bf16.msra.mxu0 %v447
    %471 = vmatprep.subr.bf16.mxu0 0
    %472 = vmatpush1.bf16.msra.mxu0 %v448
    %473 = vmatprep.subr.bf16.mxu0 0
    %474 = vmatpush1.bf16.msra.mxu0 0
    %475 = vmatprep.subr.bf16.mxu0 0
    %476 = vmatpush1.bf16.msra.mxu0 0
    %477 = vmatprep.subr.bf16.mxu0 0
    %478 = vmatpush1.bf16.msra.mxu0 0
    %479 = vmatprep.subr.bf16.mxu0 0
    %480 = vmatpush1.bf16.msra.mxu0 0
    %481 = vmatprep.subr.bf16.mxu0 0
    %482 = vmatpush1.bf16.msra.mxu0 0
    %483 = vmatprep.subr.bf16.mxu0 0
    %484 = vmatpush1.bf16.msra.mxu0 0
    %485 = vmatprep.subr.bf16.mxu0 0
    %486 = vmatpush1.bf16.msra.mxu0 0
    %487 = vmatprep.subr.bf16.mxu0 0
    %488 = vmatpush1.bf16.msra.mxu0 0
    %489 = vmatprep.mubr.bf16.mxu0 0
    %490 = vmatmul.mubr.bf16.gmra.mrb[0].mxu0 %v390
    %v491 = vpop.f32.mrb[0].mxu0
    %v492 = vadd.f32 0.0, %v491
    %v493 = vpop.f32.mrb[0].mxu0
    %v494 = vpop.f32.mrb[0].mxu0
    %v495 = vadd.f32 0.0, %v494
    %v496 = vpop.f32.mrb[0].mxu0
    %497 = vmatprep.mubr.bf16.mxu0 0
    %498 = vmatmul.mubr.bf16.gmra.mrb[0].mxu0 %v391
    %v499 = vpop.f32.mrb[0].mxu0
    %v500 = vadd.f32 0.0, %v499
    %v501 = vpop.f32.mrb[0].mxu0
    %v502 = vpop.f32.mrb[0].mxu0
    %v503 = vadd.f32 0.0, %v502
    %v504 = vpop.f32.mrb[0].mxu0
    %505 = vdwg.mxu0
    %v522 = vunpack.c.l.b16 %v374
    %v523 = vunpack.c.l.b16 %v375
    %v524 = vunpack.c.l.b16 %v376
    %v525 = vunpack.c.l.b16 %v377
    %v526 = vunpack.c.l.b16 %v378
    %v527 = vunpack.c.l.b16 %v379
    %v528 = vunpack.c.l.b16 %v380
    %v529 = vunpack.c.l.b16 %v381
    %v530 = vunpack.c.l.b16 %v382
    %v531 = vunpack.c.l.b16 %v383
    %v532 = vunpack.c.l.b16 %v384
    %v533 = vunpack.c.l.b16 %v385
    %v534 = vunpack.c.l.b16 %v386
    %v535 = vunpack.c.l.b16 %v387
    %v536 = vunpack.c.l.b16 %v388
    %v537 = vunpack.c.l.b16 %v389
    %v538 = vpack.c.b16 %v523, %v522
    %v539 = vpack.c.b16 %v525, %v524
    %v540 = vpack.c.b16 %v527, %v526
    %v541 = vpack.c.b16 %v529, %v528
    %v542 = vpack.c.b16 %v531, %v530
    %v543 = vpack.c.b16 %v533, %v532
    %v544 = vpack.c.b16 %v535, %v534
    %v545 = vpack.c.b16 %v537, %v536
    %554 = vmatprep.subr.bf16.mxu0 0
    %555 = vmatpush1.bf16.msra.mxu0 %v538
    %556 = vmatprep.subr.bf16.mxu0 0
    %557 = vmatpush1.bf16.msra.mxu0 %v539
    %558 = vmatprep.subr.bf16.mxu0 0
    %559 = vmatpush1.bf16.msra.mxu0 %v540
    %560 = vmatprep.subr.bf16.mxu0 0
    %561 = vmatpush1.bf16.msra.mxu0 %v541
    %562 = vmatprep.subr.bf16.mxu0 0
    %563 = vmatpush1.bf16.msra.mxu0 %v542
    %564 = vmatprep.subr.bf16.mxu0 0
    %565 = vmatpush1.bf16.msra.mxu0 %v543
    %566 = vmatprep.subr.bf16.mxu0 0
    %567 = vmatpush1.bf16.msra.mxu0 %v544
    %568 = vmatprep.subr.bf16.mxu0 0
    %569 = vmatpush1.bf16.msra.mxu0 %v545
    %570 = vmatprep.subr.bf16.mxu0 0
    %571 = vmatpush1.bf16.msra.mxu0 0
    %572 = vmatprep.subr.bf16.mxu0 0
    %573 = vmatpush1.bf16.msra.mxu0 0
    %574 = vmatprep.subr.bf16.mxu0 0
    %575 = vmatpush1.bf16.msra.mxu0 0
    %576 = vmatprep.subr.bf16.mxu0 0
    %577 = vmatpush1.bf16.msra.mxu0 0
    %578 = vmatprep.subr.bf16.mxu0 0
    %579 = vmatpush1.bf16.msra.mxu0 0
    %580 = vmatprep.subr.bf16.mxu0 0
    %581 = vmatpush1.bf16.msra.mxu0 0
    %582 = vmatprep.subr.bf16.mxu0 0
    %583 = vmatpush1.bf16.msra.mxu0 0
    %584 = vmatprep.subr.bf16.mxu0 0
    %585 = vmatpush1.bf16.msra.mxu0 0
    %586 = vmatprep.mubr.bf16.mxu0 0
    %587 = vmatmul.mubr.bf16.gmra.mrb[0].mxu0 %v372
    %v588 = vpop.f32.mrb[0].mxu0
    %v589 = vadd.f32 %v492, %v588
    %v590 = vpop.f32.mrb[0].mxu0
    %v591 = vpop.f32.mrb[0].mxu0
    %v592 = vadd.f32 %v495, %v591
    %v593 = vpop.f32.mrb[0].mxu0
    %594 = vmatprep.mubr.bf16.mxu0 0
    %595 = vmatmul.mubr.bf16.gmra.mrb[0].mxu0 %v373
    %v596 = vpop.f32.mrb[0].mxu0
    %v597 = vadd.f32 %v500, %v596
    %v598 = vpop.f32.mrb[0].mxu0
    %v599 = vpop.f32.mrb[0].mxu0
    %v600 = vadd.f32 %v503, %v599
    %v601 = vpop.f32.mrb[0].mxu0
    %602 = vdwg.mxu0
    %v603 = vld [vmem:[#allocation11] sm:$0x1]
    %v605 = vlaneseq
    %v606 = vshrl.u32 %v605, 7
    %v607 = vsub.s32 0, %v606
    %v608 = vrot.slane %v603, %v607
    %v610 = vadd.f32 %v589, %v608
    %v611 = vadd.f32 %v592, %v608
    %v612 = vadd.f32 %v597, %v608
    %v613 = vadd.f32 %v600, %v608
    %v614 = vpack.c.bf16 %v612, %v610
    %v615 = vld [vmem:[%s13] sm:$0xf]
    %v616 = vld [vmem:[%s13 + $0x4] sm:$0xf]
    %v617 = vld [vmem:[%s13 + $0x8] sm:$0xf]
    %v618 = vld [vmem:[%s13 + $0xc] sm:$0xf]
    %v619 = vld [vmem:[%s13 + $0x10] sm:$0xf]
    %v620 = vld [vmem:[%s13 + $0x14] sm:$0xf]
    %v621 = vld [vmem:[%s13 + $0x18] sm:$0xf]
    %v622 = vld [vmem:[%s13 + $0x1c] sm:$0xf]
    %v623 = vld [vmem:[%s13 + $0x20] sm:$0xf]
    %v624 = vld [vmem:[%s13 + $0x24] sm:$0xf]
    %v625 = vld [vmem:[%s13 + $0x28] sm:$0xf]
    %v626 = vld [vmem:[%s13 + $0x2c] sm:$0xf]
    %v627 = vld [vmem:[%s13 + $0x30] sm:$0xf]
    %v628 = vld [vmem:[%s13 + $0x34] sm:$0xf]
    %v629 = vld [vmem:[%s13 + $0x38] sm:$0xf]
    %v630 = vld [vmem:[%s13 + $0x3c] sm:$0xf]
    %v631 = vpack.c.bf16 %v613, %v611
    %s632 = scalar_lea.vmem %s13, 64
    %v633 = vld [vmem:[%s632] sm:$0xf]
    %v634 = vld [vmem:[%s632 + $0x4] sm:$0xf]
    %v635 = vld [vmem:[%s632 + $0x8] sm:$0xf]
    %v636 = vld [vmem:[%s632 + $0xc] sm:$0xf]
    %v637 = vld [vmem:[%s632 + $0x10] sm:$0xf]
    %v638 = vld [vmem:[%s632 + $0x14] sm:$0xf]
    %v639 = vld [vmem:[%s632 + $0x18] sm:$0xf]
    %v640 = vld [vmem:[%s632 + $0x1c] sm:$0xf]
    %v641 = vld [vmem:[%s632 + $0x20] sm:$0xf]
    %v642 = vld [vmem:[%s632 + $0x24] sm:$0xf]
    %v643 = vld [vmem:[%s632 + $0x28] sm:$0xf]
    %v644 = vld [vmem:[%s632 + $0x2c] sm:$0xf]
    %v645 = vld [vmem:[%s632 + $0x30] sm:$0xf]
    %v646 = vld [vmem:[%s632 + $0x34] sm:$0xf]
    %v647 = vld [vmem:[%s632 + $0x38] sm:$0xf]
    %v648 = vld [vmem:[%s632 + $0x3c] sm:$0xf]
    %v665 = vunpack.c.l.b16 %v633
    %v666 = vunpack.c.l.b16 %v634
    %v667 = vunpack.c.l.b16 %v635
    %v668 = vunpack.c.l.b16 %v636
    %v669 = vunpack.c.l.b16 %v637
    %v670 = vunpack.c.l.b16 %v638
    %v671 = vunpack.c.l.b16 %v639
    %v672 = vunpack.c.l.b16 %v640
    %v673 = vunpack.c.l.b16 %v641
    %v674 = vunpack.c.l.b16 %v642
    %v675 = vunpack.c.l.b16 %v643
    %v676 = vunpack.c.l.b16 %v644
    %v677 = vunpack.c.l.b16 %v645
    %v678 = vunpack.c.l.b16 %v646
    %v679 = vunpack.c.l.b16 %v647
    %v680 = vunpack.c.l.b16 %v648
    %v681 = vpack.c.b16 %v666, %v665
    %v682 = vpack.c.b16 %v668, %v667
    %v683 = vpack.c.b16 %v670, %v669
    %v684 = vpack.c.b16 %v672, %v671
    %v685 = vpack.c.b16 %v674, %v673
    %v686 = vpack.c.b16 %v676, %v675
    %v687 = vpack.c.b16 %v678, %v677
    %v688 = vpack.c.b16 %v680, %v679
    %697 = vmatprep.subr.bf16.mxu0 0
    %698 = vmatpush1.bf16.msra.mxu0 %v681
    %699 = vmatprep.subr.bf16.mxu0 0
    %700 = vmatpush1.bf16.msra.mxu0 %v682
    %701 = vmatprep.subr.bf16.mxu0 0
    %702 = vmatpush1.bf16.msra.mxu0 %v683
    %703 = vmatprep.subr.bf16.mxu0 0
    %704 = vmatpush1.bf16.msra.mxu0 %v684
    %705 = vmatprep.subr.bf16.mxu0 0
    %706 = vmatpush1.bf16.msra.mxu0 %v685
    %707 = vmatprep.subr.bf16.mxu0 0
    %708 = vmatpush1.bf16.msra.mxu0 %v686
    %709 = vmatprep.subr.bf16.mxu0 0
    %710 = vmatpush1.bf16.msra.mxu0 %v687
    %711 = vmatprep.subr.bf16.mxu0 0
    %712 = vmatpush1.bf16.msra.mxu0 %v688
    %713 = vmatprep.subr.bf16.mxu0 0
    %714 = vmatpush1.bf16.msra.mxu0 0
    %715 = vmatprep.subr.bf16.mxu0 0
    %716 = vmatpush1.bf16.msra.mxu0 0
    %717 = vmatprep.subr.bf16.mxu0 0
    %718 = vmatpush1.bf16.msra.mxu0 0
    %719 = vmatprep.subr.bf16.mxu0 0
    %720 = vmatpush1.bf16.msra.mxu0 0
    %721 = vmatprep.subr.bf16.mxu0 0
    %722 = vmatpush1.bf16.msra.mxu0 0
    %723 = vmatprep.subr.bf16.mxu0 0
    %724 = vmatpush1.bf16.msra.mxu0 0
    %725 = vmatprep.subr.bf16.mxu0 0
    %726 = vmatpush1.bf16.msra.mxu0 0
    %727 = vmatprep.subr.bf16.mxu0 0
    %728 = vmatpush1.bf16.msra.mxu0 0
    %729 = vmatprep.mubr.bf16.mxu0 0
    %730 = vmatmul.mubr.bf16.gmra.mrb[0].mxu0 %v631
    %v731 = vpop.f32.mrb[0].mxu0
    %v732 = vadd.f32 0.0, %v731
    %v733 = vpop.f32.mrb[0].mxu0
    %v734 = vpop.f32.mrb[0].mxu0
    %v735 = vadd.f32 0.0, %v734
    %v736 = vpop.f32.mrb[0].mxu0
    %737 = vdwg.mxu0
    %v754 = vunpack.c.l.b16 %v615
    %v755 = vunpack.c.l.b16 %v616
    %v756 = vunpack.c.l.b16 %v617
    %v757 = vunpack.c.l.b16 %v618
    %v758 = vunpack.c.l.b16 %v619
    %v759 = vunpack.c.l.b16 %v620
    %v760 = vunpack.c.l.b16 %v621
    %v761 = vunpack.c.l.b16 %v622
    %v762 = vunpack.c.l.b16 %v623
    %v763 = vunpack.c.l.b16 %v624
    %v764 = vunpack.c.l.b16 %v625
    %v765 = vunpack.c.l.b16 %v626
    %v766 = vunpack.c.l.b16 %v627
    %v767 = vunpack.c.l.b16 %v628
    %v768 = vunpack.c.l.b16 %v629
    %v769 = vunpack.c.l.b16 %v630
    %v770 = vpack.c.b16 %v755, %v754
    %v771 = vpack.c.b16 %v757, %v756
    %v772 = vpack.c.b16 %v759, %v758
    %v773 = vpack.c.b16 %v761, %v760
    %v774 = vpack.c.b16 %v763, %v762
    %v775 = vpack.c.b16 %v765, %v764
    %v776 = vpack.c.b16 %v767, %v766
    %v777 = vpack.c.b16 %v769, %v768
    %786 = vmatprep.subr.bf16.mxu0 0
    %787 = vmatpush1.bf16.msra.mxu0 %v770
    %788 = vmatprep.subr.bf16.mxu0 0
    %789 = vmatpush1.bf16.msra.mxu0 %v771
    %790 = vmatprep.subr.bf16.mxu0 0
    %791 = vmatpush1.bf16.msra.mxu0 %v772
    %792 = vmatprep.subr.bf16.mxu0 0
    %793 = vmatpush1.bf16.msra.mxu0 %v773
    %794 = vmatprep.subr.bf16.mxu0 0
    %795 = vmatpush1.bf16.msra.mxu0 %v774
    %796 = vmatprep.subr.bf16.mxu0 0
    %797 = vmatpush1.bf16.msra.mxu0 %v775
    %798 = vmatprep.subr.bf16.mxu0 0
    %799 = vmatpush1.bf16.msra.mxu0 %v776
    %800 = vmatprep.subr.bf16.mxu0 0
    %801 = vmatpush1.bf16.msra.mxu0 %v777
    %802 = vmatprep.subr.bf16.mxu0 0
    %803 = vmatpush1.bf16.msra.mxu0 0
    %804 = vmatprep.subr.bf16.mxu0 0
    %805 = vmatpush1.bf16.msra.mxu0 0
    %806 = vmatprep.subr.bf16.mxu0 0
    %807 = vmatpush1.bf16.msra.mxu0 0
    %808 = vmatprep.subr.bf16.mxu0 0
    %809 = vmatpush1.bf16.msra.mxu0 0
    %810 = vmatprep.subr.bf16.mxu0 0
    %811 = vmatpush1.bf16.msra.mxu0 0
    %812 = vmatprep.subr.bf16.mxu0 0
    %813 = vmatpush1.bf16.msra.mxu0 0
    %814 = vmatprep.subr.bf16.mxu0 0
    %815 = vmatpush1.bf16.msra.mxu0 0
    %816 = vmatprep.subr.bf16.mxu0 0
    %817 = vmatpush1.bf16.msra.mxu0 0
    %818 = vmatprep.mubr.bf16.mxu0 0
    %819 = vmatmul.mubr.bf16.gmra.mrb[0].mxu0 %v614
    %v820 = vpop.f32.mrb[0].mxu0
    %v821 = vadd.f32 %v732, %v820
    %v822 = vpop.f32.mrb[0].mxu0
    %v823 = vpop.f32.mrb[0].mxu0
    %v824 = vadd.f32 %v735, %v823
    %v825 = vpop.f32.mrb[0].mxu0
    %826 = vdwg.mxu0
    %v827 = vld [vmem:[#allocation17] sm:$0x1]
    %v829 = vlaneseq
    %v830 = vshrl.u32 %v829, 7
    %v831 = vsub.s32 0, %v830
    %v832 = vrot.slane %v827, %v831
    %v834 = vadd.f32 %v821, %v832
    %v835 = vadd.f32 %v824, %v832
    %v836 = vpack.c.bf16 %v835, %v834
    %v837 = vld [vmem:[#allocation19] sm:$0xf]
    %v838 = vld [vmem:[#allocation19 + $0x4] sm:$0xf]
    %v839 = vld [vmem:[#allocation19 + $0x8] sm:$0xf]
    %v840 = vld [vmem:[#allocation19 + $0xc] sm:$0xf]
    %v841 = vld [vmem:[#allocation19 + $0x10] sm:$0xf]
    %v842 = vld [vmem:[#allocation19 + $0x14] sm:$0xf]
    %v843 = vld [vmem:[#allocation19 + $0x18] sm:$0xf]
    %v844 = vld [vmem:[#allocation19 + $0x1c] sm:$0xf]
    %v845 = vld [vmem:[#allocation19 + $0x20] sm:$0xf]
    %v846 = vld [vmem:[#allocation19 + $0x24] sm:$0xf]
    %v847 = vld [vmem:[#allocation19 + $0x28] sm:$0xf]
    %v848 = vld [vmem:[#allocation19 + $0x2c] sm:$0xf]
    %v849 = vld [vmem:[#allocation19 + $0x30] sm:$0xf]
    %v850 = vld [vmem:[#allocation19 + $0x34] sm:$0xf]
    %v851 = vld [vmem:[#allocation19 + $0x38] sm:$0xf]
    %v852 = vld [vmem:[#allocation19 + $0x3c] sm:$0xf]
    %v853 = vld [vmem:[#allocation20] sm:$0x1]
    %v855 = vlaneseq
    %v856 = vshrl.u32 %v855, 7
    %v857 = vsub.s32 0, %v856
    %v858 = vrot.slane %v853, %v857
    %v876 = vunpack.c.l.b16 %v837
    %v877 = vunpack.c.l.b16 %v838
    %v878 = vunpack.c.l.b16 %v839
    %v879 = vunpack.c.l.b16 %v840
    %v880 = vunpack.c.l.b16 %v841
    %v881 = vunpack.c.l.b16 %v842
    %v882 = vunpack.c.l.b16 %v843
    %v883 = vunpack.c.l.b16 %v844
    %v884 = vunpack.c.l.b16 %v845
    %v885 = vunpack.c.l.b16 %v846
    %v886 = vunpack.c.l.b16 %v847
    %v887 = vunpack.c.l.b16 %v848
    %v888 = vunpack.c.l.b16 %v849
    %v889 = vunpack.c.l.b16 %v850
    %v890 = vunpack.c.l.b16 %v851
    %v891 = vunpack.c.l.b16 %v852
    %v892 = vpack.c.b16 %v877, %v876
    %v893 = vpack.c.b16 %v879, %v878
    %v894 = vpack.c.b16 %v881, %v880
    %v895 = vpack.c.b16 %v883, %v882
    %v896 = vpack.c.b16 %v885, %v884
    %v897 = vpack.c.b16 %v887, %v886
    %v898 = vpack.c.b16 %v889, %v888
    %v899 = vpack.c.b16 %v891, %v890
    %908 = vmatprep.subr.bf16.mxu0 0
    %909 = vmatpush1.bf16.msra.mxu0 %v892
    %910 = vmatprep.subr.bf16.mxu0 0
    %911 = vmatpush1.bf16.msra.mxu0 %v893
    %912 = vmatprep.subr.bf16.mxu0 0
    %913 = vmatpush1.bf16.msra.mxu0 %v894
    %914 = vmatprep.subr.bf16.mxu0 0
    %915 = vmatpush1.bf16.msra.mxu0 %v895
    %916 = vmatprep.subr.bf16.mxu0 0
    %917 = vmatpush1.bf16.msra.mxu0 %v896
    %918 = vmatprep.subr.bf16.mxu0 0
    %919 = vmatpush1.bf16.msra.mxu0 %v897
    %920 = vmatprep.subr.bf16.mxu0 0
    %921 = vmatpush1.bf16.msra.mxu0 %v898
    %922 = vmatprep.subr.bf16.mxu0 0
    %923 = vmatpush1.bf16.msra.mxu0 %v899
    %924 = vmatprep.subr.bf16.mxu0 0
    %925 = vmatpush1.bf16.msra.mxu0 0
    %926 = vmatprep.subr.bf16.mxu0 0
    %927 = vmatpush1.bf16.msra.mxu0 0
    %928 = vmatprep.subr.bf16.mxu0 0
    %929 = vmatpush1.bf16.msra.mxu0 0
    %930 = vmatprep.subr.bf16.mxu0 0
    %931 = vmatpush1.bf16.msra.mxu0 0
    %932 = vmatprep.subr.bf16.mxu0 0
    %933 = vmatpush1.bf16.msra.mxu0 0
    %934 = vmatprep.subr.bf16.mxu0 0
    %935 = vmatpush1.bf16.msra.mxu0 0
    %936 = vmatprep.subr.bf16.mxu0 0
    %937 = vmatpush1.bf16.msra.mxu0 0
    %938 = vmatprep.subr.bf16.mxu0 0
    %939 = vmatpush1.bf16.msra.mxu0 0
    %940 = vmatprep.mubr.bf16.mxu0 0
    %941 = vmatmul.mubr.bf16.gmra.mrb[0].mxu0 %v836
    %v942 = vpop.f32.mrb[0].mxu0
    %v943 = vadd.f32 %v858, %v942
    %v944 = vpop.f32.mrb[0].mxu0
    %v945 = vpop.f32.mrb[0].mxu0
    %v946 = vadd.f32 %v858, %v945
    %v947 = vpop.f32.mrb[0].mxu0
    %948 = vdwg.mxu0
    %v949 = vld [vmem:[%s17] sm:$0xf]
    %v950 = vld [vmem:[%s17 + $0x4] sm:$0xf]
    %v951 = vld [vmem:[#allocation22] sm:$0x1]
    %v953 = vlaneseq
    %v954 = vshrl.u32 %v953, 7
    %v955 = vsub.s32 0, %v954
    %v956 = vrot.slane %v951, %v955
    %v960 = vunpack.c.l.b16 %v949
    %v961 = vunpack.c.l.b16 %v950
    %v962 = vpack.c.b16 %v961, %v960
    %vm964 = vcmask 130048
    %v966 = vsel %vm964, 0, 0
    %968 = vmatprep.subr.bf16.mxu0 0
    %969 = vmatpush1.bf16.msra.mxu0 %v962
    %970 = vmatprep.subr.bf16.mxu0 0
    %971 = vmatpush1.bf16.msra.mxu0 0
    %972 = vmatprep.subr.bf16.mxu0 0
    %973 = vmatpush1.bf16.msra.mxu0 0
    %974 = vmatprep.subr.bf16.mxu0 0
    %975 = vmatpush1.bf16.msra.mxu0 0
    %976 = vmatprep.subr.bf16.mxu0 0
    %977 = vmatpush1.bf16.msra.mxu0 0
    %978 = vmatprep.subr.bf16.mxu0 0
    %979 = vmatpush1.bf16.msra.mxu0 0
    %980 = vmatprep.subr.bf16.mxu0 0
    %981 = vmatpush1.bf16.msra.mxu0 0
    %982 = vmatprep.subr.bf16.mxu0 0
    %983 = vmatpush1.bf16.msra.mxu0 0
    %984 = vmatprep.subr.bf16.mxu0 0
    %985 = vmatpush1.bf16.msra.mxu0 0
    %986 = vmatprep.subr.bf16.mxu0 0
    %987 = vmatpush1.bf16.msra.mxu0 0
    %988 = vmatprep.subr.bf16.mxu0 0
    %989 = vmatpush1.bf16.msra.mxu0 0
    %990 = vmatprep.subr.bf16.mxu0 0
    %991 = vmatpush1.bf16.msra.mxu0 0
    %992 = vmatprep.subr.bf16.mxu0 0
    %993 = vmatpush1.bf16.msra.mxu0 0
    %994 = vmatprep.subr.bf16.mxu0 0
    %995 = vmatpush1.bf16.msra.mxu0 0
    %996 = vmatprep.subr.bf16.mxu0 0
    %997 = vmatpush1.bf16.msra.mxu0 0
    %998 = vmatprep.subr.bf16.mxu0 0
    %999 = vmatpush1.bf16.msra.mxu0 0
    %1000 = vmatprep.mubr.bf16.mxu0 0
    %1001 = vmatmul.mubr.bf16.gmra.mrb[0].mxu0 %v966
    %v1002 = vpop.f32.mrb[0].mxu0
    %v1003 = vadd.f32 %v956, %v1002
    %v1004 = vpop.f32.mrb[0].mxu0
    %v1005 = vpop.f32.mrb[0].mxu0
    %v1006 = vpop.f32.mrb[0].mxu0
    %1007 = vdwg.mxu0
    %v1008 = vadd.f32 %v943, %v1003
    %v1009 = vxor.u32 %v1008, 2147483648
    %v1010 = vmul.f32 %v1009, 1.442695
    %v1011 = vpow.pop %v1010
    %v1012 = vadd.f32 %v1011, 1.0
    %v1013 = vrcp.pop %v1012
    %v1014 = vmul.f32 1.0, %v1013
    %1016 = vrot.lane.b32.xlu0 %v1003, 96
    %v1017 = vpop.permute.xlu0 %1016
    %v1019 = vmul.f32 %v1014, %v1017
    %1021 = vrot.lane.b32.xlu0 %v1019, 32
    %v1022 = vpop.permute.xlu0 %1021
    %v1024 = vadd.f32 %v943, %v1022
    %v1025 = vtanh.pop %v1024
    %v1026 = vsub.f32 1.0, %v1014
    %1028 = vrot.lane.b32.xlu0 %v1025, 112
    %v1029 = vpop.permute.xlu0 %1028
    %v1031 = vmul.f32 %v1026, %v1029
    %v1032 = vmul.f32 %v1014, 0.0
    %v1033 = vadd.f32 %v1031, %v1032
    %v1034 = vpack.c.bf16 %v1033, %v1033
    %1036 = vrot.lane.b32.xlu0 %v1034, 112
    %v1037 = vpop.permute.xlu0 %1036
    %v1039 = vsel %vm964, %v1037, 0
    %1041 = vmatprep.subr.bf16.mxu0 0
    %1042 = vmatpush1.bf16.msra.mxu0 %v962
    %1043 = vmatprep.subr.bf16.mxu0 0
    %1044 = vmatpush1.bf16.msra.mxu0 0
    %1045 = vmatprep.subr.bf16.mxu0 0
    %1046 = vmatpush1.bf16.msra.mxu0 0
    %1047 = vmatprep.subr.bf16.mxu0 0
    %1048 = vmatpush1.bf16.msra.mxu0 0
    %1049 = vmatprep.subr.bf16.mxu0 0
    %1050 = vmatpush1.bf16.msra.mxu0 0
    %1051 = vmatprep.subr.bf16.mxu0 0
    %1052 = vmatpush1.bf16.msra.mxu0 0
    %1053 = vmatprep.subr.bf16.mxu0 0
    %1054 = vmatpush1.bf16.msra.mxu0 0
    %1055 = vmatprep.subr.bf16.mxu0 0
    %1056 = vmatpush1.bf16.msra.mxu0 0
    %1057 = vmatprep.subr.bf16.mxu0 0
    %1058 = vmatpush1.bf16.msra.mxu0 0
    %1059 = vmatprep.subr.bf16.mxu0 0
    %1060 = vmatpush1.bf16.msra.mxu0 0
    %1061 = vmatprep.subr.bf16.mxu0 0
    %1062 = vmatpush1.bf16.msra.mxu0 0
    %1063 = vmatprep.subr.bf16.mxu0 0
    %1064 = vmatpush1.bf16.msra.mxu0 0
    %1065 = vmatprep.subr.bf16.mxu0 0
    %1066 = vmatpush1.bf16.msra.mxu0 0
    %1067 = vmatprep.subr.bf16.mxu0 0
    %1068 = vmatpush1.bf16.msra.mxu0 0
    %1069 = vmatprep.subr.bf16.mxu0 0
    %1070 = vmatpush1.bf16.msra.mxu0 0
    %1071 = vmatprep.subr.bf16.mxu0 0
    %1072 = vmatpush1.bf16.msra.mxu0 0
    %1073 = vmatprep.mubr.bf16.mxu0 0
    %1074 = vmatmul.mubr.bf16.gmra.mrb[0].mxu0 %v1039
    %v1075 = vpop.f32.mrb[0].mxu0
    %v1076 = vadd.f32 %v956, %v1075
    %v1077 = vpop.f32.mrb[0].mxu0
    %v1078 = vpop.f32.mrb[0].mxu0
    %v1079 = vpop.f32.mrb[0].mxu0
    %1080 = vdwg.mxu0
    %v1081 = vadd.f32 %v946, %v1076
    %v1082 = vxor.u32 %v1081, 2147483648
    %v1083 = vmul.f32 %v1082, 1.442695
    %v1084 = vpow.pop %v1083
    %v1085 = vadd.f32 %v1084, 1.0
    %v1086 = vrcp.pop %v1085
    %v1087 = vmul.f32 1.0, %v1086
    %1089 = vrot.lane.b32.xlu0 %v1076, 96
    %v1090 = vpop.permute.xlu0 %1089
    %v1092 = vmul.f32 %v1087, %v1090
    %1094 = vrot.lane.b32.xlu0 %v1092, 32
    %v1095 = vpop.permute.xlu0 %1094
    %v1097 = vadd.f32 %v946, %v1095
    %v1098 = vtanh.pop %v1097
    %v1099 = vsub.f32 1.0, %v1087
    %1101 = vrot.lane.b32.xlu0 %v1098, 112
    %v1102 = vpop.permute.xlu0 %1101
    %v1104 = vmul.f32 %v1099, %v1102
    %v1105 = vmul.f32 %v1087, %v1033
    %v1106 = vadd.f32 %v1104, %v1105
    %v1107 = vadd.f32 %v834, %v610
    %v1108 = vadd.f32 %v834, %v611
    %v1109 = vadd.f32 %v835, %v612
    %v1110 = vadd.f32 %v835, %v613
    %v1111 = vpack.c.bf16 %v1108, %v1107
    %v1112 = vpack.c.bf16 %v1110, %v1109
    %v1113 = vld [vmem:[#allocation13] sm:$0xf]
    %v1114 = vld [vmem:[#allocation13 + $0x4] sm:$0xf]
    %v1115 = vld [vmem:[#allocation13 + $0x8] sm:$0xf]
    %v1116 = vld [vmem:[#allocation13 + $0xc] sm:$0xf]
    %v1117 = vld [vmem:[#allocation13 + $0x10] sm:$0xf]
    %v1118 = vld [vmem:[#allocation13 + $0x14] sm:$0xf]
    %v1119 = vld [vmem:[#allocation13 + $0x18] sm:$0xf]
    %v1120 = vld [vmem:[#allocation13 + $0x1c] sm:$0xf]
    %v1121 = vld [vmem:[#allocation13 + $0x20] sm:$0xf]
    %v1122 = vld [vmem:[#allocation13 + $0x24] sm:$0xf]
    %v1123 = vld [vmem:[#allocation13 + $0x28] sm:$0xf]
    %v1124 = vld [vmem:[#allocation13 + $0x2c] sm:$0xf]
    %v1125 = vld [vmem:[#allocation13 + $0x30] sm:$0xf]
    %v1126 = vld [vmem:[#allocation13 + $0x34] sm:$0xf]
    %v1127 = vld [vmem:[#allocation13 + $0x38] sm:$0xf]
    %v1128 = vld [vmem:[#allocation13 + $0x3c] sm:$0xf]
    %v1129 = vld [vmem:[#allocation14] sm:$0x1]
    %v1131 = vlaneseq
    %v1132 = vshrl.u32 %v1131, 7
    %v1133 = vsub.s32 0, %v1132
    %v1134 = vrot.slane %v1129, %v1133
    %v1152 = vunpack.c.l.b16 %v1113
    %v1153 = vunpack.c.l.b16 %v1114
    %v1154 = vunpack.c.l.b16 %v1115
    %v1155 = vunpack.c.l.b16 %v1116
    %v1156 = vunpack.c.l.b16 %v1117
    %v1157 = vunpack.c.l.b16 %v1118
    %v1158 = vunpack.c.l.b16 %v1119
    %v1159 = vunpack.c.l.b16 %v1120
    %v1160 = vunpack.c.l.b16 %v1121
    %v1161 = vunpack.c.l.b16 %v1122
    %v1162 = vunpack.c.l.b16 %v1123
    %v1163 = vunpack.c.l.b16 %v1124
    %v1164 = vunpack.c.l.b16 %v1125
    %v1165 = vunpack.c.l.b16 %v1126
    %v1166 = vunpack.c.l.b16 %v1127
    %v1167 = vunpack.c.l.b16 %v1128
    %v1168 = vpack.c.b16 %v1153, %v1152
    %v1169 = vpack.c.b16 %v1155, %v1154
    %v1170 = vpack.c.b16 %v1157, %v1156
    %v1171 = vpack.c.b16 %v1159, %v1158
    %v1172 = vpack.c.b16 %v1161, %v1160
    %v1173 = vpack.c.b16 %v1163, %v1162
    %v1174 = vpack.c.b16 %v1165, %v1164
    %v1175 = vpack.c.b16 %v1167, %v1166
    %1184 = vmatprep.subr.bf16.mxu0 0
    %1185 = vmatpush1.bf16.msra.mxu0 %v1168
    %1186 = vmatprep.subr.bf16.mxu0 0
    %1187 = vmatpush1.bf16.msra.mxu0 %v1169
    %1188 = vmatprep.subr.bf16.mxu0 0
    %1189 = vmatpush1.bf16.msra.mxu0 %v1170
    %1190 = vmatprep.subr.bf16.mxu0 0
    %1191 = vmatpush1.bf16.msra.mxu0 %v1171
    %1192 = vmatprep.subr.bf16.mxu0 0
    %1193 = vmatpush1.bf16.msra.mxu0 %v1172
    %1194 = vmatprep.subr.bf16.mxu0 0
    %1195 = vmatpush1.bf16.msra.mxu0 %v1173
    %1196 = vmatprep.subr.bf16.mxu0 0
    %1197 = vmatpush1.bf16.msra.mxu0 %v1174
    %1198 = vmatprep.subr.bf16.mxu0 0
    %1199 = vmatpush1.bf16.msra.mxu0 %v1175
    %1200 = vmatprep.subr.bf16.mxu0 0
    %1201 = vmatpush1.bf16.msra.mxu0 0
    %1202 = vmatprep.subr.bf16.mxu0 0
    %1203 = vmatpush1.bf16.msra.mxu0 0
    %1204 = vmatprep.subr.bf16.mxu0 0
    %1205 = vmatpush1.bf16.msra.mxu0 0
    %1206 = vmatprep.subr.bf16.mxu0 0
    %1207 = vmatpush1.bf16.msra.mxu0 0
    %1208 = vmatprep.subr.bf16.mxu0 0
    %1209 = vmatpush1.bf16.msra.mxu0 0
    %1210 = vmatprep.subr.bf16.mxu0 0
    %1211 = vmatpush1.bf16.msra.mxu0 0
    %1212 = vmatprep.subr.bf16.mxu0 0
    %1213 = vmatpush1.bf16.msra.mxu0 0
    %1214 = vmatprep.subr.bf16.mxu0 0
    %1215 = vmatpush1.bf16.msra.mxu0 0
    %1216 = vmatprep.mubr.bf16.mxu0 0
    %1217 = vmatmul.mubr.bf16.gmra.mrb[0].mxu0 %v1111
    %v1218 = vpop.f32.mrb[0].mxu0
    %v1219 = vadd.f32 %v1134, %v1218
    %v1220 = vpop.f32.mrb[0].mxu0
    %v1221 = vpop.f32.mrb[0].mxu0
    %v1222 = vadd.f32 %v1134, %v1221
    %v1223 = vpop.f32.mrb[0].mxu0
    %1224 = vmatprep.mubr.bf16.mxu0 0
    %1225 = vmatmul.mubr.bf16.gmra.mrb[0].mxu0 %v1112
    %v1226 = vpop.f32.mrb[0].mxu0
    %v1227 = vadd.f32 %v1134, %v1226
    %v1228 = vpop.f32.mrb[0].mxu0
    %v1229 = vpop.f32.mrb[0].mxu0
    %v1230 = vadd.f32 %v1134, %v1229
    %v1231 = vpop.f32.mrb[0].mxu0
    %1232 = vdwg.mxu0
    %v1233 = vld [vmem:[%s11] sm:$0xf]
    %v1234 = vld [vmem:[%s11 + $0x4] sm:$0xf]
    %v1235 = vld [vmem:[#allocation16] sm:$0x1]
    %v1237 = vlaneseq
    %v1238 = vshrl.u32 %v1237, 7
    %v1239 = vsub.s32 0, %v1238
    %v1240 = vrot.slane %v1235, %v1239
    %v1244 = vunpack.c.l.b16 %v1233
    %v1245 = vunpack.c.l.b16 %v1234
    %v1246 = vpack.c.b16 %v1245, %v1244
    %1248 = vmatprep.subr.bf16.mxu0 0
    %1249 = vmatpush1.bf16.msra.mxu0 %v1246
    %1250 = vmatprep.subr.bf16.mxu0 0
    %1251 = vmatpush1.bf16.msra.mxu0 0
    %1252 = vmatprep.subr.bf16.mxu0 0
    %1253 = vmatpush1.bf16.msra.mxu0 0
    %1254 = vmatprep.subr.bf16.mxu0 0
    %1255 = vmatpush1.bf16.msra.mxu0 0
    %1256 = vmatprep.subr.bf16.mxu0 0
    %1257 = vmatpush1.bf16.msra.mxu0 0
    %1258 = vmatprep.subr.bf16.mxu0 0
    %1259 = vmatpush1.bf16.msra.mxu0 0
    %1260 = vmatprep.subr.bf16.mxu0 0
    %1261 = vmatpush1.bf16.msra.mxu0 0
    %1262 = vmatprep.subr.bf16.mxu0 0
    %1263 = vmatpush1.bf16.msra.mxu0 0
    %1264 = vmatprep.subr.bf16.mxu0 0
    %1265 = vmatpush1.bf16.msra.mxu0 0
    %1266 = vmatprep.subr.bf16.mxu0 0
    %1267 = vmatpush1.bf16.msra.mxu0 0
    %1268 = vmatprep.subr.bf16.mxu0 0
    %1269 = vmatpush1.bf16.msra.mxu0 0
    %1270 = vmatprep.subr.bf16.mxu0 0
    %1271 = vmatpush1.bf16.msra.mxu0 0
    %1272 = vmatprep.subr.bf16.mxu0 0
    %1273 = vmatpush1.bf16.msra.mxu0 0
    %1274 = vmatprep.subr.bf16.mxu0 0
    %1275 = vmatpush1.bf16.msra.mxu0 0
    %1276 = vmatprep.subr.bf16.mxu0 0
    %1277 = vmatpush1.bf16.msra.mxu0 0
    %1278 = vmatprep.subr.bf16.mxu0 0
    %1279 = vmatpush1.bf16.msra.mxu0 0
    %1280 = vmatprep.mubr.bf16.mxu0 0
    %1281 = vmatmul.mubr.bf16.gmra.mrb[0].mxu0 %v966
    %v1282 = vpop.f32.mrb[0].mxu0
    %v1283 = vadd.f32 %v1240, %v1282
    %v1284 = vpop.f32.mrb[0].mxu0
    %v1285 = vpop.f32.mrb[0].mxu0
    %v1286 = vpop.f32.mrb[0].mxu0
    %1287 = vdwg.mxu0
    %v1288 = vadd.f32 %v1219, %v1283
    %v1289 = vxor.u32 %v1288, 2147483648
    %v1290 = vmul.f32 %v1289, 1.442695
    %v1291 = vpow.pop %v1290
    %v1292 = vadd.f32 %v1291, 1.0
    %v1293 = vrcp.pop %v1292
    %v1294 = vmul.f32 1.0, %v1293
    %1296 = vrot.lane.b32.xlu0 %v1283, 96
    %v1297 = vpop.permute.xlu0 %1296
    %v1299 = vmul.f32 %v1294, %v1297
    %1301 = vrot.lane.b32.xlu0 %v1299, 32
    %v1302 = vpop.permute.xlu0 %1301
    %v1304 = vadd.f32 %v1219, %v1302
    %v1305 = vtanh.pop %v1304
    %v1306 = vsub.f32 1.0, %v1294
    %1308 = vrot.lane.b32.xlu0 %v1305, 112
    %v1309 = vpop.permute.xlu0 %1308
    %v1311 = vmul.f32 %v1306, %v1309
    %v1312 = vmul.f32 %v1294, 0.0
    %v1313 = vadd.f32 %v1311, %v1312
    %v1314 = vpack.c.bf16 %v1313, %v1313
    %1316 = vrot.lane.b32.xlu0 %v1314, 112
    %v1317 = vpop.permute.xlu0 %1316
    %v1319 = vsel %vm964, %v1317, 0
    %1321 = vmatprep.subr.bf16.mxu0 0
    %1322 = vmatpush1.bf16.msra.mxu0 %v1246
    %1323 = vmatprep.subr.bf16.mxu0 0
    %1324 = vmatpush1.bf16.msra.mxu0 0
    %1325 = vmatprep.subr.bf16.mxu0 0
    %1326 = vmatpush1.bf16.msra.mxu0 0
    %1327 = vmatprep.subr.bf16.mxu0 0
    %1328 = vmatpush1.bf16.msra.mxu0 0
    %1329 = vmatprep.subr.bf16.mxu0 0
    %1330 = vmatpush1.bf16.msra.mxu0 0
    %1331 = vmatprep.subr.bf16.mxu0 0
    %1332 = vmatpush1.bf16.msra.mxu0 0
    %1333 = vmatprep.subr.bf16.mxu0 0
    %1334 = vmatpush1.bf16.msra.mxu0 0
    %1335 = vmatprep.subr.bf16.mxu0 0
    %1336 = vmatpush1.bf16.msra.mxu0 0
    %1337 = vmatprep.subr.bf16.mxu0 0
    %1338 = vmatpush1.bf16.msra.mxu0 0
    %1339 = vmatprep.subr.bf16.mxu0 0
    %1340 = vmatpush1.bf16.msra.mxu0 0
    %1341 = vmatprep.subr.bf16.mxu0 0
    %1342 = vmatpush1.bf16.msra.mxu0 0
    %1343 = vmatprep.subr.bf16.mxu0 0
    %1344 = vmatpush1.bf16.msra.mxu0 0
    %1345 = vmatprep.subr.bf16.mxu0 0
    %1346 = vmatpush1.bf16.msra.mxu0 0
    %1347 = vmatprep.subr.bf16.mxu0 0
    %1348 = vmatpush1.bf16.msra.mxu0 0
    %1349 = vmatprep.subr.bf16.mxu0 0
    %1350 = vmatpush1.bf16.msra.mxu0 0
    %1351 = vmatprep.subr.bf16.mxu0 0
    %1352 = vmatpush1.bf16.msra.mxu0 0
    %1353 = vmatprep.mubr.bf16.mxu0 0
    %1354 = vmatmul.mubr.bf16.gmra.mrb[0].mxu0 %v1319
    %v1355 = vpop.f32.mrb[0].mxu0
    %v1356 = vadd.f32 %v1240, %v1355
    %v1357 = vpop.f32.mrb[0].mxu0
    %v1358 = vpop.f32.mrb[0].mxu0
    %v1359 = vpop.f32.mrb[0].mxu0
    %1360 = vdwg.mxu0
    %v1361 = vadd.f32 %v1222, %v1356
    %v1362 = vxor.u32 %v1361, 2147483648
    %v1363 = vmul.f32 %v1362, 1.442695
    %v1364 = vpow.pop %v1363
    %v1365 = vadd.f32 %v1364, 1.0
    %v1366 = vrcp.pop %v1365
    %v1367 = vmul.f32 1.0, %v1366
    %1369 = vrot.lane.b32.xlu0 %v1356, 96
    %v1370 = vpop.permute.xlu0 %1369
    %v1372 = vmul.f32 %v1367, %v1370
    %1374 = vrot.lane.b32.xlu0 %v1372, 32
    %v1375 = vpop.permute.xlu0 %1374
    %v1377 = vadd.f32 %v1222, %v1375
    %v1378 = vtanh.pop %v1377
    %v1379 = vsub.f32 1.0, %v1367
    %1381 = vrot.lane.b32.xlu0 %v1378, 112
    %v1382 = vpop.permute.xlu0 %1381
    %v1384 = vmul.f32 %v1379, %v1382
    %v1385 = vmul.f32 %v1367, %v1313
    %v1386 = vadd.f32 %v1384, %v1385
    %v1387 = vpack.c.bf16 %v1386, %v1386
    %1389 = vrot.lane.b32.xlu0 %v1387, 112
    %v1390 = vpop.permute.xlu0 %1389
    %v1392 = vsel %vm964, %v1390, 0
    %1394 = vmatprep.subr.bf16.mxu0 0
    %1395 = vmatpush1.bf16.msra.mxu0 %v1246
    %1396 = vmatprep.subr.bf16.mxu0 0
    %1397 = vmatpush1.bf16.msra.mxu0 0
    %1398 = vmatprep.subr.bf16.mxu0 0
    %1399 = vmatpush1.bf16.msra.mxu0 0
    %1400 = vmatprep.subr.bf16.mxu0 0
    %1401 = vmatpush1.bf16.msra.mxu0 0
    %1402 = vmatprep.subr.bf16.mxu0 0
    %1403 = vmatpush1.bf16.msra.mxu0 0
    %1404 = vmatprep.subr.bf16.mxu0 0
    %1405 = vmatpush1.bf16.msra.mxu0 0
    %1406 = vmatprep.subr.bf16.mxu0 0
    %1407 = vmatpush1.bf16.msra.mxu0 0
    %1408 = vmatprep.subr.bf16.mxu0 0
    %1409 = vmatpush1.bf16.msra.mxu0 0
    %1410 = vmatprep.subr.bf16.mxu0 0
    %1411 = vmatpush1.bf16.msra.mxu0 0
    %1412 = vmatprep.subr.bf16.mxu0 0
    %1413 = vmatpush1.bf16.msra.mxu0 0
    %1414 = vmatprep.subr.bf16.mxu0 0
    %1415 = vmatpush1.bf16.msra.mxu0 0
    %1416 = vmatprep.subr.bf16.mxu0 0
    %1417 = vmatpush1.bf16.msra.mxu0 0
    %1418 = vmatprep.subr.bf16.mxu0 0
    %1419 = vmatpush1.bf16.msra.mxu0 0
    %1420 = vmatprep.subr.bf16.mxu0 0
    %1421 = vmatpush1.bf16.msra.mxu0 0
    %1422 = vmatprep.subr.bf16.mxu0 0
    %1423 = vmatpush1.bf16.msra.mxu0 0
    %1424 = vmatprep.subr.bf16.mxu0 0
    %1425 = vmatpush1.bf16.msra.mxu0 0
    %1426 = vmatprep.mubr.bf16.mxu0 0
    %1427 = vmatmul.mubr.bf16.gmra.mrb[0].mxu0 %v1392
    %v1428 = vpop.f32.mrb[0].mxu0
    %v1429 = vadd.f32 %v1240, %v1428
    %v1430 = vpop.f32.mrb[0].mxu0
    %v1431 = vpop.f32.mrb[0].mxu0
    %v1432 = vpop.f32.mrb[0].mxu0
    %1433 = vdwg.mxu0
    %v1434 = vadd.f32 %v1227, %v1429
    %v1435 = vxor.u32 %v1434, 2147483648
    %v1436 = vmul.f32 %v1435, 1.442695
    %v1437 = vpow.pop %v1436
    %v1438 = vadd.f32 %v1437, 1.0
    %v1439 = vrcp.pop %v1438
    %v1440 = vmul.f32 1.0, %v1439
    %1442 = vrot.lane.b32.xlu0 %v1429, 96
    %v1443 = vpop.permute.xlu0 %1442
    %v1445 = vmul.f32 %v1440, %v1443
    %1447 = vrot.lane.b32.xlu0 %v1445, 32
    %v1448 = vpop.permute.xlu0 %1447
    %v1450 = vadd.f32 %v1227, %v1448
    %v1451 = vtanh.pop %v1450
    %v1452 = vsub.f32 1.0, %v1440
    %1454 = vrot.lane.b32.xlu0 %v1451, 112
    %v1455 = vpop.permute.xlu0 %1454
    %v1457 = vmul.f32 %v1452, %v1455
    %v1458 = vmul.f32 %v1440, %v1386
    %v1459 = vadd.f32 %v1457, %v1458
    %v1460 = vpack.c.bf16 %v1459, %v1459
    %1462 = vrot.lane.b32.xlu0 %v1460, 112
    %v1463 = vpop.permute.xlu0 %1462
    %v1465 = vsel %vm964, %v1463, 0
    %1467 = vmatprep.subr.bf16.mxu0 0
    %1468 = vmatpush1.bf16.msra.mxu0 %v1246
    %1469 = vmatprep.subr.bf16.mxu0 0
    %1470 = vmatpush1.bf16.msra.mxu0 0
    %1471 = vmatprep.subr.bf16.mxu0 0
    %1472 = vmatpush1.bf16.msra.mxu0 0
    %1473 = vmatprep.subr.bf16.mxu0 0
    %1474 = vmatpush1.bf16.msra.mxu0 0
    %1475 = vmatprep.subr.bf16.mxu0 0
    %1476 = vmatpush1.bf16.msra.mxu0 0
    %1477 = vmatprep.subr.bf16.mxu0 0
    %1478 = vmatpush1.bf16.msra.mxu0 0
    %1479 = vmatprep.subr.bf16.mxu0 0
    %1480 = vmatpush1.bf16.msra.mxu0 0
    %1481 = vmatprep.subr.bf16.mxu0 0
    %1482 = vmatpush1.bf16.msra.mxu0 0
    %1483 = vmatprep.subr.bf16.mxu0 0
    %1484 = vmatpush1.bf16.msra.mxu0 0
    %1485 = vmatprep.subr.bf16.mxu0 0
    %1486 = vmatpush1.bf16.msra.mxu0 0
    %1487 = vmatprep.subr.bf16.mxu0 0
    %1488 = vmatpush1.bf16.msra.mxu0 0
    %1489 = vmatprep.subr.bf16.mxu0 0
    %1490 = vmatpush1.bf16.msra.mxu0 0
    %1491 = vmatprep.subr.bf16.mxu0 0
    %1492 = vmatpush1.bf16.msra.mxu0 0
    %1493 = vmatprep.subr.bf16.mxu0 0
    %1494 = vmatpush1.bf16.msra.mxu0 0
    %1495 = vmatprep.subr.bf16.mxu0 0
    %1496 = vmatpush1.bf16.msra.mxu0 0
    %1497 = vmatprep.subr.bf16.mxu0 0
    %1498 = vmatpush1.bf16.msra.mxu0 0
    %1499 = vmatprep.mubr.bf16.mxu0 0
    %1500 = vmatmul.mubr.bf16.gmra.mrb[0].mxu0 %v1465
    %v1501 = vpop.f32.mrb[0].mxu0
    %v1502 = vadd.f32 %v1240, %v1501
    %v1503 = vpop.f32.mrb[0].mxu0
    %v1504 = vpop.f32.mrb[0].mxu0
    %v1505 = vpop.f32.mrb[0].mxu0
    %1506 = vdwg.mxu0
    %v1507 = vadd.f32 %v1230, %v1502
    %v1508 = vxor.u32 %v1507, 2147483648
    %v1509 = vmul.f32 %v1508, 1.442695
    %v1510 = vpow.pop %v1509
    %v1511 = vadd.f32 %v1510, 1.0
    %v1512 = vrcp.pop %v1511
    %v1513 = vmul.f32 1.0, %v1512
    %1515 = vrot.lane.b32.xlu0 %v1502, 96
    %v1516 = vpop.permute.xlu0 %1515
    %v1518 = vmul.f32 %v1513, %v1516
    %1520 = vrot.lane.b32.xlu0 %v1518, 32
    %v1521 = vpop.permute.xlu0 %1520
    %v1523 = vadd.f32 %v1230, %v1521
    %v1524 = vtanh.pop %v1523
    %v1525 = vsub.f32 1.0, %v1513
    %1527 = vrot.lane.b32.xlu0 %v1524, 112
    %v1528 = vpop.permute.xlu0 %1527
    %v1530 = vmul.f32 %v1525, %v1528
    %v1531 = vmul.f32 %v1513, %v1459
    %v1532 = vadd.f32 %v1530, %v1531
    %v1533 = vadd.f32 %v834, %v364
    %v1534 = vadd.f32 %v834, %v365
    %v1535 = vadd.f32 %v834, %v366
    %v1536 = vadd.f32 %v834, %v367
    %v1537 = vadd.f32 %v835, %v368
    %v1538 = vadd.f32 %v835, %v369
    %v1539 = vadd.f32 %v835, %v370
    %v1540 = vadd.f32 %v835, %v371
    %v1541 = vpack.c.bf16 %v1534, %v1533
    %v1542 = vpack.c.bf16 %v1536, %v1535
    %v1543 = vpack.c.bf16 %v1538, %v1537
    %v1544 = vpack.c.bf16 %v1540, %v1539
    %v1545 = vld [vmem:[#allocation5] sm:$0xf]
    %v1546 = vld [vmem:[#allocation5 + $0x4] sm:$0xf]
    %v1547 = vld [vmem:[#allocation5 + $0x8] sm:$0xf]
    %v1548 = vld [vmem:[#allocation5 + $0xc] sm:$0xf]
    %v1549 = vld [vmem:[#allocation5 + $0x10] sm:$0xf]
    %v1550 = vld [vmem:[#allocation5 + $0x14] sm:$0xf]
    %v1551 = vld [vmem:[#allocation5 + $0x18] sm:$0xf]
    %v1552 = vld [vmem:[#allocation5 + $0x1c] sm:$0xf]
    %v1553 = vld [vmem:[#allocation5 + $0x20] sm:$0xf]
    %v1554 = vld [vmem:[#allocation5 + $0x24] sm:$0xf]
    %v1555 = vld [vmem:[#allocation5 + $0x28] sm:$0xf]
    %v1556 = vld [vmem:[#allocation5 + $0x2c] sm:$0xf]
    %v1557 = vld [vmem:[#allocation5 + $0x30] sm:$0xf]
    %v1558 = vld [vmem:[#allocation5 + $0x34] sm:$0xf]
    %v1559 = vld [vmem:[#allocation5 + $0x38] sm:$0xf]
    %v1560 = vld [vmem:[#allocation5 + $0x3c] sm:$0xf]
    %v1561 = vld [vmem:[#allocation7] sm:$0x1]
    %v1563 = vlaneseq
    %v1564 = vshrl.u32 %v1563, 7
    %v1565 = vsub.s32 0, %v1564
    %v1566 = vrot.slane %v1561, %v1565
    %v1584 = vunpack.c.l.b16 %v1545
    %v1585 = vunpack.c.l.b16 %v1546
    %v1586 = vunpack.c.l.b16 %v1547
    %v1587 = vunpack.c.l.b16 %v1548
    %v1588 = vunpack.c.l.b16 %v1549
    %v1589 = vunpack.c.l.b16 %v1550
    %v1590 = vunpack.c.l.b16 %v1551
    %v1591 = vunpack.c.l.b16 %v1552
    %v1592 = vunpack.c.l.b16 %v1553
    %v1593 = vunpack.c.l.b16 %v1554
    %v1594 = vunpack.c.l.b16 %v1555
    %v1595 = vunpack.c.l.b16 %v1556
    %v1596 = vunpack.c.l.b16 %v1557
    %v1597 = vunpack.c.l.b16 %v1558
    %v1598 = vunpack.c.l.b16 %v1559
    %v1599 = vunpack.c.l.b16 %v1560
    %v1600 = vpack.c.b16 %v1585, %v1584
    %v1601 = vpack.c.b16 %v1587, %v1586
    %v1602 = vpack.c.b16 %v1589, %v1588
    %v1603 = vpack.c.b16 %v1591, %v1590
    %v1604 = vpack.c.b16 %v1593, %v1592
    %v1605 = vpack.c.b16 %v1595, %v1594
    %v1606 = vpack.c.b16 %v1597, %v1596
    %v1607 = vpack.c.b16 %v1599, %v1598
    %1616 = vmatprep.subr.bf16.mxu0 0
    %1617 = vmatpush1.bf16.msra.mxu0 %v1600
    %1618 = vmatprep.subr.bf16.mxu0 0
    %1619 = vmatpush1.bf16.msra.mxu0 %v1601
    %1620 = vmatprep.subr.bf16.mxu0 0
    %1621 = vmatpush1.bf16.msra.mxu0 %v1602
    %1622 = vmatprep.subr.bf16.mxu0 0
    %1623 = vmatpush1.bf16.msra.mxu0 %v1603
    %1624 = vmatprep.subr.bf16.mxu0 0
    %1625 = vmatpush1.bf16.msra.mxu0 %v1604
    %1626 = vmatprep.subr.bf16.mxu0 0
    %1627 = vmatpush1.bf16.msra.mxu0 %v1605
    %1628 = vmatprep.subr.bf16.mxu0 0
    %1629 = vmatpush1.bf16.msra.mxu0 %v1606
    %1630 = vmatprep.subr.bf16.mxu0 0
    %1631 = vmatpush1.bf16.msra.mxu0 %v1607
    %1632 = vmatprep.subr.bf16.mxu0 0
    %1633 = vmatpush1.bf16.msra.mxu0 0
    %1634 = vmatprep.subr.bf16.mxu0 0
    %1635 = vmatpush1.bf16.msra.mxu0 0
    %1636 = vmatprep.subr.bf16.mxu0 0
    %1637 = vmatpush1.bf16.msra.mxu0 0
    %1638 = vmatprep.subr.bf16.mxu0 0
    %1639 = vmatpush1.bf16.msra.mxu0 0
    %1640 = vmatprep.subr.bf16.mxu0 0
    %1641 = vmatpush1.bf16.msra.mxu0 0
    %1642 = vmatprep.subr.bf16.mxu0 0
    %1643 = vmatpush1.bf16.msra.mxu0 0
    %1644 = vmatprep.subr.bf16.mxu0 0
    %1645 = vmatpush1.bf16.msra.mxu0 0
    %1646 = vmatprep.subr.bf16.mxu0 0
    %1647 = vmatpush1.bf16.msra.mxu0 0
    %1648 = vmatprep.mubr.bf16.mxu0 0
    %1649 = vmatmul.mubr.bf16.gmra.mrb[0].mxu0 %v1541
    %v1650 = vpop.f32.mrb[0].mxu0
    %v1651 = vadd.f32 %v1566, %v1650
    %v1652 = vpop.f32.mrb[0].mxu0
    %v1653 = vpop.f32.mrb[0].mxu0
    %v1654 = vadd.f32 %v1566, %v1653
    %v1655 = vpop.f32.mrb[0].mxu0
    %1656 = vmatprep.mubr.bf16.mxu0 0
    %1657 = vmatmul.mubr.bf16.gmra.mrb[0].mxu0 %v1542
    %v1658 = vpop.f32.mrb[0].mxu0
    %v1659 = vadd.f32 %v1566, %v1658
    %v1660 = vpop.f32.mrb[0].mxu0
    %v1661 = vpop.f32.mrb[0].mxu0
    %v1662 = vadd.f32 %v1566, %v1661
    %v1663 = vpop.f32.mrb[0].mxu0
    %1664 = vmatprep.mubr.bf16.mxu0 0
    %1665 = vmatmul.mubr.bf16.gmra.mrb[0].mxu0 %v1543
    %v1666 = vpop.f32.mrb[0].mxu0
    %v1667 = vadd.f32 %v1566, %v1666
    %v1668 = vpop.f32.mrb[0].mxu0
    %v1669 = vpop.f32.mrb[0].mxu0
    %v1670 = vadd.f32 %v1566, %v1669
    %v1671 = vpop.f32.mrb[0].mxu0
    %1672 = vmatprep.mubr.bf16.mxu0 0
    %1673 = vmatmul.mubr.bf16.gmra.mrb[0].mxu0 %v1544
    %v1674 = vpop.f32.mrb[0].mxu0
    %v1675 = vadd.f32 %v1566, %v1674
    %v1676 = vpop.f32.mrb[0].mxu0
    %v1677 = vpop.f32.mrb[0].mxu0
    %v1678 = vadd.f32 %v1566, %v1677
    %v1679 = vpop.f32.mrb[0].mxu0
    %1680 = vdwg.mxu0
    %v1681 = vld [vmem:[#allocation8] sm:$0xf]
    %v1682 = vld [vmem:[#allocation8 + $0x4] sm:$0xf]
    %v1683 = vld [vmem:[#allocation10] sm:$0x1]
    %v1685 = vlaneseq
    %v1686 = vshrl.u32 %v1685, 7
    %v1687 = vsub.s32 0, %v1686
    %v1688 = vrot.slane %v1683, %v1687
    %v1692 = vunpack.c.l.b16 %v1681
    %v1693 = vunpack.c.l.b16 %v1682
    %v1694 = vpack.c.b16 %v1693, %v1692
    %1696 = vmatprep.subr.bf16.mxu0 0
    %1697 = vmatpush1.bf16.msra.mxu0 %v1694
    %1698 = vmatprep.subr.bf16.mxu0 0
    %1699 = vmatpush1.bf16.msra.mxu0 0
    %1700 = vmatprep.subr.bf16.mxu0 0
    %1701 = vmatpush1.bf16.msra.mxu0 0
    %1702 = vmatprep.subr.bf16.mxu0 0
    %1703 = vmatpush1.bf16.msra.mxu0 0
    %1704 = vmatprep.subr.bf16.mxu0 0
    %1705 = vmatpush1.bf16.msra.mxu0 0
    %1706 = vmatprep.subr.bf16.mxu0 0
    %1707 = vmatpush1.bf16.msra.mxu0 0
    %1708 = vmatprep.subr.bf16.mxu0 0
    %1709 = vmatpush1.bf16.msra.mxu0 0
    %1710 = vmatprep.subr.bf16.mxu0 0
    %1711 = vmatpush1.bf16.msra.mxu0 0
    %1712 = vmatprep.subr.bf16.mxu0 0
    %1713 = vmatpush1.bf16.msra.mxu0 0
    %1714 = vmatprep.subr.bf16.mxu0 0
    %1715 = vmatpush1.bf16.msra.mxu0 0
    %1716 = vmatprep.subr.bf16.mxu0 0
    %1717 = vmatpush1.bf16.msra.mxu0 0
    %1718 = vmatprep.subr.bf16.mxu0 0
    %1719 = vmatpush1.bf16.msra.mxu0 0
    %1720 = vmatprep.subr.bf16.mxu0 0
    %1721 = vmatpush1.bf16.msra.mxu0 0
    %1722 = vmatprep.subr.bf16.mxu0 0
    %1723 = vmatpush1.bf16.msra.mxu0 0
    %1724 = vmatprep.subr.bf16.mxu0 0
    %1725 = vmatpush1.bf16.msra.mxu0 0
    %1726 = vmatprep.subr.bf16.mxu0 0
    %1727 = vmatpush1.bf16.msra.mxu0 0
    %1728 = vmatprep.mubr.bf16.mxu0 0
    %1729 = vmatmul.mubr.bf16.gmra.mrb[0].mxu0 %v966
    %v1730 = vpop.f32.mrb[0].mxu0
    %v1731 = vadd.f32 %v1688, %v1730
    %v1732 = vpop.f32.mrb[0].mxu0
    %v1733 = vpop.f32.mrb[0].mxu0
    %v1734 = vpop.f32.mrb[0].mxu0
    %1735 = vdwg.mxu0
    %v1736 = vadd.f32 %v1651, %v1731
    %v1737 = vxor.u32 %v1736, 2147483648
    %v1738 = vmul.f32 %v1737, 1.442695
    %v1739 = vpow.pop %v1738
    %v1740 = vadd.f32 %v1739, 1.0
    %v1741 = vrcp.pop %v1740
    %v1742 = vmul.f32 1.0, %v1741
    %1744 = vrot.lane.b32.xlu0 %v1731, 96
    %v1745 = vpop.permute.xlu0 %1744
    %v1747 = vmul.f32 %v1742, %v1745
    %1749 = vrot.lane.b32.xlu0 %v1747, 32
    %v1750 = vpop.permute.xlu0 %1749
    %v1752 = vadd.f32 %v1651, %v1750
    %v1753 = vtanh.pop %v1752
    %v1754 = vsub.f32 1.0, %v1742
    %1756 = vrot.lane.b32.xlu0 %v1753, 112
    %v1757 = vpop.permute.xlu0 %1756
    %v1759 = vmul.f32 %v1754, %v1757
    %v1760 = vmul.f32 %v1742, 0.0
    %v1761 = vadd.f32 %v1759, %v1760
    %v1762 = vpack.c.bf16 %v1761, %v1761
    %1764 = vrot.lane.b32.xlu0 %v1762, 112
    %v1765 = vpop.permute.xlu0 %1764
    %v1767 = vsel %vm964, %v1765, 0
    %1769 = vmatprep.subr.bf16.mxu0 0
    %1770 = vmatpush1.bf16.msra.mxu0 %v1694
    %1771 = vmatprep.subr.bf16.mxu0 0
    %1772 = vmatpush1.bf16.msra.mxu0 0
    %1773 = vmatprep.subr.bf16.mxu0 0
    %1774 = vmatpush1.bf16.msra.mxu0 0
    %1775 = vmatprep.subr.bf16.mxu0 0
    %1776 = vmatpush1.bf16.msra.mxu0 0
    %1777 = vmatprep.subr.bf16.mxu0 0
    %1778 = vmatpush1.bf16.msra.mxu0 0
    %1779 = vmatprep.subr.bf16.mxu0 0
    %1780 = vmatpush1.bf16.msra.mxu0 0
    %1781 = vmatprep.subr.bf16.mxu0 0
    %1782 = vmatpush1.bf16.msra.mxu0 0
    %1783 = vmatprep.subr.bf16.mxu0 0
    %1784 = vmatpush1.bf16.msra.mxu0 0
    %1785 = vmatprep.subr.bf16.mxu0 0
    %1786 = vmatpush1.bf16.msra.mxu0 0
    %1787 = vmatprep.subr.bf16.mxu0 0
    %1788 = vmatpush1.bf16.msra.mxu0 0
    %1789 = vmatprep.subr.bf16.mxu0 0
    %1790 = vmatpush1.bf16.msra.mxu0 0
    %1791 = vmatprep.subr.bf16.mxu0 0
    %1792 = vmatpush1.bf16.msra.mxu0 0
    %1793 = vmatprep.subr.bf16.mxu0 0
    %1794 = vmatpush1.bf16.msra.mxu0 0
    %1795 = vmatprep.subr.bf16.mxu0 0
    %1796 = vmatpush1.bf16.msra.mxu0 0
    %1797 = vmatprep.subr.bf16.mxu0 0
    %1798 = vmatpush1.bf16.msra.mxu0 0
    %1799 = vmatprep.subr.bf16.mxu0 0
    %1800 = vmatpush1.bf16.msra.mxu0 0
    %1801 = vmatprep.mubr.bf16.mxu0 0
    %1802 = vmatmul.mubr.bf16.gmra.mrb[0].mxu0 %v1767
    %v1803 = vpop.f32.mrb[0].mxu0
    %v1804 = vadd.f32 %v1688, %v1803
    %v1805 = vpop.f32.mrb[0].mxu0
    %v1806 = vpop.f32.mrb[0].mxu0
    %v1807 = vpop.f32.mrb[0].mxu0
    %1808 = vdwg.mxu0
    %v1809 = vadd.f32 %v1654, %v1804
    %v1810 = vxor.u32 %v1809, 2147483648
    %v1811 = vmul.f32 %v1810, 1.442695
    %v1812 = vpow.pop %v1811
    %v1813 = vadd.f32 %v1812, 1.0
    %v1814 = vrcp.pop %v1813
    %v1815 = vmul.f32 1.0, %v1814
    %1817 = vrot.lane.b32.xlu0 %v1804, 96
    %v1818 = vpop.permute.xlu0 %1817
    %v1820 = vmul.f32 %v1815, %v1818
    %1822 = vrot.lane.b32.xlu0 %v1820, 32
    %v1823 = vpop.permute.xlu0 %1822
    %v1825 = vadd.f32 %v1654, %v1823
    %v1826 = vtanh.pop %v1825
    %v1827 = vsub.f32 1.0, %v1815
    %1829 = vrot.lane.b32.xlu0 %v1826, 112
    %v1830 = vpop.permute.xlu0 %1829
    %v1832 = vmul.f32 %v1827, %v1830
    %v1833 = vmul.f32 %v1815, %v1761
    %v1834 = vadd.f32 %v1832, %v1833
    %v1835 = vpack.c.bf16 %v1834, %v1834
    %1837 = vrot.lane.b32.xlu0 %v1835, 112
    %v1838 = vpop.permute.xlu0 %1837
    %v1840 = vsel %vm964, %v1838, 0
    %1842 = vmatprep.subr.bf16.mxu0 0
    %1843 = vmatpush1.bf16.msra.mxu0 %v1694
    %1844 = vmatprep.subr.bf16.mxu0 0
    %1845 = vmatpush1.bf16.msra.mxu0 0
    %1846 = vmatprep.subr.bf16.mxu0 0
    %1847 = vmatpush1.bf16.msra.mxu0 0
    %1848 = vmatprep.subr.bf16.mxu0 0
    %1849 = vmatpush1.bf16.msra.mxu0 0
    %1850 = vmatprep.subr.bf16.mxu0 0
    %1851 = vmatpush1.bf16.msra.mxu0 0
    %1852 = vmatprep.subr.bf16.mxu0 0
    %1853 = vmatpush1.bf16.msra.mxu0 0
    %1854 = vmatprep.subr.bf16.mxu0 0
    %1855 = vmatpush1.bf16.msra.mxu0 0
    %1856 = vmatprep.subr.bf16.mxu0 0
    %1857 = vmatpush1.bf16.msra.mxu0 0
    %1858 = vmatprep.subr.bf16.mxu0 0
    %1859 = vmatpush1.bf16.msra.mxu0 0
    %1860 = vmatprep.subr.bf16.mxu0 0
    %1861 = vmatpush1.bf16.msra.mxu0 0
    %1862 = vmatprep.subr.bf16.mxu0 0
    %1863 = vmatpush1.bf16.msra.mxu0 0
    %1864 = vmatprep.subr.bf16.mxu0 0
    %1865 = vmatpush1.bf16.msra.mxu0 0
    %1866 = vmatprep.subr.bf16.mxu0 0
    %1867 = vmatpush1.bf16.msra.mxu0 0
    %1868 = vmatprep.subr.bf16.mxu0 0
    %1869 = vmatpush1.bf16.msra.mxu0 0
    %1870 = vmatprep.subr.bf16.mxu0 0
    %1871 = vmatpush1.bf16.msra.mxu0 0
    %1872 = vmatprep.subr.bf16.mxu0 0
    %1873 = vmatpush1.bf16.msra.mxu0 0
    %1874 = vmatprep.mubr.bf16.mxu0 0
    %1875 = vmatmul.mubr.bf16.gmra.mrb[0].mxu0 %v1840
    %v1876 = vpop.f32.mrb[0].mxu0
    %v1877 = vadd.f32 %v1688, %v1876
    %v1878 = vpop.f32.mrb[0].mxu0
    %v1879 = vpop.f32.mrb[0].mxu0
    %v1880 = vpop.f32.mrb[0].mxu0
    %1881 = vdwg.mxu0
    %v1882 = vadd.f32 %v1659, %v1877
    %v1883 = vxor.u32 %v1882, 2147483648
    %v1884 = vmul.f32 %v1883, 1.442695
    %v1885 = vpow.pop %v1884
    %v1886 = vadd.f32 %v1885, 1.0
    %v1887 = vrcp.pop %v1886
    %v1888 = vmul.f32 1.0, %v1887
    %1890 = vrot.lane.b32.xlu0 %v1877, 96
    %v1891 = vpop.permute.xlu0 %1890
    %v1893 = vmul.f32 %v1888, %v1891
    %1895 = vrot.lane.b32.xlu0 %v1893, 32
    %v1896 = vpop.permute.xlu0 %1895
    %v1898 = vadd.f32 %v1659, %v1896
    %v1899 = vtanh.pop %v1898
    %v1900 = vsub.f32 1.0, %v1888
    %1902 = vrot.lane.b32.xlu0 %v1899, 112
    %v1903 = vpop.permute.xlu0 %1902
    %v1905 = vmul.f32 %v1900, %v1903
    %v1906 = vmul.f32 %v1888, %v1834
    %v1907 = vadd.f32 %v1905, %v1906
    %v1908 = vpack.c.bf16 %v1907, %v1907
    %1910 = vrot.lane.b32.xlu0 %v1908, 112
    %v1911 = vpop.permute.xlu0 %1910
    %v1913 = vsel %vm964, %v1911, 0
    %1915 = vmatprep.subr.bf16.mxu0 0
    %1916 = vmatpush1.bf16.msra.mxu0 %v1694
    %1917 = vmatprep.subr.bf16.mxu0 0
    %1918 = vmatpush1.bf16.msra.mxu0 0
    %1919 = vmatprep.subr.bf16.mxu0 0
    %1920 = vmatpush1.bf16.msra.mxu0 0
    %1921 = vmatprep.subr.bf16.mxu0 0
    %1922 = vmatpush1.bf16.msra.mxu0 0
    %1923 = vmatprep.subr.bf16.mxu0 0
    %1924 = vmatpush1.bf16.msra.mxu0 0
    %1925 = vmatprep.subr.bf16.mxu0 0
    %1926 = vmatpush1.bf16.msra.mxu0 0
    %1927 = vmatprep.subr.bf16.mxu0 0
    %1928 = vmatpush1.bf16.msra.mxu0 0
    %1929 = vmatprep.subr.bf16.mxu0 0
    %1930 = vmatpush1.bf16.msra.mxu0 0
    %1931 = vmatprep.subr.bf16.mxu0 0
    %1932 = vmatpush1.bf16.msra.mxu0 0
    %1933 = vmatprep.subr.bf16.mxu0 0
    %1934 = vmatpush1.bf16.msra.mxu0 0
    %1935 = vmatprep.subr.bf16.mxu0 0
    %1936 = vmatpush1.bf16.msra.mxu0 0
    %1937 = vmatprep.subr.bf16.mxu0 0
    %1938 = vmatpush1.bf16.msra.mxu0 0
    %1939 = vmatprep.subr.bf16.mxu0 0
    %1940 = vmatpush1.bf16.msra.mxu0 0
    %1941 = vmatprep.subr.bf16.mxu0 0
    %1942 = vmatpush1.bf16.msra.mxu0 0
    %1943 = vmatprep.subr.bf16.mxu0 0
    %1944 = vmatpush1.bf16.msra.mxu0 0
    %1945 = vmatprep.subr.bf16.mxu0 0
    %1946 = vmatpush1.bf16.msra.mxu0 0
    %1947 = vmatprep.mubr.bf16.mxu0 0
    %1948 = vmatmul.mubr.bf16.gmra.mrb[0].mxu0 %v1913
    %v1949 = vpop.f32.mrb[0].mxu0
    %v1950 = vadd.f32 %v1688, %v1949
    %v1951 = vpop.f32.mrb[0].mxu0
    %v1952 = vpop.f32.mrb[0].mxu0
    %v1953 = vpop.f32.mrb[0].mxu0
    %1954 = vdwg.mxu0
    %v1955 = vadd.f32 %v1662, %v1950
    %v1956 = vxor.u32 %v1955, 2147483648
    %v1957 = vmul.f32 %v1956, 1.442695
    %v1958 = vpow.pop %v1957
    %v1959 = vadd.f32 %v1958, 1.0
    %v1960 = vrcp.pop %v1959
    %v1961 = vmul.f32 1.0, %v1960
    %1963 = vrot.lane.b32.xlu0 %v1950, 96
    %v1964 = vpop.permute.xlu0 %1963
    %v1966 = vmul.f32 %v1961, %v1964
    %1968 = vrot.lane.b32.xlu0 %v1966, 32
    %v1969 = vpop.permute.xlu0 %1968
    %v1971 = vadd.f32 %v1662, %v1969
    %v1972 = vtanh.pop %v1971
    %v1973 = vsub.f32 1.0, %v1961
    %1975 = vrot.lane.b32.xlu0 %v1972, 112
    %v1976 = vpop.permute.xlu0 %1975
    %v1978 = vmul.f32 %v1973, %v1976
    %v1979 = vmul.f32 %v1961, %v1907
    %v1980 = vadd.f32 %v1978, %v1979
    %v1981 = vpack.c.bf16 %v1980, %v1980
    %1983 = vrot.lane.b32.xlu0 %v1981, 112
    %v1984 = vpop.permute.xlu0 %1983
    %v1986 = vsel %vm964, %v1984, 0
    %1988 = vmatprep.subr.bf16.mxu0 0
    %1989 = vmatpush1.bf16.msra.mxu0 %v1694
    %1990 = vmatprep.subr.bf16.mxu0 0
    %1991 = vmatpush1.bf16.msra.mxu0 0
    %1992 = vmatprep.subr.bf16.mxu0 0
    %1993 = vmatpush1.bf16.msra.mxu0 0
    %1994 = vmatprep.subr.bf16.mxu0 0
    %1995 = vmatpush1.bf16.msra.mxu0 0
    %1996 = vmatprep.subr.bf16.mxu0 0
    %1997 = vmatpush1.bf16.msra.mxu0 0
    %1998 = vmatprep.subr.bf16.mxu0 0
    %1999 = vmatpush1.bf16.msra.mxu0 0
    %2000 = vmatprep.subr.bf16.mxu0 0
    %2001 = vmatpush1.bf16.msra.mxu0 0
    %2002 = vmatprep.subr.bf16.mxu0 0
    %2003 = vmatpush1.bf16.msra.mxu0 0
    %2004 = vmatprep.subr.bf16.mxu0 0
    %2005 = vmatpush1.bf16.msra.mxu0 0
    %2006 = vmatprep.subr.bf16.mxu0 0
    %2007 = vmatpush1.bf16.msra.mxu0 0
    %2008 = vmatprep.subr.bf16.mxu0 0
    %2009 = vmatpush1.bf16.msra.mxu0 0
    %2010 = vmatprep.subr.bf16.mxu0 0
    %2011 = vmatpush1.bf16.msra.mxu0 0
    %2012 = vmatprep.subr.bf16.mxu0 0
    %2013 = vmatpush1.bf16.msra.mxu0 0
    %2014 = vmatprep.subr.bf16.mxu0 0
    %2015 = vmatpush1.bf16.msra.mxu0 0
    %2016 = vmatprep.subr.bf16.mxu0 0
    %2017 = vmatpush1.bf16.msra.mxu0 0
    %2018 = vmatprep.subr.bf16.mxu0 0
    %2019 = vmatpush1.bf16.msra.mxu0 0
    %2020 = vmatprep.mubr.bf16.mxu0 0
    %2021 = vmatmul.mubr.bf16.gmra.mrb[0].mxu0 %v1986
    %v2022 = vpop.f32.mrb[0].mxu0
    %v2023 = vadd.f32 %v1688, %v2022
    %v2024 = vpop.f32.mrb[0].mxu0
    %v2025 = vpop.f32.mrb[0].mxu0
    %v2026 = vpop.f32.mrb[0].mxu0
    %2027 = vdwg.mxu0
    %v2028 = vadd.f32 %v1667, %v2023
    %v2029 = vxor.u32 %v2028, 2147483648
    %v2030 = vmul.f32 %v2029, 1.442695
    %v2031 = vpow.pop %v2030
    %v2032 = vadd.f32 %v2031, 1.0
    %v2033 = vrcp.pop %v2032
    %v2034 = vmul.f32 1.0, %v2033
    %2036 = vrot.lane.b32.xlu0 %v2023, 96
    %v2037 = vpop.permute.xlu0 %2036
    %v2039 = vmul.f32 %v2034, %v2037
    %2041 = vrot.lane.b32.xlu0 %v2039, 32
    %v2042 = vpop.permute.xlu0 %2041
    %v2044 = vadd.f32 %v1667, %v2042
    %v2045 = vtanh.pop %v2044
    %v2046 = vsub.f32 1.0, %v2034
    %2048 = vrot.lane.b32.xlu0 %v2045, 112
    %v2049 = vpop.permute.xlu0 %2048
    %v2051 = vmul.f32 %v2046, %v2049
    %v2052 = vmul.f32 %v2034, %v1980
    %v2053 = vadd.f32 %v2051, %v2052
    %v2054 = vpack.c.bf16 %v2053, %v2053
    %2056 = vrot.lane.b32.xlu0 %v2054, 112
    %v2057 = vpop.permute.xlu0 %2056
    %v2059 = vsel %vm964, %v2057, 0
    %2061 = vmatprep.subr.bf16.mxu0 0
    %2062 = vmatpush1.bf16.msra.mxu0 %v1694
    %2063 = vmatprep.subr.bf16.mxu0 0
    %2064 = vmatpush1.bf16.msra.mxu0 0
    %2065 = vmatprep.subr.bf16.mxu0 0
    %2066 = vmatpush1.bf16.msra.mxu0 0
    %2067 = vmatprep.subr.bf16.mxu0 0
    %2068 = vmatpush1.bf16.msra.mxu0 0
    %2069 = vmatprep.subr.bf16.mxu0 0
    %2070 = vmatpush1.bf16.msra.mxu0 0
    %2071 = vmatprep.subr.bf16.mxu0 0
    %2072 = vmatpush1.bf16.msra.mxu0 0
    %2073 = vmatprep.subr.bf16.mxu0 0
    %2074 = vmatpush1.bf16.msra.mxu0 0
    %2075 = vmatprep.subr.bf16.mxu0 0
    %2076 = vmatpush1.bf16.msra.mxu0 0
    %2077 = vmatprep.subr.bf16.mxu0 0
    %2078 = vmatpush1.bf16.msra.mxu0 0
    %2079 = vmatprep.subr.bf16.mxu0 0
    %2080 = vmatpush1.bf16.msra.mxu0 0
    %2081 = vmatprep.subr.bf16.mxu0 0
    %2082 = vmatpush1.bf16.msra.mxu0 0
    %2083 = vmatprep.subr.bf16.mxu0 0
    %2084 = vmatpush1.bf16.msra.mxu0 0
    %2085 = vmatprep.subr.bf16.mxu0 0
    %2086 = vmatpush1.bf16.msra.mxu0 0
    %2087 = vmatprep.subr.bf16.mxu0 0
    %2088 = vmatpush1.bf16.msra.mxu0 0
    %2089 = vmatprep.subr.bf16.mxu0 0
    %2090 = vmatpush1.bf16.msra.mxu0 0
    %2091 = vmatprep.subr.bf16.mxu0 0
    %2092 = vmatpush1.bf16.msra.mxu0 0
    %2093 = vmatprep.mubr.bf16.mxu0 0
    %2094 = vmatmul.mubr.bf16.gmra.mrb[0].mxu0 %v2059
    %v2095 = vpop.f32.mrb[0].mxu0
    %v2096 = vadd.f32 %v1688, %v2095
    %v2097 = vpop.f32.mrb[0].mxu0
    %v2098 = vpop.f32.mrb[0].mxu0
    %v2099 = vpop.f32.mrb[0].mxu0
    %2100 = vdwg.mxu0
    %v2101 = vadd.f32 %v1670, %v2096
    %v2102 = vxor.u32 %v2101, 2147483648
    %v2103 = vmul.f32 %v2102, 1.442695
    %v2104 = vpow.pop %v2103
    %v2105 = vadd.f32 %v2104, 1.0
    %v2106 = vrcp.pop %v2105
    %v2107 = vmul.f32 1.0, %v2106
    %2109 = vrot.lane.b32.xlu0 %v2096, 96
    %v2110 = vpop.permute.xlu0 %2109
    %v2112 = vmul.f32 %v2107, %v2110
    %2114 = vrot.lane.b32.xlu0 %v2112, 32
    %v2115 = vpop.permute.xlu0 %2114
    %v2117 = vadd.f32 %v1670, %v2115
    %v2118 = vtanh.pop %v2117
    %v2119 = vsub.f32 1.0, %v2107
    %2121 = vrot.lane.b32.xlu0 %v2118, 112
    %v2122 = vpop.permute.xlu0 %2121
    %v2124 = vmul.f32 %v2119, %v2122
    %v2125 = vmul.f32 %v2107, %v2053
    %v2126 = vadd.f32 %v2124, %v2125
    %v2127 = vpack.c.bf16 %v2126, %v2126
    %2129 = vrot.lane.b32.xlu0 %v2127, 112
    %v2130 = vpop.permute.xlu0 %2129
    %v2132 = vsel %vm964, %v2130, 0
    %2134 = vmatprep.subr.bf16.mxu0 0
    %2135 = vmatpush1.bf16.msra.mxu0 %v1694
    %2136 = vmatprep.subr.bf16.mxu0 0
    %2137 = vmatpush1.bf16.msra.mxu0 0
    %2138 = vmatprep.subr.bf16.mxu0 0
    %2139 = vmatpush1.bf16.msra.mxu0 0
    %2140 = vmatprep.subr.bf16.mxu0 0
    %2141 = vmatpush1.bf16.msra.mxu0 0
    %2142 = vmatprep.subr.bf16.mxu0 0
    %2143 = vmatpush1.bf16.msra.mxu0 0
    %2144 = vmatprep.subr.bf16.mxu0 0
    %2145 = vmatpush1.bf16.msra.mxu0 0
    %2146 = vmatprep.subr.bf16.mxu0 0
    %2147 = vmatpush1.bf16.msra.mxu0 0
    %2148 = vmatprep.subr.bf16.mxu0 0
    %2149 = vmatpush1.bf16.msra.mxu0 0
    %2150 = vmatprep.subr.bf16.mxu0 0
    %2151 = vmatpush1.bf16.msra.mxu0 0
    %2152 = vmatprep.subr.bf16.mxu0 0
    %2153 = vmatpush1.bf16.msra.mxu0 0
    %2154 = vmatprep.subr.bf16.mxu0 0
    %2155 = vmatpush1.bf16.msra.mxu0 0
    %2156 = vmatprep.subr.bf16.mxu0 0
    %2157 = vmatpush1.bf16.msra.mxu0 0
    %2158 = vmatprep.subr.bf16.mxu0 0
    %2159 = vmatpush1.bf16.msra.mxu0 0
    %2160 = vmatprep.subr.bf16.mxu0 0
    %2161 = vmatpush1.bf16.msra.mxu0 0
    %2162 = vmatprep.subr.bf16.mxu0 0
    %2163 = vmatpush1.bf16.msra.mxu0 0
    %2164 = vmatprep.subr.bf16.mxu0 0
    %2165 = vmatpush1.bf16.msra.mxu0 0
    %2166 = vmatprep.mubr.bf16.mxu0 0
    %2167 = vmatmul.mubr.bf16.gmra.mrb[0].mxu0 %v2132
    %v2168 = vpop.f32.mrb[0].mxu0
    %v2169 = vadd.f32 %v1688, %v2168
    %v2170 = vpop.f32.mrb[0].mxu0
    %v2171 = vpop.f32.mrb[0].mxu0
    %v2172 = vpop.f32.mrb[0].mxu0
    %2173 = vdwg.mxu0
    %v2174 = vadd.f32 %v1675, %v2169
    %v2175 = vxor.u32 %v2174, 2147483648
    %v2176 = vmul.f32 %v2175, 1.442695
    %v2177 = vpow.pop %v2176
    %v2178 = vadd.f32 %v2177, 1.0
    %v2179 = vrcp.pop %v2178
    %v2180 = vmul.f32 1.0, %v2179
    %2182 = vrot.lane.b32.xlu0 %v2169, 96
    %v2183 = vpop.permute.xlu0 %2182
    %v2185 = vmul.f32 %v2180, %v2183
    %2187 = vrot.lane.b32.xlu0 %v2185, 32
    %v2188 = vpop.permute.xlu0 %2187
    %v2190 = vadd.f32 %v1675, %v2188
    %v2191 = vtanh.pop %v2190
    %v2192 = vsub.f32 1.0, %v2180
    %2194 = vrot.lane.b32.xlu0 %v2191, 112
    %v2195 = vpop.permute.xlu0 %2194
    %v2197 = vmul.f32 %v2192, %v2195
    %v2198 = vmul.f32 %v2180, %v2126
    %v2199 = vadd.f32 %v2197, %v2198
    %v2200 = vpack.c.bf16 %v2199, %v2199
    %2202 = vrot.lane.b32.xlu0 %v2200, 112
    %v2203 = vpop.permute.xlu0 %2202
    %v2205 = vsel %vm964, %v2203, 0
    %2207 = vmatprep.subr.bf16.mxu0 0
    %2208 = vmatpush1.bf16.msra.mxu0 %v1694
    %2209 = vmatprep.subr.bf16.mxu0 0
    %2210 = vmatpush1.bf16.msra.mxu0 0
    %2211 = vmatprep.subr.bf16.mxu0 0
    %2212 = vmatpush1.bf16.msra.mxu0 0
    %2213 = vmatprep.subr.bf16.mxu0 0
    %2214 = vmatpush1.bf16.msra.mxu0 0
    %2215 = vmatprep.subr.bf16.mxu0 0
    %2216 = vmatpush1.bf16.msra.mxu0 0
    %2217 = vmatprep.subr.bf16.mxu0 0
    %2218 = vmatpush1.bf16.msra.mxu0 0
    %2219 = vmatprep.subr.bf16.mxu0 0
    %2220 = vmatpush1.bf16.msra.mxu0 0
    %2221 = vmatprep.subr.bf16.mxu0 0
    %2222 = vmatpush1.bf16.msra.mxu0 0
    %2223 = vmatprep.subr.bf16.mxu0 0
    %2224 = vmatpush1.bf16.msra.mxu0 0
    %2225 = vmatprep.subr.bf16.mxu0 0
    %2226 = vmatpush1.bf16.msra.mxu0 0
    %2227 = vmatprep.subr.bf16.mxu0 0
    %2228 = vmatpush1.bf16.msra.mxu0 0
    %2229 = vmatprep.subr.bf16.mxu0 0
    %2230 = vmatpush1.bf16.msra.mxu0 0
    %2231 = vmatprep.subr.bf16.mxu0 0
    %2232 = vmatpush1.bf16.msra.mxu0 0
    %2233 = vmatprep.subr.bf16.mxu0 0
    %2234 = vmatpush1.bf16.msra.mxu0 0
    %2235 = vmatprep.subr.bf16.mxu0 0
    %2236 = vmatpush1.bf16.msra.mxu0 0
    %2237 = vmatprep.subr.bf16.mxu0 0
    %2238 = vmatpush1.bf16.msra.mxu0 0
    %2239 = vmatprep.mubr.bf16.mxu0 0
    %2240 = vmatmul.mubr.bf16.gmra.mrb[0].mxu0 %v2205
    %v2241 = vpop.f32.mrb[0].mxu0
    %v2242 = vadd.f32 %v1688, %v2241
    %v2243 = vpop.f32.mrb[0].mxu0
    %v2244 = vpop.f32.mrb[0].mxu0
    %v2245 = vpop.f32.mrb[0].mxu0
    %2246 = vdwg.mxu0
    %v2247 = vadd.f32 %v1678, %v2242
    %v2248 = vxor.u32 %v2247, 2147483648
    %v2249 = vmul.f32 %v2248, 1.442695
    %v2250 = vpow.pop %v2249
    %v2251 = vadd.f32 %v2250, 1.0
    %v2252 = vrcp.pop %v2251
    %v2253 = vmul.f32 1.0, %v2252
    %2255 = vrot.lane.b32.xlu0 %v2242, 96
    %v2256 = vpop.permute.xlu0 %2255
    %v2258 = vmul.f32 %v2253, %v2256
    %2260 = vrot.lane.b32.xlu0 %v2258, 32
    %v2261 = vpop.permute.xlu0 %2260
    %v2263 = vadd.f32 %v1678, %v2261
    %v2264 = vtanh.pop %v2263
    %v2265 = vsub.f32 1.0, %v2253
    %2267 = vrot.lane.b32.xlu0 %v2264, 112
    %v2268 = vpop.permute.xlu0 %2267
    %v2270 = vmul.f32 %v2265, %v2268
    %v2271 = vmul.f32 %v2253, %v2199
    %v2272 = vadd.f32 %v2270, %v2271
    %2274 = vrot.lane.b32.xlu0 %v1106, 112
    %v2275 = vpop.permute.xlu0 %2274
    %2278 = vrot.lane.b32.xlu0 %v2272, 16
    %v2279 = vpop.permute.xlu0 %2278
    %v2281 = vsel %vm964, %v2275, %v1532
    %vm2282 = vcmask 261120
    %v2283 = vsel %vm2282, %v2281, %v2279
    %v2284 = vld [vmem:[%s19] sm:$0x1]
    %v2286 = vlaneseq
    %v2287 = vshrl.u32 %v2286, 7
    %v2288 = vsub.s32 0, %v2287
    %v2289 = vrot.slane %v2284, %v2288
    %v2291 = vmul.f32 %v2283, %v2289
    %v2292 = vpack.c.bf16 %v2291, %v2291
    %v2293 = vld [vmem:[%s20] sm:$0xf]
    %v2294 = vld [vmem:[%s20 + $0x4] sm:$0xf]
    %v2295 = vld [vmem:[%s20 + $0x8] sm:$0xf]
    %v2296 = vld [vmem:[%s20 + $0xc] sm:$0xf]
    %v2297 = vld [vmem:[%s20 + $0x10] sm:$0xf]
    %v2298 = vld [vmem:[%s20 + $0x14] sm:$0xf]
    %v2299 = vld [vmem:[#allocation23] sm:$0x1]
    %v2301 = vlaneseq
    %v2302 = vshrl.u32 %v2301, 7
    %v2303 = vsub.s32 0, %v2302
    %v2304 = vrot.slane %v2299, %v2303
    %v2312 = vunpack.c.l.b16 %v2293
    %v2313 = vunpack.c.l.b16 %v2294
    %v2314 = vunpack.c.l.b16 %v2295
    %v2315 = vunpack.c.l.b16 %v2296
    %v2316 = vunpack.c.l.b16 %v2297
    %v2317 = vunpack.c.l.b16 %v2298
    %v2318 = vpack.c.b16 %v2313, %v2312
    %v2319 = vpack.c.b16 %v2315, %v2314
    %v2320 = vpack.c.b16 %v2317, %v2316
    %vm2324 = vcmask 392192
    %v2326 = vsel %vm2324, %v2292, 0
    %2328 = vmatprep.subr.bf16.mxu0 0
    %2329 = vmatpush1.bf16.msra.mxu0 %v2318
    %2330 = vmatprep.subr.bf16.mxu0 0
    %2331 = vmatpush1.bf16.msra.mxu0 %v2319
    %2332 = vmatprep.subr.bf16.mxu0 0
    %2333 = vmatpush1.bf16.msra.mxu0 %v2320
    %2334 = vmatprep.subr.bf16.mxu0 0
    %2335 = vmatpush1.bf16.msra.mxu0 0
    %2336 = vmatprep.subr.bf16.mxu0 0
    %2337 = vmatpush1.bf16.msra.mxu0 0
    %2338 = vmatprep.subr.bf16.mxu0 0
    %2339 = vmatpush1.bf16.msra.mxu0 0
    %2340 = vmatprep.subr.bf16.mxu0 0
    %2341 = vmatpush1.bf16.msra.mxu0 0
    %2342 = vmatprep.subr.bf16.mxu0 0
    %2343 = vmatpush1.bf16.msra.mxu0 0
    %2344 = vmatprep.subr.bf16.mxu0 0
    %2345 = vmatpush1.bf16.msra.mxu0 0
    %2346 = vmatprep.subr.bf16.mxu0 0
    %2347 = vmatpush1.bf16.msra.mxu0 0
    %2348 = vmatprep.subr.bf16.mxu0 0
    %2349 = vmatpush1.bf16.msra.mxu0 0
    %2350 = vmatprep.subr.bf16.mxu0 0
    %2351 = vmatpush1.bf16.msra.mxu0 0
    %2352 = vmatprep.subr.bf16.mxu0 0
    %2353 = vmatpush1.bf16.msra.mxu0 0
    %2354 = vmatprep.subr.bf16.mxu0 0
    %2355 = vmatpush1.bf16.msra.mxu0 0
    %2356 = vmatprep.subr.bf16.mxu0 0
    %2357 = vmatpush1.bf16.msra.mxu0 0
    %2358 = vmatprep.subr.bf16.mxu0 0
    %2359 = vmatpush1.bf16.msra.mxu0 0
    %2360 = vmatprep.mubr.bf16.mxu0 0
    %2361 = vmatmul.mubr.bf16.gmra.mrb[0].mxu0 %v2326
    %v2362 = vpop.f32.mrb[0].mxu0
    %v2363 = vadd.f32 %v2304, %v2362
    %v2364 = vpop.f32.mrb[0].mxu0
    %v2365 = vpop.f32.mrb[0].mxu0
    %v2366 = vpop.f32.mrb[0].mxu0
    %2367 = vdwg.mxu0
    %2368 = vst.msk [vmem:[#allocation25] sm:$0xff] %vm2324, %v2363
    // Predicated region
    $region146: #{_forward_impl.1} parent=1 // pred_check
      _
    $region147: #{_forward_impl.1} parent=1 // pred_check_branch
      %2370 = sbr.rel (0) target = $region149
    $region148: #{_forward_impl.1} parent=1 // pred_region
      %s2372 = ssub.s32 128, 128
      %2373 = vsyncadd [#allocation4], %s2372
      %s2375 = sshll.u32 [#allocation25], 4
      %s2376 = int_to_ptr.vmem [resolvable:$true] %s2375
      %2378 = dma.vmem_to_hbm [thread:$0]  %s2376, 128, %s22, [#allocation4]
    $region149: #{_forward_impl.1} parent=1 // pred_fallthru
      _
    // Predicated region
    $region150: #{_forward_impl.1} parent=1 // pred_check
      _
    $region151: #{_forward_impl.1} parent=1 // pred_check_branch
      %2380 = sbr.rel (0) target = $region153
    $region152: #{_forward_impl.1} parent=1 // pred_region
      %2381 = dma.done [#allocation4], 128
    $region153: #{_forward_impl.1} parent=1 // pred_fallthru
      _
    %2382 = vsyncpa [#allocation3], 1
    %2383 = vsyncpa [#allocation6], 1
    %2384 = vsyncpa [#allocation9], 1
    %2385 = vsyncpa [#allocation12], 1
    %2386 = vsyncpa [#allocation15], 1
    %2387 = vsyncpa [#allocation18], 1
    %2388 = vsyncpa [#allocation21], 1
    %2389 = vsyncpa [#allocation24], 1
    %2390 = vsyncpa [#allocation4], 1

</llo_original>
